<compile_context>
chip_gen: v7x
topology: tpu7x:2x2x1
jax: 0.10.0
libtpu: 0.0.40
codegen_flags: <defaults>
</compile_context>

<pallas_src>
import functools

import jax
import jax.numpy as jnp
from jax.experimental import pallas as pl
from jax.experimental.pallas import tpu as pltpu

LANE = 128


def _ceil_lane(c):
    return -(-c // LANE) * LANE


def _swish(x):
    return x * jax.nn.sigmoid(x)


def _same_pad(size, k, s):
    """TF-style SAME padding (what SamePadConv2d reproduces)."""
    out = -(-size // s)
    pad = max((out - 1) * s + k - size, 0)
    return out, pad // 2, pad - pad // 2


def _mbconv_kernel(*refs, has_expand, has_se, K, stride, pad_t, pad_b,
                   pad_l, pad_r, H, W, Hout, Wout, skip):
    it = iter(refs)
    x_ref = next(it)
    if has_expand:
        w_exp_ref = next(it)
        exp_b_ref = next(it)
    w_dw_ref = next(it)
    dw_b_ref = next(it)
    if has_se:
        w_se1_ref = next(it)
        b_se1_ref = next(it)
        w_se2_ref = next(it)
        b_se2_ref = next(it)
    w_proj_ref = next(it)
    proj_b_ref = next(it)
    out_ref = next(it)
    pad_ref = next(it)              # VMEM scratch: zero-halo padded activations

    Hp, Wp, mid_p = pad_ref.shape
    Cin_p = x_ref.shape[-1]
    out_p = out_ref.shape[-1]

    x = x_ref[0]                    # (H, W, Cin_p), fp32, one batch element

    # --- 1) expand: 1x1 conv (MXU, bf16 operands) + BN bias + swish ---------
    if has_expand:
        e = jnp.dot(x.reshape(H * W, Cin_p).astype(jnp.bfloat16),
                    w_exp_ref[...],                # bf16, BN scale folded in
                    preferred_element_type=jnp.float32)
        e = _swish(e + exp_b_ref[...])
        exp = e.reshape(H, W, mid_p)
    else:
        exp = x

    # --- 2) depthwise KxK conv (SAME padding) + BN bias + swish -------------
    # Zero only the halo rows/columns (not the whole scratch) and write the
    # expand activations straight into the interior.
    if pad_t > 0:
        pad_ref[0:pad_t, :, :] = jnp.zeros((pad_t, Wp, mid_p), jnp.float32)
    if pad_b > 0:
        pad_ref[pad_t + H:Hp, :, :] = jnp.zeros((pad_b, Wp, mid_p), jnp.float32)
    if pad_l > 0:
        pad_ref[:, 0:pad_l, :] = jnp.zeros((Hp, pad_l, mid_p), jnp.float32)
    if pad_r > 0:
        pad_ref[:, pad_l + W:Wp, :] = jnp.zeros((Hp, pad_r, mid_p), jnp.float32)
    pad_ref[pad_t:pad_t + H, pad_l:pad_l + W, :] = exp

    padded = pad_ref[...]
    w_dw = w_dw_ref[...]            # (K*K, mid_p), BN scale folded in (hoisted)
    dw_b = dw_b_ref[...]            # (1, mid_p)

    # Compute at stride 1 and subsample once afterwards, so the tap loop never
    # performs strided (gather-like) slices on the sublane/lane axes.
    Hs1 = Hp - K + 1
    Ws1 = Wp - K + 1

    acc = None
    for j in range(K):
        # One sublane(W)-shifted slab per column offset: K shuffles, not K*K.
        slab = jax.lax.slice(padded, (0, j, 0), (Hp, j + Ws1, mid_p))
        for i in range(K):
            # H-shifts are leading-axis slices: no lane/sublane shuffle.
            win = jax.lax.slice(slab, (i, 0, 0), (i + Hs1, Ws1, mid_p))
            tap = win * w_dw[i * K + j]
            acc = tap if acc is None else acc + tap

    if stride > 1:
        acc = jax.lax.slice(
            acc, (0, 0, 0),
            ((Hout - 1) * stride + 1, (Wout - 1) * stride + 1, mid_p),
            (stride, stride, 1))

    dw = _swish(acc + dw_b.reshape(1, 1, mid_p))    # (Hout, Wout, mid_p)

    # --- 3) squeeze-and-excite ----------------------------------------------
    if has_se:
        pooled = jnp.mean(dw.reshape(Hout * Wout, mid_p), axis=0,
                          keepdims=True)                     # (1, mid_p)
        s1 = _swish(jnp.dot(pooled, w_se1_ref[...],
                            preferred_element_type=jnp.float32)
                    + b_se1_ref[...])
        s2 = jnp.dot(s1, w_se2_ref[...],
                     preferred_element_type=jnp.float32) + b_se2_ref[...]
        gate = jax.nn.sigmoid(s2)                            # (1, mid_p)
        se_out = dw * gate.reshape(1, 1, mid_p)
    else:
        se_out = dw

    # --- 4) project: 1x1 conv (MXU, bf16 operands) + BN bias ----------------
    proj = jnp.dot(se_out.reshape(Hout * Wout, mid_p).astype(jnp.bfloat16),
                   w_proj_ref[...],                # bf16, BN scale folded in
                   preferred_element_type=jnp.float32)
    proj = proj + proj_b_ref[...]
    y = proj.reshape(Hout, Wout, out_p)

    # --- 5) skip connection --------------------------------------------------
    if skip:
        y = y + x

    out_ref[0] = y.astype(out_ref.dtype)


# ------------------------------- glue code ----------------------------------

def _pad2(w, rows, cols):
    out = jnp.zeros((rows, cols), w.dtype)
    return out.at[:w.shape[0], :w.shape[1]].set(w)


def _prep_mbconv(p):
    """Fold BN scales into conv weights, zero-pad all channel dims to LANE
    multiples (lane-dense vregs / unmasked stores), cast MXU weights to bf16."""
    K, stride = p["kernel"], p["stride"]
    has_expand = p["expand"] != 1
    has_se = p["se"] is not None
    mid = p["w_dw"].shape[1]
    out_c = p["w_proj"].shape[1]
    cin = p["w_exp"].shape[0] if has_expand else mid
    mid_p, out_p, cin_p = _ceil_lane(mid), _ceil_lane(out_c), _ceil_lane(cin)

    q = dict(kernel=K, stride=stride, out=out_c, mid_p=mid_p, out_p=out_p,
             skip=(p["skip"] and stride == 1 and cin == out_c))
    if has_expand:
        q["w_exp"] = _pad2(p["w_exp"] * p["exp_scale"],
                           cin_p, mid_p).astype(jnp.bfloat16)
        q["exp_bias"] = _pad2(p["exp_bias"], 1, mid_p)
    q["w_dw"] = _pad2(p["w_dw"] * p["dw_scale"], K * K, mid_p)
    q["dw_bias"] = _pad2(p["dw_bias"], 1, mid_p)
    if has_se:
        sq_p = _ceil_lane(p["w_se1"].shape[1])
        q["w_se1"] = _pad2(p["w_se1"], mid_p, sq_p)
        q["b_se1"] = _pad2(p["b_se1"], 1, sq_p)
        q["w_se2"] = _pad2(p["w_se2"], sq_p, mid_p)
        q["b_se2"] = _pad2(p["b_se2"], 1, mid_p)
    q["w_proj"] = _pad2(p["w_proj"] * p["proj_scale"],
                        mid_p, out_p).astype(jnp.bfloat16)
    q["proj_bias"] = _pad2(p["proj_bias"], 1, out_p)
    return q


def mbconv_forward(x, q):
    """x: (B, H, W, Cin_p) fp32, channels already padded to a LANE multiple."""
    B, H, W, Cin_p = x.shape
    K, stride = q["kernel"], q["stride"]
    has_expand = "w_exp" in q
    has_se = "w_se1" in q
    mid_p, out_p = q["mid_p"], q["out_p"]
    Hout, pad_t, pad_b = _same_pad(H, K, stride)
    Wout, pad_l, pad_r = _same_pad(W, K, stride)
    Hp, Wp = H + pad_t + pad_b, W + pad_l + pad_r

    inputs = [x]
    in_specs = [pl.BlockSpec((1, H, W, Cin_p), lambda b: (b, 0, 0, 0))]

    def add(*names):
        for n in names:
            a = q[n]
            inputs.append(a)
            # Constant index -> DMA'd once, stays resident across the batch grid.
            in_specs.append(pl.BlockSpec(tuple(a.shape), lambda b: (0, 0)))

    if has_expand:
        add("w_exp", "exp_bias")
    add("w_dw", "dw_bias")
    if has_se:
        add("w_se1", "b_se1", "w_se2", "b_se2")
    add("w_proj", "proj_bias")

    kernel = functools.partial(
        _mbconv_kernel, has_expand=has_expand, has_se=has_se, K=K,
        stride=stride, pad_t=pad_t, pad_b=pad_b, pad_l=pad_l, pad_r=pad_r,
        H=H, W=W, Hout=Hout, Wout=Wout, skip=q["skip"])

    grid_spec = pltpu.PrefetchScalarGridSpec(
        num_scalar_prefetch=0,
        grid=(B,),
        in_specs=in_specs,
        out_specs=pl.BlockSpec((1, Hout, Wout, out_p), lambda b: (b, 0, 0, 0)),
        scratch_shapes=[pltpu.VMEM((Hp, Wp, mid_p), jnp.float32)],
    )

    # Advisory cost estimate so XLA schedules neighbouring ops sensibly.
    sq_p = q["w_se1"].shape[1] if has_se else 0
    flops_per_b = (2 * H * W * Cin_p * mid_p * (1 if has_expand else 0)
                   + 2 * K * K * (Hp - K + 1) * (Wp - K + 1) * mid_p
                   + (4 * mid_p * sq_p if has_se else 0)
                   + 2 * Hout * Wout * mid_p * out_p)
    trans_per_b = (H * W * mid_p + Hout * Wout * mid_p
                   + (sq_p + mid_p if has_se else 0))
    bytes_accessed = (x.size * 4 + sum(a.size * a.dtype.itemsize
                                       for a in inputs[1:])
                      + B * Hout * Wout * out_p * 4)
    cost = pl.CostEstimate(flops=B * flops_per_b,
                           transcendentals=B * trans_per_b,
                           bytes_accessed=bytes_accessed)

    # Size the scoped-VMEM limit from the actual per-step working set
    # (double-buffered tiles + resident weights + scratch + live temporaries),
    # clamped to stay safe on v7x (64 MiB physical VMEM per TC).
    per_step = (2 * 4 * H * W * Cin_p                       # x tile (dbl-buf)
                + 2 * 4 * Hout * Wout * out_p               # out tile (dbl-buf)
                + 2 * sum(a.size * a.dtype.itemsize for a in inputs[1:])
                + 4 * Hp * Wp * mid_p                       # padded scratch
                + 4 * 4 * Hp * Wp * mid_p)                  # live temporaries
    vmem_limit = int(min(64 * 1024 * 1024,
                         max(32 * 1024 * 1024, 2 * per_step)))

    return pl.pallas_call(
        kernel,
        out_shape=jax.ShapeDtypeStruct((B, Hout, Wout, out_p), x.dtype),
        grid_spec=grid_spec,
        compiler_params=pltpu.CompilerParams(
            dimension_semantics=("parallel",),      # shard batch across TCs
            vmem_limit_bytes=vmem_limit),
        cost_estimate=cost,
    )(*inputs)


def mbblock_forward(x, layers):
    """x: (B, H, W, Cin) fp32 NHWC.  Channels padded once, sliced once."""
    B, H, W, cin = x.shape
    cin_p = _ceil_lane(cin)
    xp = jnp.zeros((B, H, W, cin_p), x.dtype).at[..., :cin].set(x)
    for p in layers:
        xp = mbconv_forward(xp, _prep_mbconv(p))
    return xp[..., :layers[-1]["out"]]


# ----------------------- deterministic parameter init -----------------------

def init_mbconv(key, in_, out_, expand, K, stride, skip, se_ratio):
    mid = in_ * expand
    cnt = [0]

    def nk():
        cnt[0] += 1
        return jax.random.fold_in(key, cnt[0])

    def bn_fold(c, eps=1e-3):
        gamma = 1.0 + 0.1 * jax.random.normal(nk(), (c,), jnp.float32)
        beta = 0.1 * jax.random.normal(nk(), (c,), jnp.float32)
        mean = 0.1 * jax.random.normal(nk(), (c,), jnp.float32)
        var = jnp.abs(jax.random.normal(nk(), (c,), jnp.float32)) + 0.5
        scale = gamma * jax.lax.rsqrt(var + eps)
        bias = beta - mean * scale
        return scale.reshape(1, c), bias.reshape(1, c)

    p = dict(expand=expand, kernel=K, stride=stride, skip=skip, out=out_)
    if expand != 1:
        p["w_exp"] = 0.1 * jax.random.normal(nk(), (in_, mid), jnp.float32)
        p["exp_scale"], p["exp_bias"] = bn_fold(mid)
    p["w_dw"] = 0.1 * jax.random.normal(nk(), (K * K, mid), jnp.float32)
    p["dw_scale"], p["dw_bias"] = bn_fold(mid)
    sq = int(in_ * se_ratio)
    if se_ratio > 0:
        p["se"] = sq
        p["w_se1"] = 0.1 * jax.random.normal(nk(), (mid, sq), jnp.float32)
        p["b_se1"] = 0.1 * jax.random.normal(nk(), (1, sq), jnp.float32)
        p["w_se2"] = 0.1 * jax.random.normal(nk(), (sq, mid), jnp.float32)
        p["b_se2"] = 0.1 * jax.random.normal(nk(), (1, mid), jnp.float32)
    else:
        p["se"] = None
    p["w_proj"] = 0.1 * jax.random.normal(nk(), (mid, out_), jnp.float32)
    p["proj_scale"], p["proj_bias"] = bn_fold(out_)
    return p


def init_mbblock(key, in_, out_, expand, kernel, stride, num_repeat, skip,
                 se_ratio):
    layers = [init_mbconv(jax.random.fold_in(key, 0), in_, out_, expand,
                          kernel, stride, skip, se_ratio)]
    for i in range(1, num_repeat):
        layers.append(init_mbconv(jax.random.fold_in(key, i), out_, out_,
                                  expand, kernel, 1, skip, se_ratio))
    return layers


if __name__ == "__main__":
    key = jax.random.PRNGKey(0)
    B, H, W = 2, 16, 16
    in_, out_ = 8, 8
    expand, kernel, stride = 4, 3, 1
    num_repeat, skip, se_ratio = 2, True, 0.25

    layers = init_mbblock(jax.random.fold_in(key, 123), in_, out_, expand,
                          kernel, stride, num_repeat, skip, se_ratio)

    # layout: NHWC (equivalent PyTorch input would be x.transpose(0, 3, 1, 2))
    x = jax.random.normal(jax.random.fold_in(key, 7), (B, H, W, in_),
                          jnp.float32)

    y = mbblock_forward(x, layers)
    y = jax.block_until_ready(y)
    assert y.shape == (B, H, W, out_)
    assert bool(jnp.all(jnp.isfinite(y)))
    print("KERNEL_OK")
</pallas_src>

<mosaic_0001>
module attributes {stable_mosaic.version = 11 : i64} {
  func.func @_mbconv_kernel(%arg0: i32, %arg1: memref<1x16x16x128xf32, #tpu.memory_space<vmem>>, %arg2: memref<128x128xbf16, #tpu.memory_space<vmem>>, %arg3: memref<1x128xf32, #tpu.memory_space<vmem>>, %arg4: memref<9x128xf32, #tpu.memory_space<vmem>>, %arg5: memref<1x128xf32, #tpu.memory_space<vmem>>, %arg6: memref<128x128xf32, #tpu.memory_space<vmem>>, %arg7: memref<1x128xf32, #tpu.memory_space<vmem>>, %arg8: memref<128x128xf32, #tpu.memory_space<vmem>>, %arg9: memref<1x128xf32, #tpu.memory_space<vmem>>, %arg10: memref<128x128xbf16, #tpu.memory_space<vmem>>, %arg11: memref<1x128xf32, #tpu.memory_space<vmem>>, %arg12: memref<1x16x16x128xf32, #tpu.memory_space<vmem>>, %arg13: memref<18x18x128xf32, #tpu.memory_space<vmem>>) attributes {dimension_semantics = [#tpu.dimension_semantics<parallel>], iteration_bounds = array<i64: 2>, scalar_prefetch = 0 : i64, scratch_operands = 1 : i64, tpu.core_type = #tpu.core_type<tc>, window_params = [{transform_indices = @transform_0, window_bounds = array<i64: 1, 16, 16, 128>}, {pipeline_mode = #tpu.pipeline_mode<synchronous>, transform_indices = @transform_1, window_bounds = array<i64: 128, 128>}, {pipeline_mode = #tpu.pipeline_mode<synchronous>, transform_indices = @transform_2, window_bounds = array<i64: 1, 128>}, {pipeline_mode = #tpu.pipeline_mode<synchronous>, transform_indices = @transform_3, window_bounds = array<i64: 9, 128>}, {pipeline_mode = #tpu.pipeline_mode<synchronous>, transform_indices = @transform_4, window_bounds = array<i64: 1, 128>}, {pipeline_mode = #tpu.pipeline_mode<synchronous>, transform_indices = @transform_5, window_bounds = array<i64: 128, 128>}, {pipeline_mode = #tpu.pipeline_mode<synchronous>, transform_indices = @transform_6, window_bounds = array<i64: 1, 128>}, {pipeline_mode = #tpu.pipeline_mode<synchronous>, transform_indices = @transform_7, window_bounds = array<i64: 128, 128>}, {pipeline_mode = #tpu.pipeline_mode<synchronous>, transform_indices = @transform_8, window_bounds = array<i64: 1, 128>}, {pipeline_mode = #tpu.pipeline_mode<synchronous>, transform_indices = @transform_9, window_bounds = array<i64: 128, 128>}, {pipeline_mode = #tpu.pipeline_mode<synchronous>, transform_indices = @transform_10, window_bounds = array<i64: 1, 128>}, {transform_indices = @transform_11, window_bounds = array<i64: 1, 16, 16, 128>}]} {
    %c0 = arith.constant 0 : index
    %c0_0 = arith.constant 0 : index
    %c0_1 = arith.constant 0 : index
    %c0_2 = arith.constant 0 : index
    %0 = vector.load %arg1[%c0, %c0_0, %c0_1, %c0_2] : memref<1x16x16x128xf32, #tpu.memory_space<vmem>>, vector<1x16x16x128xf32>
    %1 = vector.shape_cast %0 : vector<1x16x16x128xf32> to vector<16x16x128xf32>
    %2 = vector.shape_cast %1 : vector<16x16x128xf32> to vector<256x128xf32>
    %3 = arith.truncf %2 : vector<256x128xf32> to vector<256x128xbf16>
    %c0_3 = arith.constant 0 : index
    %c0_4 = arith.constant 0 : index
    %4 = vector.load %arg2[%c0_3, %c0_4] : memref<128x128xbf16, #tpu.memory_space<vmem>>, vector<128x128xbf16>
    %cst = arith.constant dense<0.000000e+00> : vector<256x128xf32>
    %5 = tpu.matmul %3, %4, %cst {dimension_numbers = #tpu.dot_dimension_numbers<[1], [0], [0], [1], [0, 0, 1, 1], [], []>} : vector<256x128xbf16>, vector<128x128xbf16>, vector<256x128xf32> -> vector<256x128xf32>
    %c0_5 = arith.constant 0 : index
    %c0_6 = arith.constant 0 : index
    %6 = vector.load %arg3[%c0_5, %c0_6] : memref<1x128xf32, #tpu.memory_space<vmem>>, vector<1x128xf32>
    %7 = vector.broadcast %6 : vector<1x128xf32> to vector<256x128xf32>
    %8 = arith.addf %5, %7 : vector<256x128xf32>
    %9 = arith.negf %8 : vector<256x128xf32>
    %10 = math.exp %9 : vector<256x128xf32>
    %cst_7 = arith.constant 1.000000e+00 : f32
    %11 = vector.broadcast %cst_7 : f32 to vector<256x128xf32>
    %12 = arith.addf %11, %10 : vector<256x128xf32>
    %13 = arith.divf %11, %12 : vector<256x128xf32>
    %14 = arith.mulf %8, %13 : vector<256x128xf32>
    %15 = vector.shape_cast %14 : vector<256x128xf32> to vector<16x16x128xf32>
    %cst_8 = arith.constant 0.000000e+00 : f32
    %16 = vector.broadcast %cst_8 : f32 to vector<1x18x128xf32>
    %c0_9 = arith.constant 0 : index
    %c0_10 = arith.constant 0 : index
    %c0_11 = arith.constant 0 : index
    %17 = vector.load %arg13[%c0_9, %c0_10, %c0_11] : memref<18x18x128xf32, #tpu.memory_space<vmem>>, vector<1x18x128xf32>
    tpu.vector_store %arg13[%c0_9, %c0_10, %c0_11], %16 {strides = array<i32>} : memref<18x18x128xf32, #tpu.memory_space<vmem>>, vector<1x18x128xf32>,
    %cst_12 = arith.constant 0.000000e+00 : f32
    %18 = vector.broadcast %cst_12 : f32 to vector<1x18x128xf32>
    %c17 = arith.constant 17 : index
    %c0_13 = arith.constant 0 : index
    %c0_14 = arith.constant 0 : index
    %19 = vector.load %arg13[%c17, %c0_13, %c0_14] : memref<18x18x128xf32, #tpu.memory_space<vmem>>, vector<1x18x128xf32>
    tpu.vector_store %arg13[%c17, %c0_13, %c0_14], %18 {strides = array<i32>} : memref<18x18x128xf32, #tpu.memory_space<vmem>>, vector<1x18x128xf32>,
    %cst_15 = arith.constant 0.000000e+00 : f32
    %20 = vector.broadcast %cst_15 : f32 to vector<18x1x128xf32>
    %c0_16 = arith.constant 0 : index
    %c0_17 = arith.constant 0 : index
    %c0_18 = arith.constant 0 : index
    %21 = vector.load %arg13[%c0_16, %c0_17, %c0_18] : memref<18x18x128xf32, #tpu.memory_space<vmem>>, vector<18x1x128xf32>
    tpu.vector_store %arg13[%c0_16, %c0_17, %c0_18], %20 {strides = array<i32>} : memref<18x18x128xf32, #tpu.memory_space<vmem>>, vector<18x1x128xf32>,
    %cst_19 = arith.constant 0.000000e+00 : f32
    %22 = vector.broadcast %cst_19 : f32 to vector<18x1x128xf32>
    %c0_20 = arith.constant 0 : index
    %c17_21 = arith.constant 17 : index
    %c0_22 = arith.constant 0 : index
    %23 = vector.load %arg13[%c0_20, %c17_21, %c0_22] : memref<18x18x128xf32, #tpu.memory_space<vmem>>, vector<18x1x128xf32>
    tpu.vector_store %arg13[%c0_20, %c17_21, %c0_22], %22 {strides = array<i32>} : memref<18x18x128xf32, #tpu.memory_space<vmem>>, vector<18x1x128xf32>,
    %c1 = arith.constant 1 : index
    %c1_23 = arith.constant 1 : index
    %c0_24 = arith.constant 0 : index
    %24 = vector.load %arg13[%c1, %c1_23, %c0_24] : memref<18x18x128xf32, #tpu.memory_space<vmem>>, vector<16x16x128xf32>
    tpu.vector_store %arg13[%c1, %c1_23, %c0_24], %15 {strides = array<i32>} : memref<18x18x128xf32, #tpu.memory_space<vmem>>, vector<16x16x128xf32>,
    %c0_25 = arith.constant 0 : index
    %c0_26 = arith.constant 0 : index
    %c0_27 = arith.constant 0 : index
    %25 = vector.load %arg13[%c0_25, %c0_26, %c0_27] : memref<18x18x128xf32, #tpu.memory_space<vmem>>, vector<18x18x128xf32>
    %c0_28 = arith.constant 0 : index
    %c0_29 = arith.constant 0 : index
    %26 = vector.load %arg4[%c0_28, %c0_29] : memref<9x128xf32, #tpu.memory_space<vmem>>, vector<9x128xf32>
    %c0_30 = arith.constant 0 : index
    %c0_31 = arith.constant 0 : index
    %27 = vector.load %arg5[%c0_30, %c0_31] : memref<1x128xf32, #tpu.memory_space<vmem>>, vector<1x128xf32>
    %28 = vector.extract_strided_slice %25 {offsets = [0, 0, 0], sizes = [18, 16, 128], strides = [1, 1, 1]} : vector<18x18x128xf32> to vector<18x16x128xf32>
    %29 = vector.extract_strided_slice %28 {offsets = [0, 0, 0], sizes = [16, 16, 128], strides = [1, 1, 1]} : vector<18x16x128xf32> to vector<16x16x128xf32>
    %30 = vector.extract_strided_slice %26 {offsets = [0, 0], sizes = [1, 128], strides = [1, 1]} : vector<9x128xf32> to vector<1x128xf32>
    %31 = vector.shape_cast %30 : vector<1x128xf32> to vector<128xf32>
    %32 = vector.shape_cast %31 : vector<128xf32> to vector<1x1x128xf32>
    %33 = vector.broadcast %32 : vector<1x1x128xf32> to vector<16x16x128xf32>
    %34 = arith.mulf %29, %33 : vector<16x16x128xf32>
    %35 = vector.extract_strided_slice %28 {offsets = [1, 0, 0], sizes = [16, 16, 128], strides = [1, 1, 1]} : vector<18x16x128xf32> to vector<16x16x128xf32>
    %36 = vector.extract_strided_slice %26 {offsets = [3, 0], sizes = [1, 128], strides = [1, 1]} : vector<9x128xf32> to vector<1x128xf32>
    %37 = vector.shape_cast %36 : vector<1x128xf32> to vector<128xf32>
    %38 = vector.shape_cast %37 : vector<128xf32> to vector<1x1x128xf32>
    %39 = vector.broadcast %38 : vector<1x1x128xf32> to vector<16x16x128xf32>
    %40 = arith.mulf %35, %39 : vector<16x16x128xf32>
    %41 = arith.addf %34, %40 : vector<16x16x128xf32>
    %42 = vector.extract_strided_slice %28 {offsets = [2, 0, 0], sizes = [16, 16, 128], strides = [1, 1, 1]} : vector<18x16x128xf32> to vector<16x16x128xf32>
    %43 = vector.extract_strided_slice %26 {offsets = [6, 0], sizes = [1, 128], strides = [1, 1]} : vector<9x128xf32> to vector<1x128xf32>
    %44 = vector.shape_cast %43 : vector<1x128xf32> to vector<128xf32>
    %45 = vector.shape_cast %44 : vector<128xf32> to vector<1x1x128xf32>
    %46 = vector.broadcast %45 : vector<1x1x128xf32> to vector<16x16x128xf32>
    %47 = arith.mulf %42, %46 : vector<16x16x128xf32>
    %48 = arith.addf %41, %47 : vector<16x16x128xf32>
    %49 = vector.extract_strided_slice %25 {offsets = [0, 1, 0], sizes = [18, 16, 128], strides = [1, 1, 1]} : vector<18x18x128xf32> to vector<18x16x128xf32>
    %50 = vector.extract_strided_slice %49 {offsets = [0, 0, 0], sizes = [16, 16, 128], strides = [1, 1, 1]} : vector<18x16x128xf32> to vector<16x16x128xf32>
    %51 = vector.extract_strided_slice %26 {offsets = [1, 0], sizes = [1, 128], strides = [1, 1]} : vector<9x128xf32> to vector<1x128xf32>
    %52 = vector.shape_cast %51 : vector<1x128xf32> to vector<128xf32>
    %53 = vector.shape_cast %52 : vector<128xf32> to vector<1x1x128xf32>
    %54 = vector.broadcast %53 : vector<1x1x128xf32> to vector<16x16x128xf32>
    %55 = arith.mulf %50, %54 : vector<16x16x128xf32>
    %56 = arith.addf %48, %55 : vector<16x16x128xf32>
    %57 = vector.extract_strided_slice %49 {offsets = [1, 0, 0], sizes = [16, 16, 128], strides = [1, 1, 1]} : vector<18x16x128xf32> to vector<16x16x128xf32>
    %58 = vector.extract_strided_slice %26 {offsets = [4, 0], sizes = [1, 128], strides = [1, 1]} : vector<9x128xf32> to vector<1x128xf32>
    %59 = vector.shape_cast %58 : vector<1x128xf32> to vector<128xf32>
    %60 = vector.shape_cast %59 : vector<128xf32> to vector<1x1x128xf32>
    %61 = vector.broadcast %60 : vector<1x1x128xf32> to vector<16x16x128xf32>
    %62 = arith.mulf %57, %61 : vector<16x16x128xf32>
    %63 = arith.addf %56, %62 : vector<16x16x128xf32>
    %64 = vector.extract_strided_slice %49 {offsets = [2, 0, 0], sizes = [16, 16, 128], strides = [1, 1, 1]} : vector<18x16x128xf32> to vector<16x16x128xf32>
    %65 = vector.extract_strided_slice %26 {offsets = [7, 0], sizes = [1, 128], strides = [1, 1]} : vector<9x128xf32> to vector<1x128xf32>
    %66 = vector.shape_cast %65 : vector<1x128xf32> to vector<128xf32>
    %67 = vector.shape_cast %66 : vector<128xf32> to vector<1x1x128xf32>
    %68 = vector.broadcast %67 : vector<1x1x128xf32> to vector<16x16x128xf32>
    %69 = arith.mulf %64, %68 : vector<16x16x128xf32>
    %70 = arith.addf %63, %69 : vector<16x16x128xf32>
    %71 = vector.extract_strided_slice %25 {offsets = [0, 2, 0], sizes = [18, 16, 128], strides = [1, 1, 1]} : vector<18x18x128xf32> to vector<18x16x128xf32>
    %72 = vector.extract_strided_slice %71 {offsets = [0, 0, 0], sizes = [16, 16, 128], strides = [1, 1, 1]} : vector<18x16x128xf32> to vector<16x16x128xf32>
    %73 = vector.extract_strided_slice %26 {offsets = [2, 0], sizes = [1, 128], strides = [1, 1]} : vector<9x128xf32> to vector<1x128xf32>
    %74 = vector.shape_cast %73 : vector<1x128xf32> to vector<128xf32>
    %75 = vector.shape_cast %74 : vector<128xf32> to vector<1x1x128xf32>
    %76 = vector.broadcast %75 : vector<1x1x128xf32> to vector<16x16x128xf32>
    %77 = arith.mulf %72, %76 : vector<16x16x128xf32>
    %78 = arith.addf %70, %77 : vector<16x16x128xf32>
    %79 = vector.extract_strided_slice %71 {offsets = [1, 0, 0], sizes = [16, 16, 128], strides = [1, 1, 1]} : vector<18x16x128xf32> to vector<16x16x128xf32>
    %80 = vector.extract_strided_slice %26 {offsets = [5, 0], sizes = [1, 128], strides = [1, 1]} : vector<9x128xf32> to vector<1x128xf32>
    %81 = vector.shape_cast %80 : vector<1x128xf32> to vector<128xf32>
    %82 = vector.shape_cast %81 : vector<128xf32> to vector<1x1x128xf32>
    %83 = vector.broadcast %82 : vector<1x1x128xf32> to vector<16x16x128xf32>
    %84 = arith.mulf %79, %83 : vector<16x16x128xf32>
    %85 = arith.addf %78, %84 : vector<16x16x128xf32>
    %86 = vector.extract_strided_slice %71 {offsets = [2, 0, 0], sizes = [16, 16, 128], strides = [1, 1, 1]} : vector<18x16x128xf32> to vector<16x16x128xf32>
    %87 = vector.extract_strided_slice %26 {offsets = [8, 0], sizes = [1, 128], strides = [1, 1]} : vector<9x128xf32> to vector<1x128xf32>
    %88 = vector.shape_cast %87 : vector<1x128xf32> to vector<128xf32>
    %89 = vector.shape_cast %88 : vector<128xf32> to vector<1x1x128xf32>
    %90 = vector.broadcast %89 : vector<1x1x128xf32> to vector<16x16x128xf32>
    %91 = arith.mulf %86, %90 : vector<16x16x128xf32>
    %92 = arith.addf %85, %91 : vector<16x16x128xf32>
    %93 = vector.shape_cast %27 : vector<1x128xf32> to vector<1x1x128xf32>
    %94 = vector.broadcast %93 : vector<1x1x128xf32> to vector<16x16x128xf32>
    %95 = arith.addf %92, %94 : vector<16x16x128xf32>
    %96 = arith.negf %95 : vector<16x16x128xf32>
    %97 = math.exp %96 : vector<16x16x128xf32>
    %cst_32 = arith.constant 1.000000e+00 : f32
    %98 = vector.broadcast %cst_32 : f32 to vector<16x16x128xf32>
    %99 = arith.addf %98, %97 : vector<16x16x128xf32>
    %100 = arith.divf %98, %99 : vector<16x16x128xf32>
    %101 = arith.mulf %95, %100 : vector<16x16x128xf32>
    %102 = vector.shape_cast %101 : vector<16x16x128xf32> to vector<256x128xf32>
    %cst_33 = arith.constant dense<0.000000e+00> : vector<128xf32>
    %103 = vector.multi_reduction <add>, %102, %cst_33 [0] : vector<256x128xf32> to vector<128xf32>
    %104 = vector.shape_cast %103 : vector<128xf32> to vector<1x128xf32>
    %cst_34 = arith.constant 2.560000e+02 : f32
    %105 = vector.broadcast %cst_34 : f32 to vector<1x128xf32>
    %106 = arith.divf %104, %105 : vector<1x128xf32>
    %c0_35 = arith.constant 0 : index
    %c0_36 = arith.constant 0 : index
    %107 = vector.load %arg6[%c0_35, %c0_36] : memref<128x128xf32, #tpu.memory_space<vmem>>, vector<128x128xf32>
    %cst_37 = arith.constant dense<0.000000e+00> : vector<1x128xf32>
    %108 = tpu.matmul %106, %107, %cst_37 {dimension_numbers = #tpu.dot_dimension_numbers<[1], [0], [0], [1], [0, 0, 1, 1], [], []>} : vector<1x128xf32>, vector<128x128xf32>, vector<1x128xf32> -> vector<1x128xf32>
    %c0_38 = arith.constant 0 : index
    %c0_39 = arith.constant 0 : index
    %109 = vector.load %arg7[%c0_38, %c0_39] : memref<1x128xf32, #tpu.memory_space<vmem>>, vector<1x128xf32>
    %110 = arith.addf %108, %109 : vector<1x128xf32>
    %111 = arith.negf %110 : vector<1x128xf32>
    %112 = math.exp %111 : vector<1x128xf32>
    %cst_40 = arith.constant 1.000000e+00 : f32
    %113 = vector.broadcast %cst_40 : f32 to vector<1x128xf32>
    %114 = arith.addf %113, %112 : vector<1x128xf32>
    %115 = arith.divf %113, %114 : vector<1x128xf32>
    %116 = arith.mulf %110, %115 : vector<1x128xf32>
    %c0_41 = arith.constant 0 : index
    %c0_42 = arith.constant 0 : index
    %117 = vector.load %arg8[%c0_41, %c0_42] : memref<128x128xf32, #tpu.memory_space<vmem>>, vector<128x128xf32>
    %cst_43 = arith.constant dense<0.000000e+00> : vector<1x128xf32>
    %118 = tpu.matmul %116, %117, %cst_43 {dimension_numbers = #tpu.dot_dimension_numbers<[1], [0], [0], [1], [0, 0, 1, 1], [], []>} : vector<1x128xf32>, vector<128x128xf32>, vector<1x128xf32> -> vector<1x128xf32>
    %c0_44 = arith.constant 0 : index
    %c0_45 = arith.constant 0 : index
    %119 = vector.load %arg9[%c0_44, %c0_45] : memref<1x128xf32, #tpu.memory_space<vmem>>, vector<1x128xf32>
    %120 = arith.addf %118, %119 : vector<1x128xf32>
    %121 = arith.negf %120 : vector<1x128xf32>
    %122 = math.exp %121 : vector<1x128xf32>
    %cst_46 = arith.constant 1.000000e+00 : f32
    %123 = vector.broadcast %cst_46 : f32 to vector<1x128xf32>
    %124 = arith.addf %123, %122 : vector<1x128xf32>
    %125 = arith.divf %123, %124 : vector<1x128xf32>
    %126 = vector.shape_cast %125 : vector<1x128xf32> to vector<1x1x128xf32>
    %127 = vector.broadcast %126 : vector<1x1x128xf32> to vector<16x16x128xf32>
    %128 = arith.mulf %101, %127 : vector<16x16x128xf32>
    %129 = vector.shape_cast %128 : vector<16x16x128xf32> to vector<256x128xf32>
    %130 = arith.truncf %129 : vector<256x128xf32> to vector<256x128xbf16>
    %c0_47 = arith.constant 0 : index
    %c0_48 = arith.constant 0 : index
    %131 = vector.load %arg10[%c0_47, %c0_48] : memref<128x128xbf16, #tpu.memory_space<vmem>>, vector<128x128xbf16>
    %cst_49 = arith.constant dense<0.000000e+00> : vector<256x128xf32>
    %132 = tpu.matmul %130, %131, %cst_49 {dimension_numbers = #tpu.dot_dimension_numbers<[1], [0], [0], [1], [0, 0, 1, 1], [], []>} : vector<256x128xbf16>, vector<128x128xbf16>, vector<256x128xf32> -> vector<256x128xf32>
    %c0_50 = arith.constant 0 : index
    %c0_51 = arith.constant 0 : index
    %133 = vector.load %arg11[%c0_50, %c0_51] : memref<1x128xf32, #tpu.memory_space<vmem>>, vector<1x128xf32>
    %134 = vector.broadcast %133 : vector<1x128xf32> to vector<256x128xf32>
    %135 = arith.addf %132, %134 : vector<256x128xf32>
    %136 = vector.shape_cast %135 : vector<256x128xf32> to vector<16x16x128xf32>
    %137 = arith.addf %136, %1 : vector<16x16x128xf32>
    %c0_52 = arith.constant 0 : index
    %c0_53 = arith.constant 0 : index
    %c0_54 = arith.constant 0 : index
    %c0_55 = arith.constant 0 : index
    %138 = vector.load %arg12[%c0_52, %c0_53, %c0_54, %c0_55] : memref<1x16x16x128xf32, #tpu.memory_space<vmem>>, vector<1x16x16x128xf32>
    %139 = vector.shape_cast %138 : vector<1x16x16x128xf32> to vector<16x16x128xf32>
    %140 = vector.shape_cast %137 : vector<16x16x128xf32> to vector<1x16x16x128xf32>
    tpu.vector_store %arg12[%c0_52, %c0_53, %c0_54, %c0_55], %140 {strides = array<i32>} : memref<1x16x16x128xf32, #tpu.memory_space<vmem>>, vector<1x16x16x128xf32>,
    return
  }
  func.func @transform_0(%arg0: i32) -> (i32, i32, i32, i32) {
    %c0_i32 = arith.constant 0 : i32
    %c0_i32_0 = arith.constant 0 : i32
    %c0_i32_1 = arith.constant 0 : i32
    %c0_i32_2 = arith.constant 0 : i32
    return %arg0, %c0_i32, %c0_i32_0, %c0_i32_1 : i32, i32, i32, i32
  }
  func.func @transform_1(%arg0: i32) -> (i32, i32) {
    %c0_i32 = arith.constant 0 : i32
    %c0_i32_0 = arith.constant 0 : i32
    %c0_i32_1 = arith.constant 0 : i32
    return %c0_i32, %c0_i32_0 : i32, i32
  }
  func.func @transform_2(%arg0: i32) -> (i32, i32) {
    %c0_i32 = arith.constant 0 : i32
    %c0_i32_0 = arith.constant 0 : i32
    %c0_i32_1 = arith.constant 0 : i32
    return %c0_i32, %c0_i32_0 : i32, i32
  }
  func.func @transform_3(%arg0: i32) -> (i32, i32) {
    %c0_i32 = arith.constant 0 : i32
    %c0_i32_0 = arith.constant 0 : i32
    %c0_i32_1 = arith.constant 0 : i32
    return %c0_i32, %c0_i32_0 : i32, i32
  }
  func.func @transform_4(%arg0: i32) -> (i32, i32) {
    %c0_i32 = arith.constant 0 : i32
    %c0_i32_0 = arith.constant 0 : i32
    %c0_i32_1 = arith.constant 0 : i32
    return %c0_i32, %c0_i32_0 : i32, i32
  }
  func.func @transform_5(%arg0: i32) -> (i32, i32) {
    %c0_i32 = arith.constant 0 : i32
    %c0_i32_0 = arith.constant 0 : i32
    %c0_i32_1 = arith.constant 0 : i32
    return %c0_i32, %c0_i32_0 : i32, i32
  }
  func.func @transform_6(%arg0: i32) -> (i32, i32) {
    %c0_i32 = arith.constant 0 : i32
    %c0_i32_0 = arith.constant 0 : i32
    %c0_i32_1 = arith.constant 0 : i32
    return %c0_i32, %c0_i32_0 : i32, i32
  }
  func.func @transform_7(%arg0: i32) -> (i32, i32) {
    %c0_i32 = arith.constant 0 : i32
    %c0_i32_0 = arith.constant 0 : i32
    %c0_i32_1 = arith.constant 0 : i32
    return %c0_i32, %c0_i32_0 : i32, i32
  }
  func.func @transform_8(%arg0: i32) -> (i32, i32) {
    %c0_i32 = arith.constant 0 : i32
    %c0_i32_0 = arith.constant 0 : i32
    %c0_i32_1 = arith.constant 0 : i32
    return %c0_i32, %c0_i32_0 : i32, i32
  }
  func.func @transform_9(%arg0: i32) -> (i32, i32) {
    %c0_i32 = arith.constant 0 : i32
    %c0_i32_0 = arith.constant 0 : i32
    %c0_i32_1 = arith.constant 0 : i32
    return %c0_i32, %c0_i32_0 : i32, i32
  }
  func.func @transform_10(%arg0: i32) -> (i32, i32) {
    %c0_i32 = arith.constant 0 : i32
    %c0_i32_0 = arith.constant 0 : i32
    %c0_i32_1 = arith.constant 0 : i32
    return %c0_i32, %c0_i32_0 : i32, i32
  }
  func.func @transform_11(%arg0: i32) -> (i32, i32, i32, i32) {
    %c0_i32 = arith.constant 0 : i32
    %c0_i32_0 = arith.constant 0 : i32
    %c0_i32_1 = arith.constant 0 : i32
    %c0_i32_2 = arith.constant 0 : i32
    return %arg0, %c0_i32, %c0_i32_0, %c0_i32_1 : i32, i32, i32, i32
  }
}

</mosaic_0001>

<llo_original>
// kernel: tpu_custom_call.1
$region0: #{tpu_custom_call.1}
  #allocation0 [shape = 'u32[]', space=smem, size = 0x4, offset = 0x4, fixed_abs, tag = 'smem constant byte address 0x4 - core index']
  #allocation1 [shape = 'u32[144,128]{1,0:T(1,128)}', space=vmem, size = 0x12000, scoped, tag = 'internal scratch']
  #allocation2 [shape = 'f32[18,18,128]{2,1,0:T(8,128)}', space=vmem, size = 0x36000, scoped, tag = 'scratch operand']
  %s0 = inlined_call_operand.hbm [shape: f32[2,16,16,128], index: 0, kind: input, shape index: {}]
  %s1 = inlined_call_operand.hbm [shape: bf16[128,128], index: 1, kind: input, shape index: {}]
  %s2 = inlined_call_operand.vmem [shape: f32[1,128], index: 2, kind: input, shape index: {}]
  %s3 = inlined_call_operand.hbm [shape: f32[9,128], index: 3, kind: input, shape index: {}]
  %s4 = inlined_call_operand.vmem [shape: f32[1,128], index: 4, kind: input, shape index: {}]
  %s5 = inlined_call_operand.hbm [shape: f32[128,128], index: 5, kind: input, shape index: {}]
  %s6 = inlined_call_operand.vmem [shape: f32[1,128], index: 6, kind: input, shape index: {}]
  %s7 = inlined_call_operand.hbm [shape: f32[128,128], index: 7, kind: input, shape index: {}]
  %s8 = inlined_call_operand.vmem [shape: f32[1,128], index: 8, kind: input, shape index: {}]
  %s9 = inlined_call_operand.hbm [shape: bf16[128,128], index: 9, kind: input, shape index: {}]
  %s10 = inlined_call_operand.vmem [shape: f32[1,128], index: 10, kind: input, shape index: {}]
  %s11 = inlined_call_operand.hbm [shape: f32[2,16,16,128], index: 11, kind: output, shape index: {}]
  %s12 = sld [smem:[#allocation0]]
  $region101: #{tpu_custom_call.1} parent=0
    _
  %s14 = ssub.s32 1, %s12
  %s15 = scalar_select 0, %s14, %s12
  $region1: #{tpu_custom_call.1} parent=0
    #allocation3 [shape = 'u8[262144]{0}', space=vmem, size = 0x40000, scoped, tag = 'input window, operand 0']
    #allocation4 [shape = 's32[2]{0}', space=sflag, size = 0x8, scoped, tag = 'scoped memory for tpu_custom_call.1']
    #allocation5 [shape = 's32[2]{0}', space=sflag, size = 0x8, scoped, tag = 'scoped memory for tpu_custom_call.1']
    #allocation6 [shape = 'u8[32768]{0}', space=vmem, size = 0x8000, scoped, tag = 'input window, operand 1, single buffered']
    #allocation7 [shape = 's32[1]{0}', space=sflag, size = 0x4, scoped, tag = 'scoped memory for tpu_custom_call.1']
    #allocation8 [shape = 'u8[8192]{0}', space=vmem, size = 0x2000, scoped, tag = 'input window, operand 3, single buffered']
    #allocation9 [shape = 'u8[65536]{0}', space=vmem, size = 0x10000, scoped, tag = 'input window, operand 5, single buffered']
    #allocation10 [shape = 's32[1]{0}', space=sflag, size = 0x4, scoped, tag = 'scoped memory for tpu_custom_call.1']
    #allocation11 [shape = 'u8[65536]{0}', space=vmem, size = 0x10000, scoped, tag = 'input window, operand 7, single buffered']
    #allocation12 [shape = 'u8[32768]{0}', space=vmem, size = 0x8000, scoped, tag = 'input window, operand 9, single buffered']
    #allocation13 [shape = 's32[1]{0}', space=sflag, size = 0x4, scoped, tag = 'scoped memory for tpu_custom_call.1']
    #allocation14 [shape = 'u8[262144]{0}', space=vmem, size = 0x40000, scoped, tag = 'output window, operand 0']
    %16 = vsyncpa [#allocation4], 0
    %s17 = scalar_lea.sflag [#allocation4], 1
    %18 = vsyncpa %s17, 0
    %19 = vsyncpa [#allocation7], 0
    %20 = vsyncpa [#allocation10], 0
    %21 = vsyncpa [#allocation13], 0
    %22 = vsyncpa [#allocation5], 0
    %s23 = scalar_lea.sflag [#allocation5], 1
    %24 = vsyncpa %s23, 0
    loop: start=0, step=1, limit=4
    $region2: #{tpu_custom_call.1} parent=1 // loop_pre_header
      _
    $region3: #{tpu_custom_call.1} parent=1 // loop_header
      %s26 = sphi 0, %s30
      %p27 = scmp.ge.s32.totalorder %s26, 4
      %s36 = sphi 0, %s38
      %s39 = sphi 0, %s36
      %s40 = sphi 0, %s39
      %s56 = sphi 0, %s40
      %s60 = sphi 0, %s60
      %s62 = sphi 0, %s60
      %s63 = sphi 0, %s62
      %s77 = sphi 0, %s63
      %s81 = sphi 0, %s81
      %s83 = sphi 0, %s81
      %s84 = sphi 0, %s83
      %s98 = sphi 0, %s84
      %s102 = sphi 0, %s102
      %s104 = sphi 0, %s102
      %s105 = sphi 0, %s104
      %s119 = sphi 0, %s105
      %s123 = sphi 0, %s123
      %s125 = sphi 0, %s123
      %s126 = sphi 0, %s125
      %s140 = sphi 0, %s126
      %s144 = sphi 0, %s144
      %s146 = sphi 0, %s144
      %s147 = sphi 0, %s146
      %s161 = sphi 0, %s147
      %s165 = sphi 0, %s165
      %s167 = sphi 0, %s165
      %s168 = sphi 0, %s167
      %s182 = sphi 0, %s168
      %s186 = sphi 0, %s186
      %s188 = sphi 0, %s186
      %s189 = sphi 0, %s188
      %s203 = sphi 0, %s189
      %s207 = sphi 0, %s207
      %s209 = sphi 0, %s207
      %s210 = sphi 0, %s209
      %s224 = sphi 0, %s210
      %s228 = sphi 0, %s228
      %s230 = sphi 0, %s228
      %s231 = sphi 0, %s230
      %s245 = sphi 0, %s231
      %s249 = sphi 0, %s249
      %s251 = sphi 0, %s249
      %s252 = sphi 0, %s251
      %s266 = sphi 0, %s252
      %s272 = sphi 0, %s274
      %s275 = sphi 0, %s272
      %s276 = sphi 0, %s275
      %s292 = sphi 0, %s276
    $region4: #{tpu_custom_call.1} parent=1 // loop_header_branch
      %29 = sbr.rel (%p27) target = $region8
    $region5: #{tpu_custom_call.1} parent=1 // loop_body
      %s31 = ssub.s32 %s26, 1
      %s32 = ssub.s32 %s26, 2
      %s33 = sadd.s32 %s26, 1
      %s34 = ssub.s32 %s26, %s33
      %p35 = scmp.eq.s32.totalorder %s34, 0
      %s37 = sadd.s32 %s36, 1
      %s38 = scalar_select %p35, %s36, %s37
      %p41 = pneg %p35
      %p42 = scmp.eq.s32.totalorder %s26, 1
      %p43 = por %p41, %p42
      %p44 = scmp.ne.s32.totalorder %s36, %s39
      %p45 = scmp.eq.s32.totalorder %s26, 0
      %p46 = por %p44, %p45
      %p47 = scmp.ne.s32.totalorder %s36, %s39
      %p48 = scmp.eq.s32.totalorder %s31, 1
      %p49 = por %p47, %p48
      %p50 = scmp.ne.s32.totalorder %s39, %s40
      %p51 = scmp.eq.s32.totalorder %s31, 0
      %p52 = por %p50, %p51
      %p53 = scmp.ne.s32.totalorder %s39, %s40
      %p54 = scmp.eq.s32.totalorder %s32, 1
      %p55 = por %p53, %p54
      %p57 = scmp.ne.s32.totalorder %s40, %s56
      %p58 = scmp.eq.s32.totalorder %s32, 0
      %p59 = por %p57, %p58
      %s61 = sadd.s32 %s60, 1
      %p64 = scmp.eq.s32.totalorder %s26, 1
      %p65 = scmp.ne.s32.totalorder %s60, %s62
      %p66 = scmp.eq.s32.totalorder %s26, 0
      %p67 = por %p65, %p66
      %p68 = scmp.ne.s32.totalorder %s60, %s62
      %p69 = scmp.eq.s32.totalorder %s31, 1
      %p70 = por %p68, %p69
      %p71 = scmp.ne.s32.totalorder %s62, %s63
      %p72 = scmp.eq.s32.totalorder %s31, 0
      %p73 = por %p71, %p72
      %p74 = scmp.ne.s32.totalorder %s62, %s63
      %p75 = scmp.eq.s32.totalorder %s32, 1
      %p76 = por %p74, %p75
      %p78 = scmp.ne.s32.totalorder %s63, %s77
      %p79 = scmp.eq.s32.totalorder %s32, 0
      %p80 = por %p78, %p79
      %s82 = sadd.s32 %s81, 1
      %p85 = scmp.eq.s32.totalorder %s26, 1
      %p86 = scmp.ne.s32.totalorder %s81, %s83
      %p87 = scmp.eq.s32.totalorder %s26, 0
      %p88 = por %p86, %p87
      %p89 = scmp.ne.s32.totalorder %s81, %s83
      %p90 = scmp.eq.s32.totalorder %s31, 1
      %p91 = por %p89, %p90
      %p92 = scmp.ne.s32.totalorder %s83, %s84
      %p93 = scmp.eq.s32.totalorder %s31, 0
      %p94 = por %p92, %p93
      %p95 = scmp.ne.s32.totalorder %s83, %s84
      %p96 = scmp.eq.s32.totalorder %s32, 1
      %p97 = por %p95, %p96
      %p99 = scmp.ne.s32.totalorder %s84, %s98
      %p100 = scmp.eq.s32.totalorder %s32, 0
      %p101 = por %p99, %p100
      %s103 = sadd.s32 %s102, 1
      %p106 = scmp.eq.s32.totalorder %s26, 1
      %p107 = scmp.ne.s32.totalorder %s102, %s104
      %p108 = scmp.eq.s32.totalorder %s26, 0
      %p109 = por %p107, %p108
      %p110 = scmp.ne.s32.totalorder %s102, %s104
      %p111 = scmp.eq.s32.totalorder %s31, 1
      %p112 = por %p110, %p111
      %p113 = scmp.ne.s32.totalorder %s104, %s105
      %p114 = scmp.eq.s32.totalorder %s31, 0
      %p115 = por %p113, %p114
      %p116 = scmp.ne.s32.totalorder %s104, %s105
      %p117 = scmp.eq.s32.totalorder %s32, 1
      %p118 = por %p116, %p117
      %p120 = scmp.ne.s32.totalorder %s105, %s119
      %p121 = scmp.eq.s32.totalorder %s32, 0
      %p122 = por %p120, %p121
      %s124 = sadd.s32 %s123, 1
      %p127 = scmp.eq.s32.totalorder %s26, 1
      %p128 = scmp.ne.s32.totalorder %s123, %s125
      %p129 = scmp.eq.s32.totalorder %s26, 0
      %p130 = por %p128, %p129
      %p131 = scmp.ne.s32.totalorder %s123, %s125
      %p132 = scmp.eq.s32.totalorder %s31, 1
      %p133 = por %p131, %p132
      %p134 = scmp.ne.s32.totalorder %s125, %s126
      %p135 = scmp.eq.s32.totalorder %s31, 0
      %p136 = por %p134, %p135
      %p137 = scmp.ne.s32.totalorder %s125, %s126
      %p138 = scmp.eq.s32.totalorder %s32, 1
      %p139 = por %p137, %p138
      %p141 = scmp.ne.s32.totalorder %s126, %s140
      %p142 = scmp.eq.s32.totalorder %s32, 0
      %p143 = por %p141, %p142
      %s145 = sadd.s32 %s144, 1
      %p148 = scmp.eq.s32.totalorder %s26, 1
      %p149 = scmp.ne.s32.totalorder %s144, %s146
      %p150 = scmp.eq.s32.totalorder %s26, 0
      %p151 = por %p149, %p150
      %p152 = scmp.ne.s32.totalorder %s144, %s146
      %p153 = scmp.eq.s32.totalorder %s31, 1
      %p154 = por %p152, %p153
      %p155 = scmp.ne.s32.totalorder %s146, %s147
      %p156 = scmp.eq.s32.totalorder %s31, 0
      %p157 = por %p155, %p156
      %p158 = scmp.ne.s32.totalorder %s146, %s147
      %p159 = scmp.eq.s32.totalorder %s32, 1
      %p160 = por %p158, %p159
      %p162 = scmp.ne.s32.totalorder %s147, %s161
      %p163 = scmp.eq.s32.totalorder %s32, 0
      %p164 = por %p162, %p163
      %s166 = sadd.s32 %s165, 1
      %p169 = scmp.eq.s32.totalorder %s26, 1
      %p170 = scmp.ne.s32.totalorder %s165, %s167
      %p171 = scmp.eq.s32.totalorder %s26, 0
      %p172 = por %p170, %p171
      %p173 = scmp.ne.s32.totalorder %s165, %s167
      %p174 = scmp.eq.s32.totalorder %s31, 1
      %p175 = por %p173, %p174
      %p176 = scmp.ne.s32.totalorder %s167, %s168
      %p177 = scmp.eq.s32.totalorder %s31, 0
      %p178 = por %p176, %p177
      %p179 = scmp.ne.s32.totalorder %s167, %s168
      %p180 = scmp.eq.s32.totalorder %s32, 1
      %p181 = por %p179, %p180
      %p183 = scmp.ne.s32.totalorder %s168, %s182
      %p184 = scmp.eq.s32.totalorder %s32, 0
      %p185 = por %p183, %p184
      %s187 = sadd.s32 %s186, 1
      %p190 = scmp.eq.s32.totalorder %s26, 1
      %p191 = scmp.ne.s32.totalorder %s186, %s188
      %p192 = scmp.eq.s32.totalorder %s26, 0
      %p193 = por %p191, %p192
      %p194 = scmp.ne.s32.totalorder %s186, %s188
      %p195 = scmp.eq.s32.totalorder %s31, 1
      %p196 = por %p194, %p195
      %p197 = scmp.ne.s32.totalorder %s188, %s189
      %p198 = scmp.eq.s32.totalorder %s31, 0
      %p199 = por %p197, %p198
      %p200 = scmp.ne.s32.totalorder %s188, %s189
      %p201 = scmp.eq.s32.totalorder %s32, 1
      %p202 = por %p200, %p201
      %p204 = scmp.ne.s32.totalorder %s189, %s203
      %p205 = scmp.eq.s32.totalorder %s32, 0
      %p206 = por %p204, %p205
      %s208 = sadd.s32 %s207, 1
      %p211 = scmp.eq.s32.totalorder %s26, 1
      %p212 = scmp.ne.s32.totalorder %s207, %s209
      %p213 = scmp.eq.s32.totalorder %s26, 0
      %p214 = por %p212, %p213
      %p215 = scmp.ne.s32.totalorder %s207, %s209
      %p216 = scmp.eq.s32.totalorder %s31, 1
      %p217 = por %p215, %p216
      %p218 = scmp.ne.s32.totalorder %s209, %s210
      %p219 = scmp.eq.s32.totalorder %s31, 0
      %p220 = por %p218, %p219
      %p221 = scmp.ne.s32.totalorder %s209, %s210
      %p222 = scmp.eq.s32.totalorder %s32, 1
      %p223 = por %p221, %p222
      %p225 = scmp.ne.s32.totalorder %s210, %s224
      %p226 = scmp.eq.s32.totalorder %s32, 0
      %p227 = por %p225, %p226
      %s229 = sadd.s32 %s228, 1
      %p232 = scmp.eq.s32.totalorder %s26, 1
      %p233 = scmp.ne.s32.totalorder %s228, %s230
      %p234 = scmp.eq.s32.totalorder %s26, 0
      %p235 = por %p233, %p234
      %p236 = scmp.ne.s32.totalorder %s228, %s230
      %p237 = scmp.eq.s32.totalorder %s31, 1
      %p238 = por %p236, %p237
      %p239 = scmp.ne.s32.totalorder %s230, %s231
      %p240 = scmp.eq.s32.totalorder %s31, 0
      %p241 = por %p239, %p240
      %p242 = scmp.ne.s32.totalorder %s230, %s231
      %p243 = scmp.eq.s32.totalorder %s32, 1
      %p244 = por %p242, %p243
      %p246 = scmp.ne.s32.totalorder %s231, %s245
      %p247 = scmp.eq.s32.totalorder %s32, 0
      %p248 = por %p246, %p247
      %s250 = sadd.s32 %s249, 1
      %p253 = scmp.eq.s32.totalorder %s26, 1
      %p254 = scmp.ne.s32.totalorder %s249, %s251
      %p255 = scmp.eq.s32.totalorder %s26, 0
      %p256 = por %p254, %p255
      %p257 = scmp.ne.s32.totalorder %s249, %s251
      %p258 = scmp.eq.s32.totalorder %s31, 1
      %p259 = por %p257, %p258
      %p260 = scmp.ne.s32.totalorder %s251, %s252
      %p261 = scmp.eq.s32.totalorder %s31, 0
      %p262 = por %p260, %p261
      %p263 = scmp.ne.s32.totalorder %s251, %s252
      %p264 = scmp.eq.s32.totalorder %s32, 1
      %p265 = por %p263, %p264
      %p267 = scmp.ne.s32.totalorder %s252, %s266
      %p268 = scmp.eq.s32.totalorder %s32, 0
      %p269 = por %p267, %p268
      %s270 = ssub.s32 %s26, %s33
      %p271 = scmp.eq.s32.totalorder %s270, 0
      %s273 = sadd.s32 %s272, 1
      %s274 = scalar_select %p271, %s272, %s273
      %p277 = pneg %p271
      %p278 = scmp.eq.s32.totalorder %s26, 1
      %p279 = por %p277, %p278
      %p280 = scmp.ne.s32.totalorder %s272, %s275
      %p281 = scmp.eq.s32.totalorder %s26, 0
      %p282 = por %p280, %p281
      %p283 = scmp.ne.s32.totalorder %s272, %s275
      %p284 = scmp.eq.s32.totalorder %s31, 1
      %p285 = por %p283, %p284
      %p286 = scmp.ne.s32.totalorder %s275, %s276
      %p287 = scmp.eq.s32.totalorder %s31, 0
      %p288 = por %p286, %p287
      %p289 = scmp.ne.s32.totalorder %s275, %s276
      %p290 = scmp.eq.s32.totalorder %s32, 1
      %p291 = por %p289, %p290
      %p293 = scmp.ne.s32.totalorder %s276, %s292
      %p294 = scmp.eq.s32.totalorder %s32, 0
      %p295 = por %p293, %p294
      %p296 = scmp.le.s32.totalorder 1, %s26
      %p297 = scmp.lt.s32.totalorder %s26, 3
      %p298 = pnand %p296, %p297
      %p299 = pneg %p298
      // Predicated region
      $region9: #{tpu_custom_call.1} parent=5 // pred_check
        _
      $region10: #{tpu_custom_call.1} parent=5 // pred_check_branch
        %301 = sbr.rel (%p298) target = $region12
      $region11: #{tpu_custom_call.1} parent=5 // pred_region
        %s302 = ssub.s32 %s26, 1
        // Predicated region
        $region13: #{tpu_custom_call.1} parent=11 // pred_check
          %p303 = pneg %p73
        $region14: #{tpu_custom_call.1} parent=11 // pred_check_branch
          %305 = sbr.rel (%p303) target = $region16
        $region15: #{tpu_custom_call.1} parent=11 // pred_region
          %s307 = ssub.s32 1024, 1024
          %308 = vsyncadd [#allocation7], %s307
          %s309 = sshll.u32 [#allocation6], 4
          %s310 = int_to_ptr.vmem [resolvable:$true] %s309
          %315 = dma.hbm_to_vmem [thread:$0]  %s1, 1024, %s310, [#allocation7], 64, 64, 4
        $region16: #{tpu_custom_call.1} parent=11 // pred_fallthru
          _
        // Predicated region
        $region17: #{tpu_custom_call.1} parent=11 // pred_check
          %p316 = pneg %p94
        $region18: #{tpu_custom_call.1} parent=11 // pred_check_branch
          %318 = sbr.rel (%p316) target = $region20
        $region19: #{tpu_custom_call.1} parent=11 // pred_region
          _
        $region20: #{tpu_custom_call.1} parent=11 // pred_fallthru
          _
        // Predicated region
        $region21: #{tpu_custom_call.1} parent=11 // pred_check
          %p319 = pneg %p115
        $region22: #{tpu_custom_call.1} parent=11 // pred_check_branch
          %321 = sbr.rel (%p319) target = $region24
        $region23: #{tpu_custom_call.1} parent=11 // pred_region
          %s323 = ssub.s32 256, 256
          %324 = vsyncadd [#allocation7], %s323
          %s325 = sshll.u32 [#allocation8], 4
          %s326 = int_to_ptr.vmem [resolvable:$true] %s325
          %331 = dma.hbm_to_vmem [thread:$0]  %s3, 256, %s326, [#allocation7], 128, 128, 8
        $region24: #{tpu_custom_call.1} parent=11 // pred_fallthru
          _
        // Predicated region
        $region25: #{tpu_custom_call.1} parent=11 // pred_check
          %p332 = pneg %p136
        $region26: #{tpu_custom_call.1} parent=11 // pred_check_branch
          %334 = sbr.rel (%p332) target = $region28
        $region27: #{tpu_custom_call.1} parent=11 // pred_region
          _
        $region28: #{tpu_custom_call.1} parent=11 // pred_fallthru
          _
        // Predicated region
        $region29: #{tpu_custom_call.1} parent=11 // pred_check
          %p335 = pneg %p157
        $region30: #{tpu_custom_call.1} parent=11 // pred_check_branch
          %337 = sbr.rel (%p335) target = $region32
        $region31: #{tpu_custom_call.1} parent=11 // pred_region
          %s339 = ssub.s32 2048, 2048
          %340 = vsyncadd [#allocation10], %s339
          %s341 = sshll.u32 [#allocation9], 4
          %s342 = int_to_ptr.vmem [resolvable:$true] %s341
          %347 = dma.hbm_to_vmem [thread:$0]  %s5, 2048, %s342, [#allocation10], 128, 128, 8
        $region32: #{tpu_custom_call.1} parent=11 // pred_fallthru
          _
        // Predicated region
        $region33: #{tpu_custom_call.1} parent=11 // pred_check
          %p348 = pneg %p178
        $region34: #{tpu_custom_call.1} parent=11 // pred_check_branch
          %350 = sbr.rel (%p348) target = $region36
        $region35: #{tpu_custom_call.1} parent=11 // pred_region
          _
        $region36: #{tpu_custom_call.1} parent=11 // pred_fallthru
          _
        // Predicated region
        $region37: #{tpu_custom_call.1} parent=11 // pred_check
          %p351 = pneg %p199
        $region38: #{tpu_custom_call.1} parent=11 // pred_check_branch
          %353 = sbr.rel (%p351) target = $region40
        $region39: #{tpu_custom_call.1} parent=11 // pred_region
          %s355 = ssub.s32 2048, 2048
          %356 = vsyncadd [#allocation10], %s355
          %s357 = sshll.u32 [#allocation11], 4
          %s358 = int_to_ptr.vmem [resolvable:$true] %s357
          %363 = dma.hbm_to_vmem [thread:$0]  %s7, 2048, %s358, [#allocation10], 128, 128, 8
        $region40: #{tpu_custom_call.1} parent=11 // pred_fallthru
          _
        // Predicated region
        $region41: #{tpu_custom_call.1} parent=11 // pred_check
          %p364 = pneg %p220
        $region42: #{tpu_custom_call.1} parent=11 // pred_check_branch
          %366 = sbr.rel (%p364) target = $region44
        $region43: #{tpu_custom_call.1} parent=11 // pred_region
          _
        $region44: #{tpu_custom_call.1} parent=11 // pred_fallthru
          _
        // Predicated region
        $region45: #{tpu_custom_call.1} parent=11 // pred_check
          %p367 = pneg %p241
        $region46: #{tpu_custom_call.1} parent=11 // pred_check_branch
          %369 = sbr.rel (%p367) target = $region48
        $region47: #{tpu_custom_call.1} parent=11 // pred_region
          %s371 = ssub.s32 1024, 1024
          %372 = vsyncadd [#allocation13], %s371
          %s373 = sshll.u32 [#allocation12], 4
          %s374 = int_to_ptr.vmem [resolvable:$true] %s373
          %379 = dma.hbm_to_vmem [thread:$0]  %s9, 1024, %s374, [#allocation13], 64, 64, 4
        $region48: #{tpu_custom_call.1} parent=11 // pred_fallthru
          _
        // Predicated region
        $region49: #{tpu_custom_call.1} parent=11 // pred_check
          %p380 = pneg %p262
        $region50: #{tpu_custom_call.1} parent=11 // pred_check_branch
          %382 = sbr.rel (%p380) target = $region52
        $region51: #{tpu_custom_call.1} parent=11 // pred_region
          _
        $region52: #{tpu_custom_call.1} parent=11 // pred_fallthru
          _
      $region12: #{tpu_custom_call.1} parent=5 // pred_fallthru
        _
      %p383 = scmp.lt.s32.totalorder %s26, 2
      // Predicated region
      $region53: #{tpu_custom_call.1} parent=5 // pred_check
        %p384 = pneg %p383
      $region54: #{tpu_custom_call.1} parent=5 // pred_check_branch
        %386 = sbr.rel (%p384) target = $region56
      $region55: #{tpu_custom_call.1} parent=5 // pred_region
        // Predicated region
        $region57: #{tpu_custom_call.1} parent=55 // pred_check
          %p387 = pneg %p46
        $region58: #{tpu_custom_call.1} parent=55 // pred_check_branch
          %389 = sbr.rel (%p387) target = $region60
        $region59: #{tpu_custom_call.1} parent=55 // pred_region
          %s390 = sand.u32 %s36, 1
          %s391 = scalar_lea.sflag [#allocation4], %s390
          %s392 = sand.u32 %s36, 1
          %s393 = smul.addr %s392, 256
          %s394 = scalar_lea.vmem [#allocation3], %s393
          %s396 = ssub.s32 4096, 4096
          %397 = vsyncadd %s391, %s396
          %s398 = smul.addr %s26, 32
          %s399 = smul.addr %s398, 128
          %s400 = scalar_lea.hbm %s0, %s399
          %s401 = sshll.u32 %s394, 4
          %s402 = int_to_ptr.vmem [resolvable:$true] %s401
          %407 = dma.hbm_to_vmem [thread:$0]  %s400, 4096, %s402, %s391, 128, 128, 8
        $region60: #{tpu_custom_call.1} parent=55 // pred_fallthru
          _
      $region56: #{tpu_custom_call.1} parent=5 // pred_fallthru
        _
      %p408 = scmp.le.s32.totalorder 1, %s26
      %p409 = scmp.lt.s32.totalorder %s26, 3
      %p410 = pnand %p408, %p409
      %p411 = pneg %p410
      // Predicated region
      $region61: #{tpu_custom_call.1} parent=5 // pred_check
        _
      $region62: #{tpu_custom_call.1} parent=5 // pred_check_branch
        %413 = sbr.rel (%p410) target = $region64
      $region63: #{tpu_custom_call.1} parent=5 // pred_region
        %s414 = ssub.s32 %s26, 1
        %s415 = sand.u32 %s39, 1
        %s416 = scalar_lea.sflag [#allocation4], %s415
        %s417 = sand.u32 %s39, 1
        %s418 = smul.addr %s417, 256
        %s419 = scalar_lea.vmem [#allocation3], %s418
        // Predicated region
        $region65: #{tpu_custom_call.1} parent=63 // pred_check
          %p420 = pneg %p52
        $region66: #{tpu_custom_call.1} parent=63 // pred_check_branch
          %422 = sbr.rel (%p420) target = $region68
        $region67: #{tpu_custom_call.1} parent=63 // pred_region
          %423 = dma.done %s416, 4096
        $region68: #{tpu_custom_call.1} parent=63 // pred_fallthru
          _
        // Predicated region
        $region69: #{tpu_custom_call.1} parent=63 // pred_check
          %p424 = pneg %p73
        $region70: #{tpu_custom_call.1} parent=63 // pred_check_branch
          %426 = sbr.rel (%p424) target = $region72
        $region71: #{tpu_custom_call.1} parent=63 // pred_region
          %427 = dma.done [#allocation7], 1024
        $region72: #{tpu_custom_call.1} parent=63 // pred_fallthru
          _
        // Predicated region
        $region73: #{tpu_custom_call.1} parent=63 // pred_check
          %p428 = pneg %p115
        $region74: #{tpu_custom_call.1} parent=63 // pred_check_branch
          %430 = sbr.rel (%p428) target = $region76
        $region75: #{tpu_custom_call.1} parent=63 // pred_region
          %431 = dma.done [#allocation7], 256
        $region76: #{tpu_custom_call.1} parent=63 // pred_fallthru
          _
        // Predicated region
        $region77: #{tpu_custom_call.1} parent=63 // pred_check
          %p432 = pneg %p157
        $region78: #{tpu_custom_call.1} parent=63 // pred_check_branch
          %434 = sbr.rel (%p432) target = $region80
        $region79: #{tpu_custom_call.1} parent=63 // pred_region
          %435 = dma.done [#allocation10], 2048
        $region80: #{tpu_custom_call.1} parent=63 // pred_fallthru
          _
        // Predicated region
        $region81: #{tpu_custom_call.1} parent=63 // pred_check
          %p436 = pneg %p199
        $region82: #{tpu_custom_call.1} parent=63 // pred_check_branch
          %438 = sbr.rel (%p436) target = $region84
        $region83: #{tpu_custom_call.1} parent=63 // pred_region
          %439 = dma.done [#allocation10], 2048
        $region84: #{tpu_custom_call.1} parent=63 // pred_fallthru
          _
        // Predicated region
        $region85: #{tpu_custom_call.1} parent=63 // pred_check
          %p440 = pneg %p241
        $region86: #{tpu_custom_call.1} parent=63 // pred_check_branch
          %442 = sbr.rel (%p440) target = $region88
        $region87: #{tpu_custom_call.1} parent=63 // pred_region
          %443 = dma.done [#allocation13], 1024
        $region88: #{tpu_custom_call.1} parent=63 // pred_fallthru
          _
        %s444 = sand.u32 %s39, 1
        %s445 = scalar_lea.sflag [#allocation4], %s444
        %s446 = sand.u32 %s39, 1
        %s447 = smul.addr %s446, 256
        %s448 = scalar_lea.vmem [#allocation3], %s447
        %p449 = pneg %p52
        %p450 = pneg %p49
        %p451 = pneg %p73
        %p452 = pneg %p70
        %p453 = pneg %p94
        %p454 = pneg %p91
        %p455 = pneg %p115
        %p456 = pneg %p112
        %p457 = pneg %p136
        %p458 = pneg %p133
        %p459 = pneg %p157
        %p460 = pneg %p154
        %p461 = pneg %p178
        %p462 = pneg %p175
        %p463 = pneg %p199
        %p464 = pneg %p196
        %p465 = pneg %p220
        %p466 = pneg %p217
        %p467 = pneg %p241
        %p468 = pneg %p238
        %p469 = pneg %p262
        %p470 = pneg %p259
        %p471 = pneg %p288
        %p472 = pneg %p285
        %s473 = sand.u32 %s275, 1
        %s474 = scalar_lea.sflag [#allocation5], %s473
        %s475 = sand.u32 %s275, 1
        %s476 = smul.addr %s475, 256
        %s477 = scalar_lea.vmem [#allocation14], %s476
        %v479 = vld [vmem:[%s419] sm:$0xff]
        %v480 = vld [vmem:[%s419 + $0x8] sm:$0xff]
        %v481 = vld [vmem:[%s419 + $0x10] sm:$0xff]
        %v482 = vld [vmem:[%s419 + $0x18] sm:$0xff]
        %v483 = vld [vmem:[%s419 + $0x20] sm:$0xff]
        %v484 = vld [vmem:[%s419 + $0x28] sm:$0xff]
        %v485 = vld [vmem:[%s419 + $0x30] sm:$0xff]
        %v486 = vld [vmem:[%s419 + $0x38] sm:$0xff]
        %v487 = vld [vmem:[%s419 + $0x40] sm:$0xff]
        %v488 = vld [vmem:[%s419 + $0x48] sm:$0xff]
        %v489 = vld [vmem:[%s419 + $0x50] sm:$0xff]
        %v490 = vld [vmem:[%s419 + $0x58] sm:$0xff]
        %v491 = vld [vmem:[%s419 + $0x60] sm:$0xff]
        %v492 = vld [vmem:[%s419 + $0x68] sm:$0xff]
        %v493 = vld [vmem:[%s419 + $0x70] sm:$0xff]
        %v494 = vld [vmem:[%s419 + $0x78] sm:$0xff]
        %v495 = vld [vmem:[%s419 + $0x80] sm:$0xff]
        %v496 = vld [vmem:[%s419 + $0x88] sm:$0xff]
        %v497 = vld [vmem:[%s419 + $0x90] sm:$0xff]
        %v498 = vld [vmem:[%s419 + $0x98] sm:$0xff]
        %v499 = vld [vmem:[%s419 + $0xa0] sm:$0xff]
        %v500 = vld [vmem:[%s419 + $0xa8] sm:$0xff]
        %v501 = vld [vmem:[%s419 + $0xb0] sm:$0xff]
        %v502 = vld [vmem:[%s419 + $0xb8] sm:$0xff]
        %v503 = vld [vmem:[%s419 + $0xc0] sm:$0xff]
        %v504 = vld [vmem:[%s419 + $0xc8] sm:$0xff]
        %v505 = vld [vmem:[%s419 + $0xd0] sm:$0xff]
        %v506 = vld [vmem:[%s419 + $0xd8] sm:$0xff]
        %v507 = vld [vmem:[%s419 + $0xe0] sm:$0xff]
        %v508 = vld [vmem:[%s419 + $0xe8] sm:$0xff]
        %v509 = vld [vmem:[%s419 + $0xf0] sm:$0xff]
        %v510 = vld [vmem:[%s419 + $0xf8] sm:$0xff]
        %v511 = vpack.c.bf16 %v480, %v479
        %v512 = vpack.c.bf16 %v482, %v481
        %v513 = vpack.c.bf16 %v484, %v483
        %v514 = vpack.c.bf16 %v486, %v485
        %v515 = vpack.c.bf16 %v488, %v487
        %v516 = vpack.c.bf16 %v490, %v489
        %v517 = vpack.c.bf16 %v492, %v491
        %v518 = vpack.c.bf16 %v494, %v493
        %v519 = vpack.c.bf16 %v496, %v495
        %v520 = vpack.c.bf16 %v498, %v497
        %v521 = vpack.c.bf16 %v500, %v499
        %v522 = vpack.c.bf16 %v502, %v501
        %v523 = vpack.c.bf16 %v504, %v503
        %v524 = vpack.c.bf16 %v506, %v505
        %v525 = vpack.c.bf16 %v508, %v507
        %v526 = vpack.c.bf16 %v510, %v509
        %v527 = vld [vmem:[#allocation6] sm:$0xf]
        %v528 = vld [vmem:[#allocation6 + $0x4] sm:$0xf]
        %v529 = vld [vmem:[#allocation6 + $0x8] sm:$0xf]
        %v530 = vld [vmem:[#allocation6 + $0xc] sm:$0xf]
        %v531 = vld [vmem:[#allocation6 + $0x10] sm:$0xf]
        %v532 = vld [vmem:[#allocation6 + $0x14] sm:$0xf]
        %v533 = vld [vmem:[#allocation6 + $0x18] sm:$0xf]
        %v534 = vld [vmem:[#allocation6 + $0x1c] sm:$0xf]
        %v535 = vld [vmem:[#allocation6 + $0x20] sm:$0xf]
        %v536 = vld [vmem:[#allocation6 + $0x24] sm:$0xf]
        %v537 = vld [vmem:[#allocation6 + $0x28] sm:$0xf]
        %v538 = vld [vmem:[#allocation6 + $0x2c] sm:$0xf]
        %v539 = vld [vmem:[#allocation6 + $0x30] sm:$0xf]
        %v540 = vld [vmem:[#allocation6 + $0x34] sm:$0xf]
        %v541 = vld [vmem:[#allocation6 + $0x38] sm:$0xf]
        %v542 = vld [vmem:[#allocation6 + $0x3c] sm:$0xf]
        %v543 = vld [vmem:[%s2] sm:$0x1]
        %v545 = vlaneseq
        %v546 = vshrl.u32 %v545, 7
        %v547 = vsub.s32 0, %v546
        %v548 = vrot.slane %v543, %v547
        %v566 = vunpack.c.l.b16 %v527
        %v567 = vunpack.c.l.b16 %v528
        %v568 = vunpack.c.l.b16 %v529
        %v569 = vunpack.c.l.b16 %v530
        %v570 = vunpack.c.l.b16 %v531
        %v571 = vunpack.c.l.b16 %v532
        %v572 = vunpack.c.l.b16 %v533
        %v573 = vunpack.c.l.b16 %v534
        %v574 = vunpack.c.l.b16 %v535
        %v575 = vunpack.c.l.b16 %v536
        %v576 = vunpack.c.l.b16 %v537
        %v577 = vunpack.c.l.b16 %v538
        %v578 = vunpack.c.l.b16 %v539
        %v579 = vunpack.c.l.b16 %v540
        %v580 = vunpack.c.l.b16 %v541
        %v581 = vunpack.c.l.b16 %v542
        %v582 = vpack.c.b16 %v567, %v566
        %v583 = vpack.c.b16 %v569, %v568
        %v584 = vpack.c.b16 %v571, %v570
        %v585 = vpack.c.b16 %v573, %v572
        %v586 = vpack.c.b16 %v575, %v574
        %v587 = vpack.c.b16 %v577, %v576
        %v588 = vpack.c.b16 %v579, %v578
        %v589 = vpack.c.b16 %v581, %v580
        %598 = vmatprep.subr.bf16.mxu0 0
        %599 = vmatpush1.bf16.msra.mxu0 %v582
        %600 = vmatprep.subr.bf16.mxu0 0
        %601 = vmatpush1.bf16.msra.mxu0 %v583
        %602 = vmatprep.subr.bf16.mxu0 0
        %603 = vmatpush1.bf16.msra.mxu0 %v584
        %604 = vmatprep.subr.bf16.mxu0 0
        %605 = vmatpush1.bf16.msra.mxu0 %v585
        %606 = vmatprep.subr.bf16.mxu0 0
        %607 = vmatpush1.bf16.msra.mxu0 %v586
        %608 = vmatprep.subr.bf16.mxu0 0
        %609 = vmatpush1.bf16.msra.mxu0 %v587
        %610 = vmatprep.subr.bf16.mxu0 0
        %611 = vmatpush1.bf16.msra.mxu0 %v588
        %612 = vmatprep.subr.bf16.mxu0 0
        %613 = vmatpush1.bf16.msra.mxu0 %v589
        %614 = vmatprep.subr.bf16.mxu0 0
        %615 = vmatpush1.bf16.msra.mxu0 0
        %616 = vmatprep.subr.bf16.mxu0 0
        %617 = vmatpush1.bf16.msra.mxu0 0
        %618 = vmatprep.subr.bf16.mxu0 0
        %619 = vmatpush1.bf16.msra.mxu0 0
        %620 = vmatprep.subr.bf16.mxu0 0
        %621 = vmatpush1.bf16.msra.mxu0 0
        %622 = vmatprep.subr.bf16.mxu0 0
        %623 = vmatpush1.bf16.msra.mxu0 0
        %624 = vmatprep.subr.bf16.mxu0 0
        %625 = vmatpush1.bf16.msra.mxu0 0
        %626 = vmatprep.subr.bf16.mxu0 0
        %627 = vmatpush1.bf16.msra.mxu0 0
        %628 = vmatprep.subr.bf16.mxu0 0
        %629 = vmatpush1.bf16.msra.mxu0 0
        %630 = vmatprep.mubr.bf16.mxu0 0
        %631 = vmatmul.mubr.bf16.gmra.mrb[0].mxu0 %v511
        %v632 = vpop.f32.mrb[0].mxu0
        %v633 = vadd.f32 %v548, %v632
        %v634 = vpop.f32.mrb[0].mxu0
        %v635 = vpop.f32.mrb[0].mxu0
        %v636 = vadd.f32 %v548, %v635
        %v637 = vpop.f32.mrb[0].mxu0
        %638 = vmatprep.mubr.bf16.mxu0 0
        %639 = vmatmul.mubr.bf16.gmra.mrb[0].mxu0 %v512
        %v640 = vpop.f32.mrb[0].mxu0
        %v641 = vadd.f32 %v548, %v640
        %v642 = vpop.f32.mrb[0].mxu0
        %v643 = vpop.f32.mrb[0].mxu0
        %v644 = vadd.f32 %v548, %v643
        %v645 = vpop.f32.mrb[0].mxu0
        %646 = vmatprep.mubr.bf16.mxu0 0
        %647 = vmatmul.mubr.bf16.gmra.mrb[0].mxu0 %v513
        %v648 = vpop.f32.mrb[0].mxu0
        %v649 = vadd.f32 %v548, %v648
        %v650 = vpop.f32.mrb[0].mxu0
        %v651 = vpop.f32.mrb[0].mxu0
        %v652 = vadd.f32 %v548, %v651
        %v653 = vpop.f32.mrb[0].mxu0
        %654 = vmatprep.mubr.bf16.mxu0 0
        %655 = vmatmul.mubr.bf16.gmra.mrb[0].mxu0 %v514
        %v656 = vpop.f32.mrb[0].mxu0
        %v657 = vadd.f32 %v548, %v656
        %v658 = vpop.f32.mrb[0].mxu0
        %v659 = vpop.f32.mrb[0].mxu0
        %v660 = vadd.f32 %v548, %v659
        %v661 = vpop.f32.mrb[0].mxu0
        %662 = vmatprep.mubr.bf16.mxu0 0
        %663 = vmatmul.mubr.bf16.gmra.mrb[0].mxu0 %v515
        %v664 = vpop.f32.mrb[0].mxu0
        %v665 = vadd.f32 %v548, %v664
        %v666 = vpop.f32.mrb[0].mxu0
        %v667 = vpop.f32.mrb[0].mxu0
        %v668 = vadd.f32 %v548, %v667
        %v669 = vpop.f32.mrb[0].mxu0
        %670 = vmatprep.mubr.bf16.mxu0 0
        %671 = vmatmul.mubr.bf16.gmra.mrb[0].mxu0 %v516
        %v672 = vpop.f32.mrb[0].mxu0
        %v673 = vadd.f32 %v548, %v672
        %v674 = vpop.f32.mrb[0].mxu0
        %v675 = vpop.f32.mrb[0].mxu0
        %v676 = vadd.f32 %v548, %v675
        %v677 = vpop.f32.mrb[0].mxu0
        %678 = vmatprep.mubr.bf16.mxu0 0
        %679 = vmatmul.mubr.bf16.gmra.mrb[0].mxu0 %v517
        %v680 = vpop.f32.mrb[0].mxu0
        %v681 = vadd.f32 %v548, %v680
        %v682 = vpop.f32.mrb[0].mxu0
        %v683 = vpop.f32.mrb[0].mxu0
        %v684 = vadd.f32 %v548, %v683
        %v685 = vpop.f32.mrb[0].mxu0
        %686 = vmatprep.mubr.bf16.mxu0 0
        %687 = vmatmul.mubr.bf16.gmra.mrb[0].mxu0 %v518
        %v688 = vpop.f32.mrb[0].mxu0
        %v689 = vadd.f32 %v548, %v688
        %v690 = vpop.f32.mrb[0].mxu0
        %v691 = vpop.f32.mrb[0].mxu0
        %v692 = vadd.f32 %v548, %v691
        %v693 = vpop.f32.mrb[0].mxu0
        %694 = vmatprep.mubr.bf16.mxu0 0
        %695 = vmatmul.mubr.bf16.gmra.mrb[0].mxu0 %v519
        %v696 = vpop.f32.mrb[0].mxu0
        %v697 = vadd.f32 %v548, %v696
        %v698 = vpop.f32.mrb[0].mxu0
        %v699 = vpop.f32.mrb[0].mxu0
        %v700 = vadd.f32 %v548, %v699
        %v701 = vpop.f32.mrb[0].mxu0
        %702 = vmatprep.mubr.bf16.mxu0 0
        %703 = vmatmul.mubr.bf16.gmra.mrb[0].mxu0 %v520
        %v704 = vpop.f32.mrb[0].mxu0
        %v705 = vadd.f32 %v548, %v704
        %v706 = vpop.f32.mrb[0].mxu0
        %v707 = vpop.f32.mrb[0].mxu0
        %v708 = vadd.f32 %v548, %v707
        %v709 = vpop.f32.mrb[0].mxu0
        %710 = vmatprep.mubr.bf16.mxu0 0
        %711 = vmatmul.mubr.bf16.gmra.mrb[0].mxu0 %v521
        %v712 = vpop.f32.mrb[0].mxu0
        %v713 = vadd.f32 %v548, %v712
        %v714 = vpop.f32.mrb[0].mxu0
        %v715 = vpop.f32.mrb[0].mxu0
        %v716 = vadd.f32 %v548, %v715
        %v717 = vpop.f32.mrb[0].mxu0
        %718 = vmatprep.mubr.bf16.mxu0 0
        %719 = vmatmul.mubr.bf16.gmra.mrb[0].mxu0 %v522
        %v720 = vpop.f32.mrb[0].mxu0
        %v721 = vadd.f32 %v548, %v720
        %v722 = vpop.f32.mrb[0].mxu0
        %v723 = vpop.f32.mrb[0].mxu0
        %v724 = vadd.f32 %v548, %v723
        %v725 = vpop.f32.mrb[0].mxu0
        %726 = vmatprep.mubr.bf16.mxu0 0
        %727 = vmatmul.mubr.bf16.gmra.mrb[0].mxu0 %v523
        %v728 = vpop.f32.mrb[0].mxu0
        %v729 = vadd.f32 %v548, %v728
        %v730 = vpop.f32.mrb[0].mxu0
        %v731 = vpop.f32.mrb[0].mxu0
        %v732 = vadd.f32 %v548, %v731
        %v733 = vpop.f32.mrb[0].mxu0
        %734 = vmatprep.mubr.bf16.mxu0 0
        %735 = vmatmul.mubr.bf16.gmra.mrb[0].mxu0 %v524
        %v736 = vpop.f32.mrb[0].mxu0
        %v737 = vadd.f32 %v548, %v736
        %v738 = vpop.f32.mrb[0].mxu0
        %v739 = vpop.f32.mrb[0].mxu0
        %v740 = vadd.f32 %v548, %v739
        %v741 = vpop.f32.mrb[0].mxu0
        %742 = vmatprep.mubr.bf16.mxu0 0
        %743 = vmatmul.mubr.bf16.gmra.mrb[0].mxu0 %v525
        %v744 = vpop.f32.mrb[0].mxu0
        %v745 = vadd.f32 %v548, %v744
        %v746 = vpop.f32.mrb[0].mxu0
        %v747 = vpop.f32.mrb[0].mxu0
        %v748 = vadd.f32 %v548, %v747
        %v749 = vpop.f32.mrb[0].mxu0
        %750 = vmatprep.mubr.bf16.mxu0 0
        %751 = vmatmul.mubr.bf16.gmra.mrb[0].mxu0 %v526
        %v752 = vpop.f32.mrb[0].mxu0
        %v753 = vadd.f32 %v548, %v752
        %v754 = vpop.f32.mrb[0].mxu0
        %v755 = vpop.f32.mrb[0].mxu0
        %v756 = vadd.f32 %v548, %v755
        %v757 = vpop.f32.mrb[0].mxu0
        %758 = vdwg.mxu0
        %v759 = vxor.u32 %v633, 2147483648
        %v760 = vxor.u32 %v636, 2147483648
        %v761 = vxor.u32 %v641, 2147483648
        %v762 = vxor.u32 %v644, 2147483648
        %v763 = vxor.u32 %v649, 2147483648
        %v764 = vxor.u32 %v652, 2147483648
        %v765 = vxor.u32 %v657, 2147483648
        %v766 = vxor.u32 %v660, 2147483648
        %v767 = vxor.u32 %v665, 2147483648
        %v768 = vxor.u32 %v668, 2147483648
        %v769 = vxor.u32 %v673, 2147483648
        %v770 = vxor.u32 %v676, 2147483648
        %v771 = vxor.u32 %v681, 2147483648
        %v772 = vxor.u32 %v684, 2147483648
        %v773 = vxor.u32 %v689, 2147483648
        %v774 = vxor.u32 %v692, 2147483648
        %v775 = vxor.u32 %v697, 2147483648
        %v776 = vxor.u32 %v700, 2147483648
        %v777 = vxor.u32 %v705, 2147483648
        %v778 = vxor.u32 %v708, 2147483648
        %v779 = vxor.u32 %v713, 2147483648
        %v780 = vxor.u32 %v716, 2147483648
        %v781 = vxor.u32 %v721, 2147483648
        %v782 = vxor.u32 %v724, 2147483648
        %v783 = vxor.u32 %v729, 2147483648
        %v784 = vxor.u32 %v732, 2147483648
        %v785 = vxor.u32 %v737, 2147483648
        %v786 = vxor.u32 %v740, 2147483648
        %v787 = vxor.u32 %v745, 2147483648
        %v788 = vxor.u32 %v748, 2147483648
        %v789 = vxor.u32 %v753, 2147483648
        %v790 = vxor.u32 %v756, 2147483648
        %v791 = vmul.f32 %v759, 1.442695
        %v792 = vpow.pop %v791
        %v793 = vmul.f32 %v760, 1.442695
        %v794 = vpow.pop %v793
        %v795 = vmul.f32 %v761, 1.442695
        %v796 = vpow.pop %v795
        %v797 = vmul.f32 %v762, 1.442695
        %v798 = vpow.pop %v797
        %v799 = vmul.f32 %v763, 1.442695
        %v800 = vpow.pop %v799
        %v801 = vmul.f32 %v764, 1.442695
        %v802 = vpow.pop %v801
        %v803 = vmul.f32 %v765, 1.442695
        %v804 = vpow.pop %v803
        %v805 = vmul.f32 %v766, 1.442695
        %v806 = vpow.pop %v805
        %v807 = vmul.f32 %v767, 1.442695
        %v808 = vpow.pop %v807
        %v809 = vmul.f32 %v768, 1.442695
        %v810 = vpow.pop %v809
        %v811 = vmul.f32 %v769, 1.442695
        %v812 = vpow.pop %v811
        %v813 = vmul.f32 %v770, 1.442695
        %v814 = vpow.pop %v813
        %v815 = vmul.f32 %v771, 1.442695
        %v816 = vpow.pop %v815
        %v817 = vmul.f32 %v772, 1.442695
        %v818 = vpow.pop %v817
        %v819 = vmul.f32 %v773, 1.442695
        %v820 = vpow.pop %v819
        %v821 = vmul.f32 %v774, 1.442695
        %v822 = vpow.pop %v821
        %v823 = vmul.f32 %v775, 1.442695
        %v824 = vpow.pop %v823
        %v825 = vmul.f32 %v776, 1.442695
        %v826 = vpow.pop %v825
        %v827 = vmul.f32 %v777, 1.442695
        %v828 = vpow.pop %v827
        %v829 = vmul.f32 %v778, 1.442695
        %v830 = vpow.pop %v829
        %v831 = vmul.f32 %v779, 1.442695
        %v832 = vpow.pop %v831
        %v833 = vmul.f32 %v780, 1.442695
        %v834 = vpow.pop %v833
        %v835 = vmul.f32 %v781, 1.442695
        %v836 = vpow.pop %v835
        %v837 = vmul.f32 %v782, 1.442695
        %v838 = vpow.pop %v837
        %v839 = vmul.f32 %v783, 1.442695
        %v840 = vpow.pop %v839
        %v841 = vmul.f32 %v784, 1.442695
        %v842 = vpow.pop %v841
        %v843 = vmul.f32 %v785, 1.442695
        %v844 = vpow.pop %v843
        %v845 = vmul.f32 %v786, 1.442695
        %v846 = vpow.pop %v845
        %v847 = vmul.f32 %v787, 1.442695
        %v848 = vpow.pop %v847
        %v849 = vmul.f32 %v788, 1.442695
        %v850 = vpow.pop %v849
        %v851 = vmul.f32 %v789, 1.442695
        %v852 = vpow.pop %v851
        %v853 = vmul.f32 %v790, 1.442695
        %v854 = vpow.pop %v853
        %v855 = vadd.f32 %v792, 1.0
        %v856 = vadd.f32 %v794, 1.0
        %v857 = vadd.f32 %v796, 1.0
        %v858 = vadd.f32 %v798, 1.0
        %v859 = vadd.f32 %v800, 1.0
        %v860 = vadd.f32 %v802, 1.0
        %v861 = vadd.f32 %v804, 1.0
        %v862 = vadd.f32 %v806, 1.0
        %v863 = vadd.f32 %v808, 1.0
        %v864 = vadd.f32 %v810, 1.0
        %v865 = vadd.f32 %v812, 1.0
        %v866 = vadd.f32 %v814, 1.0
        %v867 = vadd.f32 %v816, 1.0
        %v868 = vadd.f32 %v818, 1.0
        %v869 = vadd.f32 %v820, 1.0
        %v870 = vadd.f32 %v822, 1.0
        %v871 = vadd.f32 %v824, 1.0
        %v872 = vadd.f32 %v826, 1.0
        %v873 = vadd.f32 %v828, 1.0
        %v874 = vadd.f32 %v830, 1.0
        %v875 = vadd.f32 %v832, 1.0
        %v876 = vadd.f32 %v834, 1.0
        %v877 = vadd.f32 %v836, 1.0
        %v878 = vadd.f32 %v838, 1.0
        %v879 = vadd.f32 %v840, 1.0
        %v880 = vadd.f32 %v842, 1.0
        %v881 = vadd.f32 %v844, 1.0
        %v882 = vadd.f32 %v846, 1.0
        %v883 = vadd.f32 %v848, 1.0
        %v884 = vadd.f32 %v850, 1.0
        %v885 = vadd.f32 %v852, 1.0
        %v886 = vadd.f32 %v854, 1.0
        %v887 = vrcp.pop %v855
        %v888 = vmul.f32 1.0, %v887
        %v889 = vrcp.pop %v856
        %v890 = vmul.f32 1.0, %v889
        %v891 = vrcp.pop %v857
        %v892 = vmul.f32 1.0, %v891
        %v893 = vrcp.pop %v858
        %v894 = vmul.f32 1.0, %v893
        %v895 = vrcp.pop %v859
        %v896 = vmul.f32 1.0, %v895
        %v897 = vrcp.pop %v860
        %v898 = vmul.f32 1.0, %v897
        %v899 = vrcp.pop %v861
        %v900 = vmul.f32 1.0, %v899
        %v901 = vrcp.pop %v862
        %v902 = vmul.f32 1.0, %v901
        %v903 = vrcp.pop %v863
        %v904 = vmul.f32 1.0, %v903
        %v905 = vrcp.pop %v864
        %v906 = vmul.f32 1.0, %v905
        %v907 = vrcp.pop %v865
        %v908 = vmul.f32 1.0, %v907
        %v909 = vrcp.pop %v866
        %v910 = vmul.f32 1.0, %v909
        %v911 = vrcp.pop %v867
        %v912 = vmul.f32 1.0, %v911
        %v913 = vrcp.pop %v868
        %v914 = vmul.f32 1.0, %v913
        %v915 = vrcp.pop %v869
        %v916 = vmul.f32 1.0, %v915
        %v917 = vrcp.pop %v870
        %v918 = vmul.f32 1.0, %v917
        %v919 = vrcp.pop %v871
        %v920 = vmul.f32 1.0, %v919
        %v921 = vrcp.pop %v872
        %v922 = vmul.f32 1.0, %v921
        %v923 = vrcp.pop %v873
        %v924 = vmul.f32 1.0, %v923
        %v925 = vrcp.pop %v874
        %v926 = vmul.f32 1.0, %v925
        %v927 = vrcp.pop %v875
        %v928 = vmul.f32 1.0, %v927
        %v929 = vrcp.pop %v876
        %v930 = vmul.f32 1.0, %v929
        %v931 = vrcp.pop %v877
        %v932 = vmul.f32 1.0, %v931
        %v933 = vrcp.pop %v878
        %v934 = vmul.f32 1.0, %v933
        %v935 = vrcp.pop %v879
        %v936 = vmul.f32 1.0, %v935
        %v937 = vrcp.pop %v880
        %v938 = vmul.f32 1.0, %v937
        %v939 = vrcp.pop %v881
        %v940 = vmul.f32 1.0, %v939
        %v941 = vrcp.pop %v882
        %v942 = vmul.f32 1.0, %v941
        %v943 = vrcp.pop %v883
        %v944 = vmul.f32 1.0, %v943
        %v945 = vrcp.pop %v884
        %v946 = vmul.f32 1.0, %v945
        %v947 = vrcp.pop %v885
        %v948 = vmul.f32 1.0, %v947
        %v949 = vrcp.pop %v886
        %v950 = vmul.f32 1.0, %v949
        %v951 = vmul.f32 %v633, %v888
        %v952 = vmul.f32 %v636, %v890
        %v953 = vmul.f32 %v641, %v892
        %v954 = vmul.f32 %v644, %v894
        %v955 = vmul.f32 %v649, %v896
        %v956 = vmul.f32 %v652, %v898
        %v957 = vmul.f32 %v657, %v900
        %v958 = vmul.f32 %v660, %v902
        %v959 = vmul.f32 %v665, %v904
        %v960 = vmul.f32 %v668, %v906
        %v961 = vmul.f32 %v673, %v908
        %v962 = vmul.f32 %v676, %v910
        %v963 = vmul.f32 %v681, %v912
        %v964 = vmul.f32 %v684, %v914
        %v965 = vmul.f32 %v689, %v916
        %v966 = vmul.f32 %v692, %v918
        %v967 = vmul.f32 %v697, %v920
        %v968 = vmul.f32 %v700, %v922
        %v969 = vmul.f32 %v705, %v924
        %v970 = vmul.f32 %v708, %v926
        %v971 = vmul.f32 %v713, %v928
        %v972 = vmul.f32 %v716, %v930
        %v973 = vmul.f32 %v721, %v932
        %v974 = vmul.f32 %v724, %v934
        %v975 = vmul.f32 %v729, %v936
        %v976 = vmul.f32 %v732, %v938
        %v977 = vmul.f32 %v737, %v940
        %v978 = vmul.f32 %v740, %v942
        %v979 = vmul.f32 %v745, %v944
        %v980 = vmul.f32 %v748, %v946
        %v981 = vmul.f32 %v753, %v948
        %v982 = vmul.f32 %v756, %v950
        %983 = vst [vmem:[#allocation2] sm:$0xff] 0.0
        %984 = vst [vmem:[#allocation2 + $0x8] sm:$0xff] 0.0
        %985 = vst [vmem:[#allocation2 + $0x10] sm:$0x3] 0.0
        %s986 = scalar_lea.vmem [#allocation2], 408
        %987 = vst [vmem:[%s986] sm:$0xff] 0.0
        %988 = vst [vmem:[%s986 + $0x8] sm:$0xff] 0.0
        %989 = vst [vmem:[%s986 + $0x10] sm:$0x3] 0.0
        %990 = vst [vmem:[#allocation2] sm:$0x1] 0.0
        %991 = vst [vmem:[#allocation2 + $0x18] sm:$0x1] 0.0
        %992 = vst [vmem:[#allocation2 + $0x30] sm:$0x1] 0.0
        %993 = vst [vmem:[#allocation2 + $0x48] sm:$0x1] 0.0
        %994 = vst [vmem:[#allocation2 + $0x60] sm:$0x1] 0.0
        %995 = vst [vmem:[#allocation2 + $0x78] sm:$0x1] 0.0
        %996 = vst [vmem:[#allocation2 + $0x90] sm:$0x1] 0.0
        %997 = vst [vmem:[#allocation2 + $0xa8] sm:$0x1] 0.0
        %998 = vst [vmem:[#allocation2 + $0xc0] sm:$0x1] 0.0
        %999 = vst [vmem:[#allocation2 + $0xd8] sm:$0x1] 0.0
        %1000 = vst [vmem:[#allocation2 + $0xf0] sm:$0x1] 0.0
        %1001 = vst [vmem:[#allocation2 + $0x108] sm:$0x1] 0.0
        %1002 = vst [vmem:[#allocation2 + $0x120] sm:$0x1] 0.0
        %1003 = vst [vmem:[#allocation2 + $0x138] sm:$0x1] 0.0
        %1004 = vst [vmem:[#allocation2 + $0x150] sm:$0x1] 0.0
        %1005 = vst [vmem:[#allocation2 + $0x168] sm:$0x1] 0.0
        %1006 = vst [vmem:[#allocation2 + $0x180] sm:$0x1] 0.0
        %1007 = vst [vmem:[#allocation2 + $0x198] sm:$0x1] 0.0
        %1008 = vst [vmem:[#allocation2 + $0x11] sm:$0x1] 0.0
        %1009 = vst [vmem:[#allocation2 + $0x29] sm:$0x1] 0.0
        %1010 = vst [vmem:[#allocation2 + $0x41] sm:$0x1] 0.0
        %1011 = vst [vmem:[#allocation2 + $0x59] sm:$0x1] 0.0
        %1012 = vst [vmem:[#allocation2 + $0x71] sm:$0x1] 0.0
        %1013 = vst [vmem:[#allocation2 + $0x89] sm:$0x1] 0.0
        %1014 = vst [vmem:[#allocation2 + $0xa1] sm:$0x1] 0.0
        %1015 = vst [vmem:[#allocation2 + $0xb9] sm:$0x1] 0.0
        %1016 = vst [vmem:[#allocation2 + $0xd1] sm:$0x1] 0.0
        %1017 = vst [vmem:[#allocation2 + $0xe9] sm:$0x1] 0.0
        %1018 = vst [vmem:[#allocation2 + $0x101] sm:$0x1] 0.0
        %1019 = vst [vmem:[#allocation2 + $0x119] sm:$0x1] 0.0
        %1020 = vst [vmem:[#allocation2 + $0x131] sm:$0x1] 0.0
        %1021 = vst [vmem:[#allocation2 + $0x149] sm:$0x1] 0.0
        %1022 = vst [vmem:[#allocation2 + $0x161] sm:$0x1] 0.0
        %1023 = vst [vmem:[#allocation2 + $0x179] sm:$0x1] 0.0
        %1024 = vst [vmem:[#allocation2 + $0x191] sm:$0x1] 0.0
        %1025 = vst [vmem:[#allocation2 + $0x1a9] sm:$0x1] 0.0
        %s1026 = scalar_lea.vmem [#allocation2], 24
        %1027 = vst [vmem:[%s1026 + $0x1] sm:$0xff] %v951
        %1028 = vst [vmem:[%s1026 + $0x9] sm:$0xff] %v952
        %1029 = vst [vmem:[%s1026 + $0x19] sm:$0xff] %v953
        %1030 = vst [vmem:[%s1026 + $0x21] sm:$0xff] %v954
        %1031 = vst [vmem:[%s1026 + $0x31] sm:$0xff] %v955
        %1032 = vst [vmem:[%s1026 + $0x39] sm:$0xff] %v956
        %1033 = vst [vmem:[%s1026 + $0x49] sm:$0xff] %v957
        %1034 = vst [vmem:[%s1026 + $0x51] sm:$0xff] %v958
        %1035 = vst [vmem:[%s1026 + $0x61] sm:$0xff] %v959
        %1036 = vst [vmem:[%s1026 + $0x69] sm:$0xff] %v960
        %1037 = vst [vmem:[%s1026 + $0x79] sm:$0xff] %v961
        %1038 = vst [vmem:[%s1026 + $0x81] sm:$0xff] %v962
        %1039 = vst [vmem:[%s1026 + $0x91] sm:$0xff] %v963
        %1040 = vst [vmem:[%s1026 + $0x99] sm:$0xff] %v964
        %1041 = vst [vmem:[%s1026 + $0xa9] sm:$0xff] %v965
        %1042 = vst [vmem:[%s1026 + $0xb1] sm:$0xff] %v966
        %1043 = vst [vmem:[%s1026 + $0xc1] sm:$0xff] %v967
        %1044 = vst [vmem:[%s1026 + $0xc9] sm:$0xff] %v968
        %1045 = vst [vmem:[%s1026 + $0xd9] sm:$0xff] %v969
        %1046 = vst [vmem:[%s1026 + $0xe1] sm:$0xff] %v970
        %1047 = vst [vmem:[%s1026 + $0xf1] sm:$0xff] %v971
        %1048 = vst [vmem:[%s1026 + $0xf9] sm:$0xff] %v972
        %1049 = vst [vmem:[%s1026 + $0x109] sm:$0xff] %v973
        %1050 = vst [vmem:[%s1026 + $0x111] sm:$0xff] %v974
        %1051 = vst [vmem:[%s1026 + $0x121] sm:$0xff] %v975
        %1052 = vst [vmem:[%s1026 + $0x129] sm:$0xff] %v976
        %1053 = vst [vmem:[%s1026 + $0x139] sm:$0xff] %v977
        %1054 = vst [vmem:[%s1026 + $0x141] sm:$0xff] %v978
        %1055 = vst [vmem:[%s1026 + $0x151] sm:$0xff] %v979
        %1056 = vst [vmem:[%s1026 + $0x159] sm:$0xff] %v980
        %1057 = vst [vmem:[%s1026 + $0x169] sm:$0xff] %v981
        %1058 = vst [vmem:[%s1026 + $0x171] sm:$0xff] %v982
        %v1059 = vld [vmem:[#allocation2] sm:$0xff]
        %v1060 = vld [vmem:[#allocation2 + $0x8] sm:$0xff]
        %v1061 = vld [vmem:[#allocation2 + $0x10] sm:$0x3]
        %v1062 = vld [vmem:[#allocation2 + $0x18] sm:$0xff]
        %v1063 = vld [vmem:[#allocation2 + $0x20] sm:$0xff]
        %v1064 = vld [vmem:[#allocation2 + $0x28] sm:$0x3]
        %v1065 = vld [vmem:[#allocation2 + $0x30] sm:$0xff]
        %v1066 = vld [vmem:[#allocation2 + $0x38] sm:$0xff]
        %v1067 = vld [vmem:[#allocation2 + $0x40] sm:$0x3]
        %v1068 = vld [vmem:[#allocation2 + $0x48] sm:$0xff]
        %v1069 = vld [vmem:[#allocation2 + $0x50] sm:$0xff]
        %v1070 = vld [vmem:[#allocation2 + $0x58] sm:$0x3]
        %v1071 = vld [vmem:[#allocation2 + $0x60] sm:$0xff]
        %v1072 = vld [vmem:[#allocation2 + $0x68] sm:$0xff]
        %v1073 = vld [vmem:[#allocation2 + $0x70] sm:$0x3]
        %v1074 = vld [vmem:[#allocation2 + $0x78] sm:$0xff]
        %v1075 = vld [vmem:[#allocation2 + $0x80] sm:$0xff]
        %v1076 = vld [vmem:[#allocation2 + $0x88] sm:$0x3]
        %v1077 = vld [vmem:[#allocation2 + $0x90] sm:$0xff]
        %v1078 = vld [vmem:[#allocation2 + $0x98] sm:$0xff]
        %v1079 = vld [vmem:[#allocation2 + $0xa0] sm:$0x3]
        %v1080 = vld [vmem:[#allocation2 + $0xa8] sm:$0xff]
        %v1081 = vld [vmem:[#allocation2 + $0xb0] sm:$0xff]
        %v1082 = vld [vmem:[#allocation2 + $0xb8] sm:$0x3]
        %v1083 = vld [vmem:[#allocation2 + $0xc0] sm:$0xff]
        %v1084 = vld [vmem:[#allocation2 + $0xc8] sm:$0xff]
        %v1085 = vld [vmem:[#allocation2 + $0xd0] sm:$0x3]
        %v1086 = vld [vmem:[#allocation2 + $0xd8] sm:$0xff]
        %v1087 = vld [vmem:[#allocation2 + $0xe0] sm:$0xff]
        %v1088 = vld [vmem:[#allocation2 + $0xe8] sm:$0x3]
        %v1089 = vld [vmem:[#allocation2 + $0xf0] sm:$0xff]
        %v1090 = vld [vmem:[#allocation2 + $0xf8] sm:$0xff]
        %v1091 = vld [vmem:[#allocation2 + $0x100] sm:$0x3]
        %v1092 = vld [vmem:[#allocation2 + $0x108] sm:$0xff]
        %v1093 = vld [vmem:[#allocation2 + $0x110] sm:$0xff]
        %v1094 = vld [vmem:[#allocation2 + $0x118] sm:$0x3]
        %v1095 = vld [vmem:[#allocation2 + $0x120] sm:$0xff]
        %v1096 = vld [vmem:[#allocation2 + $0x128] sm:$0xff]
        %v1097 = vld [vmem:[#allocation2 + $0x130] sm:$0x3]
        %v1098 = vld [vmem:[#allocation2 + $0x138] sm:$0xff]
        %v1099 = vld [vmem:[#allocation2 + $0x140] sm:$0xff]
        %v1100 = vld [vmem:[#allocation2 + $0x148] sm:$0x3]
        %v1101 = vld [vmem:[#allocation2 + $0x150] sm:$0xff]
        %v1102 = vld [vmem:[#allocation2 + $0x158] sm:$0xff]
        %v1103 = vld [vmem:[#allocation2 + $0x160] sm:$0x3]
        %v1104 = vld [vmem:[#allocation2 + $0x168] sm:$0xff]
        %v1105 = vld [vmem:[#allocation2 + $0x170] sm:$0xff]
        %v1106 = vld [vmem:[#allocation2 + $0x178] sm:$0x3]
        %v1107 = vld [vmem:[#allocation2 + $0x180] sm:$0xff]
        %v1108 = vld [vmem:[#allocation2 + $0x188] sm:$0xff]
        %v1109 = vld [vmem:[#allocation2 + $0x190] sm:$0x3]
        %v1110 = vld [vmem:[#allocation2 + $0x198] sm:$0xff]
        %v1111 = vld [vmem:[#allocation2 + $0x1a0] sm:$0xff]
        %v1112 = vld [vmem:[#allocation2 + $0x1a8] sm:$0x3]
        %v1113 = vld [vmem:[#allocation8] sm:$0xff]
        %v1114 = vld [vmem:[#allocation8 + $0x8] sm:$0x1]
        %v1115 = vld [vmem:[%s4] sm:$0x1]
        %v1116 = vlaneseq
        %v1117 = vshrl.u32 %v1116, 7
        %v1118 = vsub.s32 0, %v1117
        %v1119 = vrot.slane %v1113, %v1118
        %v1120 = vmul.f32 %v1059, %v1119
        %v1121 = vmul.f32 %v1060, %v1119
        %v1122 = vmul.f32 %v1062, %v1119
        %v1123 = vmul.f32 %v1063, %v1119
        %v1124 = vmul.f32 %v1065, %v1119
        %v1125 = vmul.f32 %v1066, %v1119
        %v1126 = vmul.f32 %v1068, %v1119
        %v1127 = vmul.f32 %v1069, %v1119
        %v1128 = vmul.f32 %v1071, %v1119
        %v1129 = vmul.f32 %v1072, %v1119
        %v1130 = vmul.f32 %v1074, %v1119
        %v1131 = vmul.f32 %v1075, %v1119
        %v1132 = vmul.f32 %v1077, %v1119
        %v1133 = vmul.f32 %v1078, %v1119
        %v1134 = vmul.f32 %v1080, %v1119
        %v1135 = vmul.f32 %v1081, %v1119
        %v1136 = vmul.f32 %v1083, %v1119
        %v1137 = vmul.f32 %v1084, %v1119
        %v1138 = vmul.f32 %v1086, %v1119
        %v1139 = vmul.f32 %v1087, %v1119
        %v1140 = vmul.f32 %v1089, %v1119
        %v1141 = vmul.f32 %v1090, %v1119
        %v1142 = vmul.f32 %v1092, %v1119
        %v1143 = vmul.f32 %v1093, %v1119
        %v1144 = vmul.f32 %v1095, %v1119
        %v1145 = vmul.f32 %v1096, %v1119
        %v1146 = vmul.f32 %v1098, %v1119
        %v1147 = vmul.f32 %v1099, %v1119
        %v1148 = vmul.f32 %v1101, %v1119
        %v1149 = vmul.f32 %v1102, %v1119
        %v1150 = vmul.f32 %v1104, %v1119
        %v1151 = vmul.f32 %v1105, %v1119
        %v1152 = vlaneseq
        %v1153 = vshrl.u32 %v1152, 7
        %v1154 = vsub.s32 3, %v1153
        %v1155 = vrot.slane %v1113, %v1154
        %v1156 = vmul.f32 %v1062, %v1155
        %v1157 = vmul.f32 %v1063, %v1155
        %v1158 = vmul.f32 %v1065, %v1155
        %v1159 = vmul.f32 %v1066, %v1155
        %v1160 = vmul.f32 %v1068, %v1155
        %v1161 = vmul.f32 %v1069, %v1155
        %v1162 = vmul.f32 %v1071, %v1155
        %v1163 = vmul.f32 %v1072, %v1155
        %v1164 = vmul.f32 %v1074, %v1155
        %v1165 = vmul.f32 %v1075, %v1155
        %v1166 = vmul.f32 %v1077, %v1155
        %v1167 = vmul.f32 %v1078, %v1155
        %v1168 = vmul.f32 %v1080, %v1155
        %v1169 = vmul.f32 %v1081, %v1155
        %v1170 = vmul.f32 %v1083, %v1155
        %v1171 = vmul.f32 %v1084, %v1155
        %v1172 = vmul.f32 %v1086, %v1155
        %v1173 = vmul.f32 %v1087, %v1155
        %v1174 = vmul.f32 %v1089, %v1155
        %v1175 = vmul.f32 %v1090, %v1155
        %v1176 = vmul.f32 %v1092, %v1155
        %v1177 = vmul.f32 %v1093, %v1155
        %v1178 = vmul.f32 %v1095, %v1155
        %v1179 = vmul.f32 %v1096, %v1155
        %v1180 = vmul.f32 %v1098, %v1155
        %v1181 = vmul.f32 %v1099, %v1155
        %v1182 = vmul.f32 %v1101, %v1155
        %v1183 = vmul.f32 %v1102, %v1155
        %v1184 = vmul.f32 %v1104, %v1155
        %v1185 = vmul.f32 %v1105, %v1155
        %v1186 = vmul.f32 %v1107, %v1155
        %v1187 = vmul.f32 %v1108, %v1155
        %v1188 = vadd.f32 %v1120, %v1156
        %v1189 = vadd.f32 %v1121, %v1157
        %v1190 = vadd.f32 %v1122, %v1158
        %v1191 = vadd.f32 %v1123, %v1159
        %v1192 = vadd.f32 %v1124, %v1160
        %v1193 = vadd.f32 %v1125, %v1161
        %v1194 = vadd.f32 %v1126, %v1162
        %v1195 = vadd.f32 %v1127, %v1163
        %v1196 = vadd.f32 %v1128, %v1164
        %v1197 = vadd.f32 %v1129, %v1165
        %v1198 = vadd.f32 %v1130, %v1166
        %v1199 = vadd.f32 %v1131, %v1167
        %v1200 = vadd.f32 %v1132, %v1168
        %v1201 = vadd.f32 %v1133, %v1169
        %v1202 = vadd.f32 %v1134, %v1170
        %v1203 = vadd.f32 %v1135, %v1171
        %v1204 = vadd.f32 %v1136, %v1172
        %v1205 = vadd.f32 %v1137, %v1173
        %v1206 = vadd.f32 %v1138, %v1174
        %v1207 = vadd.f32 %v1139, %v1175
        %v1208 = vadd.f32 %v1140, %v1176
        %v1209 = vadd.f32 %v1141, %v1177
        %v1210 = vadd.f32 %v1142, %v1178
        %v1211 = vadd.f32 %v1143, %v1179
        %v1212 = vadd.f32 %v1144, %v1180
        %v1213 = vadd.f32 %v1145, %v1181
        %v1214 = vadd.f32 %v1146, %v1182
        %v1215 = vadd.f32 %v1147, %v1183
        %v1216 = vadd.f32 %v1148, %v1184
        %v1217 = vadd.f32 %v1149, %v1185
        %v1218 = vadd.f32 %v1150, %v1186
        %v1219 = vadd.f32 %v1151, %v1187
        %v1220 = vlaneseq
        %v1221 = vshrl.u32 %v1220, 7
        %v1222 = vsub.s32 6, %v1221
        %v1223 = vrot.slane %v1113, %v1222
        %v1224 = vmul.f32 %v1065, %v1223
        %v1225 = vmul.f32 %v1066, %v1223
        %v1226 = vmul.f32 %v1068, %v1223
        %v1227 = vmul.f32 %v1069, %v1223
        %v1228 = vmul.f32 %v1071, %v1223
        %v1229 = vmul.f32 %v1072, %v1223
        %v1230 = vmul.f32 %v1074, %v1223
        %v1231 = vmul.f32 %v1075, %v1223
        %v1232 = vmul.f32 %v1077, %v1223
        %v1233 = vmul.f32 %v1078, %v1223
        %v1234 = vmul.f32 %v1080, %v1223
        %v1235 = vmul.f32 %v1081, %v1223
        %v1236 = vmul.f32 %v1083, %v1223
        %v1237 = vmul.f32 %v1084, %v1223
        %v1238 = vmul.f32 %v1086, %v1223
        %v1239 = vmul.f32 %v1087, %v1223
        %v1240 = vmul.f32 %v1089, %v1223
        %v1241 = vmul.f32 %v1090, %v1223
        %v1242 = vmul.f32 %v1092, %v1223
        %v1243 = vmul.f32 %v1093, %v1223
        %v1244 = vmul.f32 %v1095, %v1223
        %v1245 = vmul.f32 %v1096, %v1223
        %v1246 = vmul.f32 %v1098, %v1223
        %v1247 = vmul.f32 %v1099, %v1223
        %v1248 = vmul.f32 %v1101, %v1223
        %v1249 = vmul.f32 %v1102, %v1223
        %v1250 = vmul.f32 %v1104, %v1223
        %v1251 = vmul.f32 %v1105, %v1223
        %v1252 = vmul.f32 %v1107, %v1223
        %v1253 = vmul.f32 %v1108, %v1223
        %v1254 = vmul.f32 %v1110, %v1223
        %v1255 = vmul.f32 %v1111, %v1223
        %v1256 = vadd.f32 %v1188, %v1224
        %v1257 = vadd.f32 %v1189, %v1225
        %v1258 = vadd.f32 %v1190, %v1226
        %v1259 = vadd.f32 %v1191, %v1227
        %v1260 = vadd.f32 %v1192, %v1228
        %v1261 = vadd.f32 %v1193, %v1229
        %v1262 = vadd.f32 %v1194, %v1230
        %v1263 = vadd.f32 %v1195, %v1231
        %v1264 = vadd.f32 %v1196, %v1232
        %v1265 = vadd.f32 %v1197, %v1233
        %v1266 = vadd.f32 %v1198, %v1234
        %v1267 = vadd.f32 %v1199, %v1235
        %v1268 = vadd.f32 %v1200, %v1236
        %v1269 = vadd.f32 %v1201, %v1237
        %v1270 = vadd.f32 %v1202, %v1238
        %v1271 = vadd.f32 %v1203, %v1239
        %v1272 = vadd.f32 %v1204, %v1240
        %v1273 = vadd.f32 %v1205, %v1241
        %v1274 = vadd.f32 %v1206, %v1242
        %v1275 = vadd.f32 %v1207, %v1243
        %v1276 = vadd.f32 %v1208, %v1244
        %v1277 = vadd.f32 %v1209, %v1245
        %v1278 = vadd.f32 %v1210, %v1246
        %v1279 = vadd.f32 %v1211, %v1247
        %v1280 = vadd.f32 %v1212, %v1248
        %v1281 = vadd.f32 %v1213, %v1249
        %v1282 = vadd.f32 %v1214, %v1250
        %v1283 = vadd.f32 %v1215, %v1251
        %v1284 = vadd.f32 %v1216, %v1252
        %v1285 = vadd.f32 %v1217, %v1253
        %v1286 = vadd.f32 %v1218, %v1254
        %v1287 = vadd.f32 %v1219, %v1255
        %v1288 = vlaneseq
        %v1289 = vshrl.u32 %v1288, 7
        %v1290 = vsub.s32 1, %v1289
        %v1291 = vrot.slane %v1113, %v1290
        %v1292 = vmul.f32 %v1059, %v1291
        %v1293 = vmul.f32 %v1060, %v1291
        %v1294 = vmul.f32 %v1061, %v1291
        %v1295 = vmul.f32 %v1062, %v1291
        %v1296 = vmul.f32 %v1063, %v1291
        %v1297 = vmul.f32 %v1064, %v1291
        %v1298 = vmul.f32 %v1065, %v1291
        %v1299 = vmul.f32 %v1066, %v1291
        %v1300 = vmul.f32 %v1067, %v1291
        %v1301 = vmul.f32 %v1068, %v1291
        %v1302 = vmul.f32 %v1069, %v1291
        %v1303 = vmul.f32 %v1070, %v1291
        %v1304 = vmul.f32 %v1071, %v1291
        %v1305 = vmul.f32 %v1072, %v1291
        %v1306 = vmul.f32 %v1073, %v1291
        %v1307 = vmul.f32 %v1074, %v1291
        %v1308 = vmul.f32 %v1075, %v1291
        %v1309 = vmul.f32 %v1076, %v1291
        %v1310 = vmul.f32 %v1077, %v1291
        %v1311 = vmul.f32 %v1078, %v1291
        %v1312 = vmul.f32 %v1079, %v1291
        %v1313 = vmul.f32 %v1080, %v1291
        %v1314 = vmul.f32 %v1081, %v1291
        %v1315 = vmul.f32 %v1082, %v1291
        %v1316 = vmul.f32 %v1083, %v1291
        %v1317 = vmul.f32 %v1084, %v1291
        %v1318 = vmul.f32 %v1085, %v1291
        %v1319 = vmul.f32 %v1086, %v1291
        %v1320 = vmul.f32 %v1087, %v1291
        %v1321 = vmul.f32 %v1088, %v1291
        %v1322 = vmul.f32 %v1089, %v1291
        %v1323 = vmul.f32 %v1090, %v1291
        %v1324 = vmul.f32 %v1091, %v1291
        %v1325 = vmul.f32 %v1092, %v1291
        %v1326 = vmul.f32 %v1093, %v1291
        %v1327 = vmul.f32 %v1094, %v1291
        %v1328 = vmul.f32 %v1095, %v1291
        %v1329 = vmul.f32 %v1096, %v1291
        %v1330 = vmul.f32 %v1097, %v1291
        %v1331 = vmul.f32 %v1098, %v1291
        %v1332 = vmul.f32 %v1099, %v1291
        %v1333 = vmul.f32 %v1100, %v1291
        %v1334 = vmul.f32 %v1101, %v1291
        %v1335 = vmul.f32 %v1102, %v1291
        %v1336 = vmul.f32 %v1103, %v1291
        %v1337 = vmul.f32 %v1104, %v1291
        %v1338 = vmul.f32 %v1105, %v1291
        %v1339 = vmul.f32 %v1106, %v1291
        %vm1388 = vcmask 1046528
        %v1389 = vrot.slane %v1292, 1
        %v1390 = vrot.slane %v1293, 1
        %v1391 = vsel %vm1388, %v1389, %v1390
        %v1392 = vrot.slane %v1294, 1
        %v1393 = vsel %vm1388, %v1390, %v1392
        %v1394 = vrot.slane %v1295, 1
        %v1395 = vrot.slane %v1296, 1
        %v1396 = vsel %vm1388, %v1394, %v1395
        %v1397 = vrot.slane %v1297, 1
        %v1398 = vsel %vm1388, %v1395, %v1397
        %v1399 = vrot.slane %v1298, 1
        %v1400 = vrot.slane %v1299, 1
        %v1401 = vsel %vm1388, %v1399, %v1400
        %v1402 = vrot.slane %v1300, 1
        %v1403 = vsel %vm1388, %v1400, %v1402
        %v1404 = vrot.slane %v1301, 1
        %v1405 = vrot.slane %v1302, 1
        %v1406 = vsel %vm1388, %v1404, %v1405
        %v1407 = vrot.slane %v1303, 1
        %v1408 = vsel %vm1388, %v1405, %v1407
        %v1409 = vrot.slane %v1304, 1
        %v1410 = vrot.slane %v1305, 1
        %v1411 = vsel %vm1388, %v1409, %v1410
        %v1412 = vrot.slane %v1306, 1
        %v1413 = vsel %vm1388, %v1410, %v1412
        %v1414 = vrot.slane %v1307, 1
        %v1415 = vrot.slane %v1308, 1
        %v1416 = vsel %vm1388, %v1414, %v1415
        %v1417 = vrot.slane %v1309, 1
        %v1418 = vsel %vm1388, %v1415, %v1417
        %v1419 = vrot.slane %v1310, 1
        %v1420 = vrot.slane %v1311, 1
        %v1421 = vsel %vm1388, %v1419, %v1420
        %v1422 = vrot.slane %v1312, 1
        %v1423 = vsel %vm1388, %v1420, %v1422
        %v1424 = vrot.slane %v1313, 1
        %v1425 = vrot.slane %v1314, 1
        %v1426 = vsel %vm1388, %v1424, %v1425
        %v1427 = vrot.slane %v1315, 1
        %v1428 = vsel %vm1388, %v1425, %v1427
        %v1429 = vrot.slane %v1316, 1
        %v1430 = vrot.slane %v1317, 1
        %v1431 = vsel %vm1388, %v1429, %v1430
        %v1432 = vrot.slane %v1318, 1
        %v1433 = vsel %vm1388, %v1430, %v1432
        %v1434 = vrot.slane %v1319, 1
        %v1435 = vrot.slane %v1320, 1
        %v1436 = vsel %vm1388, %v1434, %v1435
        %v1437 = vrot.slane %v1321, 1
        %v1438 = vsel %vm1388, %v1435, %v1437
        %v1439 = vrot.slane %v1322, 1
        %v1440 = vrot.slane %v1323, 1
        %v1441 = vsel %vm1388, %v1439, %v1440
        %v1442 = vrot.slane %v1324, 1
        %v1443 = vsel %vm1388, %v1440, %v1442
        %v1444 = vrot.slane %v1325, 1
        %v1445 = vrot.slane %v1326, 1
        %v1446 = vsel %vm1388, %v1444, %v1445
        %v1447 = vrot.slane %v1327, 1
        %v1448 = vsel %vm1388, %v1445, %v1447
        %v1449 = vrot.slane %v1328, 1
        %v1450 = vrot.slane %v1329, 1
        %v1451 = vsel %vm1388, %v1449, %v1450
        %v1452 = vrot.slane %v1330, 1
        %v1453 = vsel %vm1388, %v1450, %v1452
        %v1454 = vrot.slane %v1331, 1
        %v1455 = vrot.slane %v1332, 1
        %v1456 = vsel %vm1388, %v1454, %v1455
        %v1457 = vrot.slane %v1333, 1
        %v1458 = vsel %vm1388, %v1455, %v1457
        %v1459 = vrot.slane %v1334, 1
        %v1460 = vrot.slane %v1335, 1
        %v1461 = vsel %vm1388, %v1459, %v1460
        %v1462 = vrot.slane %v1336, 1
        %v1463 = vsel %vm1388, %v1460, %v1462
        %v1464 = vrot.slane %v1337, 1
        %v1465 = vrot.slane %v1338, 1
        %v1466 = vsel %vm1388, %v1464, %v1465
        %v1467 = vrot.slane %v1339, 1
        %v1468 = vsel %vm1388, %v1465, %v1467
        %v1501 = vadd.f32 %v1256, %v1391
        %v1502 = vadd.f32 %v1257, %v1393
        %v1503 = vadd.f32 %v1258, %v1396
        %v1504 = vadd.f32 %v1259, %v1398
        %v1505 = vadd.f32 %v1260, %v1401
        %v1506 = vadd.f32 %v1261, %v1403
        %v1507 = vadd.f32 %v1262, %v1406
        %v1508 = vadd.f32 %v1263, %v1408
        %v1509 = vadd.f32 %v1264, %v1411
        %v1510 = vadd.f32 %v1265, %v1413
        %v1511 = vadd.f32 %v1266, %v1416
        %v1512 = vadd.f32 %v1267, %v1418
        %v1513 = vadd.f32 %v1268, %v1421
        %v1514 = vadd.f32 %v1269, %v1423
        %v1515 = vadd.f32 %v1270, %v1426
        %v1516 = vadd.f32 %v1271, %v1428
        %v1517 = vadd.f32 %v1272, %v1431
        %v1518 = vadd.f32 %v1273, %v1433
        %v1519 = vadd.f32 %v1274, %v1436
        %v1520 = vadd.f32 %v1275, %v1438
        %v1521 = vadd.f32 %v1276, %v1441
        %v1522 = vadd.f32 %v1277, %v1443
        %v1523 = vadd.f32 %v1278, %v1446
        %v1524 = vadd.f32 %v1279, %v1448
        %v1525 = vadd.f32 %v1280, %v1451
        %v1526 = vadd.f32 %v1281, %v1453
        %v1527 = vadd.f32 %v1282, %v1456
        %v1528 = vadd.f32 %v1283, %v1458
        %v1529 = vadd.f32 %v1284, %v1461
        %v1530 = vadd.f32 %v1285, %v1463
        %v1531 = vadd.f32 %v1286, %v1466
        %v1532 = vadd.f32 %v1287, %v1468
        %v1533 = vlaneseq
        %v1534 = vshrl.u32 %v1533, 7
        %v1535 = vsub.s32 4, %v1534
        %v1536 = vrot.slane %v1113, %v1535
        %v1537 = vmul.f32 %v1062, %v1536
        %v1538 = vmul.f32 %v1063, %v1536
        %v1539 = vmul.f32 %v1064, %v1536
        %v1540 = vmul.f32 %v1065, %v1536
        %v1541 = vmul.f32 %v1066, %v1536
        %v1542 = vmul.f32 %v1067, %v1536
        %v1543 = vmul.f32 %v1068, %v1536
        %v1544 = vmul.f32 %v1069, %v1536
        %v1545 = vmul.f32 %v1070, %v1536
        %v1546 = vmul.f32 %v1071, %v1536
        %v1547 = vmul.f32 %v1072, %v1536
        %v1548 = vmul.f32 %v1073, %v1536
        %v1549 = vmul.f32 %v1074, %v1536
        %v1550 = vmul.f32 %v1075, %v1536
        %v1551 = vmul.f32 %v1076, %v1536
        %v1552 = vmul.f32 %v1077, %v1536
        %v1553 = vmul.f32 %v1078, %v1536
        %v1554 = vmul.f32 %v1079, %v1536
        %v1555 = vmul.f32 %v1080, %v1536
        %v1556 = vmul.f32 %v1081, %v1536
        %v1557 = vmul.f32 %v1082, %v1536
        %v1558 = vmul.f32 %v1083, %v1536
        %v1559 = vmul.f32 %v1084, %v1536
        %v1560 = vmul.f32 %v1085, %v1536
        %v1561 = vmul.f32 %v1086, %v1536
        %v1562 = vmul.f32 %v1087, %v1536
        %v1563 = vmul.f32 %v1088, %v1536
        %v1564 = vmul.f32 %v1089, %v1536
        %v1565 = vmul.f32 %v1090, %v1536
        %v1566 = vmul.f32 %v1091, %v1536
        %v1567 = vmul.f32 %v1092, %v1536
        %v1568 = vmul.f32 %v1093, %v1536
        %v1569 = vmul.f32 %v1094, %v1536
        %v1570 = vmul.f32 %v1095, %v1536
        %v1571 = vmul.f32 %v1096, %v1536
        %v1572 = vmul.f32 %v1097, %v1536
        %v1573 = vmul.f32 %v1098, %v1536
        %v1574 = vmul.f32 %v1099, %v1536
        %v1575 = vmul.f32 %v1100, %v1536
        %v1576 = vmul.f32 %v1101, %v1536
        %v1577 = vmul.f32 %v1102, %v1536
        %v1578 = vmul.f32 %v1103, %v1536
        %v1579 = vmul.f32 %v1104, %v1536
        %v1580 = vmul.f32 %v1105, %v1536
        %v1581 = vmul.f32 %v1106, %v1536
        %v1582 = vmul.f32 %v1107, %v1536
        %v1583 = vmul.f32 %v1108, %v1536
        %v1584 = vmul.f32 %v1109, %v1536
        %v1633 = vrot.slane %v1537, 1
        %v1634 = vrot.slane %v1538, 1
        %v1635 = vsel %vm1388, %v1633, %v1634
        %v1636 = vrot.slane %v1539, 1
        %v1637 = vsel %vm1388, %v1634, %v1636
        %v1638 = vrot.slane %v1540, 1
        %v1639 = vrot.slane %v1541, 1
        %v1640 = vsel %vm1388, %v1638, %v1639
        %v1641 = vrot.slane %v1542, 1
        %v1642 = vsel %vm1388, %v1639, %v1641
        %v1643 = vrot.slane %v1543, 1
        %v1644 = vrot.slane %v1544, 1
        %v1645 = vsel %vm1388, %v1643, %v1644
        %v1646 = vrot.slane %v1545, 1
        %v1647 = vsel %vm1388, %v1644, %v1646
        %v1648 = vrot.slane %v1546, 1
        %v1649 = vrot.slane %v1547, 1
        %v1650 = vsel %vm1388, %v1648, %v1649
        %v1651 = vrot.slane %v1548, 1
        %v1652 = vsel %vm1388, %v1649, %v1651
        %v1653 = vrot.slane %v1549, 1
        %v1654 = vrot.slane %v1550, 1
        %v1655 = vsel %vm1388, %v1653, %v1654
        %v1656 = vrot.slane %v1551, 1
        %v1657 = vsel %vm1388, %v1654, %v1656
        %v1658 = vrot.slane %v1552, 1
        %v1659 = vrot.slane %v1553, 1
        %v1660 = vsel %vm1388, %v1658, %v1659
        %v1661 = vrot.slane %v1554, 1
        %v1662 = vsel %vm1388, %v1659, %v1661
        %v1663 = vrot.slane %v1555, 1
        %v1664 = vrot.slane %v1556, 1
        %v1665 = vsel %vm1388, %v1663, %v1664
        %v1666 = vrot.slane %v1557, 1
        %v1667 = vsel %vm1388, %v1664, %v1666
        %v1668 = vrot.slane %v1558, 1
        %v1669 = vrot.slane %v1559, 1
        %v1670 = vsel %vm1388, %v1668, %v1669
        %v1671 = vrot.slane %v1560, 1
        %v1672 = vsel %vm1388, %v1669, %v1671
        %v1673 = vrot.slane %v1561, 1
        %v1674 = vrot.slane %v1562, 1
        %v1675 = vsel %vm1388, %v1673, %v1674
        %v1676 = vrot.slane %v1563, 1
        %v1677 = vsel %vm1388, %v1674, %v1676
        %v1678 = vrot.slane %v1564, 1
        %v1679 = vrot.slane %v1565, 1
        %v1680 = vsel %vm1388, %v1678, %v1679
        %v1681 = vrot.slane %v1566, 1
        %v1682 = vsel %vm1388, %v1679, %v1681
        %v1683 = vrot.slane %v1567, 1
        %v1684 = vrot.slane %v1568, 1
        %v1685 = vsel %vm1388, %v1683, %v1684
        %v1686 = vrot.slane %v1569, 1
        %v1687 = vsel %vm1388, %v1684, %v1686
        %v1688 = vrot.slane %v1570, 1
        %v1689 = vrot.slane %v1571, 1
        %v1690 = vsel %vm1388, %v1688, %v1689
        %v1691 = vrot.slane %v1572, 1
        %v1692 = vsel %vm1388, %v1689, %v1691
        %v1693 = vrot.slane %v1573, 1
        %v1694 = vrot.slane %v1574, 1
        %v1695 = vsel %vm1388, %v1693, %v1694
        %v1696 = vrot.slane %v1575, 1
        %v1697 = vsel %vm1388, %v1694, %v1696
        %v1698 = vrot.slane %v1576, 1
        %v1699 = vrot.slane %v1577, 1
        %v1700 = vsel %vm1388, %v1698, %v1699
        %v1701 = vrot.slane %v1578, 1
        %v1702 = vsel %vm1388, %v1699, %v1701
        %v1703 = vrot.slane %v1579, 1
        %v1704 = vrot.slane %v1580, 1
        %v1705 = vsel %vm1388, %v1703, %v1704
        %v1706 = vrot.slane %v1581, 1
        %v1707 = vsel %vm1388, %v1704, %v1706
        %v1708 = vrot.slane %v1582, 1
        %v1709 = vrot.slane %v1583, 1
        %v1710 = vsel %vm1388, %v1708, %v1709
        %v1711 = vrot.slane %v1584, 1
        %v1712 = vsel %vm1388, %v1709, %v1711
        %v1745 = vadd.f32 %v1501, %v1635
        %v1746 = vadd.f32 %v1502, %v1637
        %v1747 = vadd.f32 %v1503, %v1640
        %v1748 = vadd.f32 %v1504, %v1642
        %v1749 = vadd.f32 %v1505, %v1645
        %v1750 = vadd.f32 %v1506, %v1647
        %v1751 = vadd.f32 %v1507, %v1650
        %v1752 = vadd.f32 %v1508, %v1652
        %v1753 = vadd.f32 %v1509, %v1655
        %v1754 = vadd.f32 %v1510, %v1657
        %v1755 = vadd.f32 %v1511, %v1660
        %v1756 = vadd.f32 %v1512, %v1662
        %v1757 = vadd.f32 %v1513, %v1665
        %v1758 = vadd.f32 %v1514, %v1667
        %v1759 = vadd.f32 %v1515, %v1670
        %v1760 = vadd.f32 %v1516, %v1672
        %v1761 = vadd.f32 %v1517, %v1675
        %v1762 = vadd.f32 %v1518, %v1677
        %v1763 = vadd.f32 %v1519, %v1680
        %v1764 = vadd.f32 %v1520, %v1682
        %v1765 = vadd.f32 %v1521, %v1685
        %v1766 = vadd.f32 %v1522, %v1687
        %v1767 = vadd.f32 %v1523, %v1690
        %v1768 = vadd.f32 %v1524, %v1692
        %v1769 = vadd.f32 %v1525, %v1695
        %v1770 = vadd.f32 %v1526, %v1697
        %v1771 = vadd.f32 %v1527, %v1700
        %v1772 = vadd.f32 %v1528, %v1702
        %v1773 = vadd.f32 %v1529, %v1705
        %v1774 = vadd.f32 %v1530, %v1707
        %v1775 = vadd.f32 %v1531, %v1710
        %v1776 = vadd.f32 %v1532, %v1712
        %v1777 = vlaneseq
        %v1778 = vshrl.u32 %v1777, 7
        %v1779 = vsub.s32 7, %v1778
        %v1780 = vrot.slane %v1113, %v1779
        %v1781 = vmul.f32 %v1065, %v1780
        %v1782 = vmul.f32 %v1066, %v1780
        %v1783 = vmul.f32 %v1067, %v1780
        %v1784 = vmul.f32 %v1068, %v1780
        %v1785 = vmul.f32 %v1069, %v1780
        %v1786 = vmul.f32 %v1070, %v1780
        %v1787 = vmul.f32 %v1071, %v1780
        %v1788 = vmul.f32 %v1072, %v1780
        %v1789 = vmul.f32 %v1073, %v1780
        %v1790 = vmul.f32 %v1074, %v1780
        %v1791 = vmul.f32 %v1075, %v1780
        %v1792 = vmul.f32 %v1076, %v1780
        %v1793 = vmul.f32 %v1077, %v1780
        %v1794 = vmul.f32 %v1078, %v1780
        %v1795 = vmul.f32 %v1079, %v1780
        %v1796 = vmul.f32 %v1080, %v1780
        %v1797 = vmul.f32 %v1081, %v1780
        %v1798 = vmul.f32 %v1082, %v1780
        %v1799 = vmul.f32 %v1083, %v1780
        %v1800 = vmul.f32 %v1084, %v1780
        %v1801 = vmul.f32 %v1085, %v1780
        %v1802 = vmul.f32 %v1086, %v1780
        %v1803 = vmul.f32 %v1087, %v1780
        %v1804 = vmul.f32 %v1088, %v1780
        %v1805 = vmul.f32 %v1089, %v1780
        %v1806 = vmul.f32 %v1090, %v1780
        %v1807 = vmul.f32 %v1091, %v1780
        %v1808 = vmul.f32 %v1092, %v1780
        %v1809 = vmul.f32 %v1093, %v1780
        %v1810 = vmul.f32 %v1094, %v1780
        %v1811 = vmul.f32 %v1095, %v1780
        %v1812 = vmul.f32 %v1096, %v1780
        %v1813 = vmul.f32 %v1097, %v1780
        %v1814 = vmul.f32 %v1098, %v1780
        %v1815 = vmul.f32 %v1099, %v1780
        %v1816 = vmul.f32 %v1100, %v1780
        %v1817 = vmul.f32 %v1101, %v1780
        %v1818 = vmul.f32 %v1102, %v1780
        %v1819 = vmul.f32 %v1103, %v1780
        %v1820 = vmul.f32 %v1104, %v1780
        %v1821 = vmul.f32 %v1105, %v1780
        %v1822 = vmul.f32 %v1106, %v1780
        %v1823 = vmul.f32 %v1107, %v1780
        %v1824 = vmul.f32 %v1108, %v1780
        %v1825 = vmul.f32 %v1109, %v1780
        %v1826 = vmul.f32 %v1110, %v1780
        %v1827 = vmul.f32 %v1111, %v1780
        %v1828 = vmul.f32 %v1112, %v1780
        %v1877 = vrot.slane %v1781, 1
        %v1878 = vrot.slane %v1782, 1
        %v1879 = vsel %vm1388, %v1877, %v1878
        %v1880 = vrot.slane %v1783, 1
        %v1881 = vsel %vm1388, %v1878, %v1880
        %v1882 = vrot.slane %v1784, 1
        %v1883 = vrot.slane %v1785, 1
        %v1884 = vsel %vm1388, %v1882, %v1883
        %v1885 = vrot.slane %v1786, 1
        %v1886 = vsel %vm1388, %v1883, %v1885
        %v1887 = vrot.slane %v1787, 1
        %v1888 = vrot.slane %v1788, 1
        %v1889 = vsel %vm1388, %v1887, %v1888
        %v1890 = vrot.slane %v1789, 1
        %v1891 = vsel %vm1388, %v1888, %v1890
        %v1892 = vrot.slane %v1790, 1
        %v1893 = vrot.slane %v1791, 1
        %v1894 = vsel %vm1388, %v1892, %v1893
        %v1895 = vrot.slane %v1792, 1
        %v1896 = vsel %vm1388, %v1893, %v1895
        %v1897 = vrot.slane %v1793, 1
        %v1898 = vrot.slane %v1794, 1
        %v1899 = vsel %vm1388, %v1897, %v1898
        %v1900 = vrot.slane %v1795, 1
        %v1901 = vsel %vm1388, %v1898, %v1900
        %v1902 = vrot.slane %v1796, 1
        %v1903 = vrot.slane %v1797, 1
        %v1904 = vsel %vm1388, %v1902, %v1903
        %v1905 = vrot.slane %v1798, 1
        %v1906 = vsel %vm1388, %v1903, %v1905
        %v1907 = vrot.slane %v1799, 1
        %v1908 = vrot.slane %v1800, 1
        %v1909 = vsel %vm1388, %v1907, %v1908
        %v1910 = vrot.slane %v1801, 1
        %v1911 = vsel %vm1388, %v1908, %v1910
        %v1912 = vrot.slane %v1802, 1
        %v1913 = vrot.slane %v1803, 1
        %v1914 = vsel %vm1388, %v1912, %v1913
        %v1915 = vrot.slane %v1804, 1
        %v1916 = vsel %vm1388, %v1913, %v1915
        %v1917 = vrot.slane %v1805, 1
        %v1918 = vrot.slane %v1806, 1
        %v1919 = vsel %vm1388, %v1917, %v1918
        %v1920 = vrot.slane %v1807, 1
        %v1921 = vsel %vm1388, %v1918, %v1920
        %v1922 = vrot.slane %v1808, 1
        %v1923 = vrot.slane %v1809, 1
        %v1924 = vsel %vm1388, %v1922, %v1923
        %v1925 = vrot.slane %v1810, 1
        %v1926 = vsel %vm1388, %v1923, %v1925
        %v1927 = vrot.slane %v1811, 1
        %v1928 = vrot.slane %v1812, 1
        %v1929 = vsel %vm1388, %v1927, %v1928
        %v1930 = vrot.slane %v1813, 1
        %v1931 = vsel %vm1388, %v1928, %v1930
        %v1932 = vrot.slane %v1814, 1
        %v1933 = vrot.slane %v1815, 1
        %v1934 = vsel %vm1388, %v1932, %v1933
        %v1935 = vrot.slane %v1816, 1
        %v1936 = vsel %vm1388, %v1933, %v1935
        %v1937 = vrot.slane %v1817, 1
        %v1938 = vrot.slane %v1818, 1
        %v1939 = vsel %vm1388, %v1937, %v1938
        %v1940 = vrot.slane %v1819, 1
        %v1941 = vsel %vm1388, %v1938, %v1940
        %v1942 = vrot.slane %v1820, 1
        %v1943 = vrot.slane %v1821, 1
        %v1944 = vsel %vm1388, %v1942, %v1943
        %v1945 = vrot.slane %v1822, 1
        %v1946 = vsel %vm1388, %v1943, %v1945
        %v1947 = vrot.slane %v1823, 1
        %v1948 = vrot.slane %v1824, 1
        %v1949 = vsel %vm1388, %v1947, %v1948
        %v1950 = vrot.slane %v1825, 1
        %v1951 = vsel %vm1388, %v1948, %v1950
        %v1952 = vrot.slane %v1826, 1
        %v1953 = vrot.slane %v1827, 1
        %v1954 = vsel %vm1388, %v1952, %v1953
        %v1955 = vrot.slane %v1828, 1
        %v1956 = vsel %vm1388, %v1953, %v1955
        %v1989 = vadd.f32 %v1745, %v1879
        %v1990 = vadd.f32 %v1746, %v1881
        %v1991 = vadd.f32 %v1747, %v1884
        %v1992 = vadd.f32 %v1748, %v1886
        %v1993 = vadd.f32 %v1749, %v1889
        %v1994 = vadd.f32 %v1750, %v1891
        %v1995 = vadd.f32 %v1751, %v1894
        %v1996 = vadd.f32 %v1752, %v1896
        %v1997 = vadd.f32 %v1753, %v1899
        %v1998 = vadd.f32 %v1754, %v1901
        %v1999 = vadd.f32 %v1755, %v1904
        %v2000 = vadd.f32 %v1756, %v1906
        %v2001 = vadd.f32 %v1757, %v1909
        %v2002 = vadd.f32 %v1758, %v1911
        %v2003 = vadd.f32 %v1759, %v1914
        %v2004 = vadd.f32 %v1760, %v1916
        %v2005 = vadd.f32 %v1761, %v1919
        %v2006 = vadd.f32 %v1762, %v1921
        %v2007 = vadd.f32 %v1763, %v1924
        %v2008 = vadd.f32 %v1764, %v1926
        %v2009 = vadd.f32 %v1765, %v1929
        %v2010 = vadd.f32 %v1766, %v1931
        %v2011 = vadd.f32 %v1767, %v1934
        %v2012 = vadd.f32 %v1768, %v1936
        %v2013 = vadd.f32 %v1769, %v1939
        %v2014 = vadd.f32 %v1770, %v1941
        %v2015 = vadd.f32 %v1771, %v1944
        %v2016 = vadd.f32 %v1772, %v1946
        %v2017 = vadd.f32 %v1773, %v1949
        %v2018 = vadd.f32 %v1774, %v1951
        %v2019 = vadd.f32 %v1775, %v1954
        %v2020 = vadd.f32 %v1776, %v1956
        %v2021 = vlaneseq
        %v2022 = vshrl.u32 %v2021, 7
        %v2023 = vsub.s32 2, %v2022
        %v2024 = vrot.slane %v1113, %v2023
        %v2025 = vmul.f32 %v1059, %v2024
        %v2026 = vmul.f32 %v1060, %v2024
        %v2027 = vmul.f32 %v1061, %v2024
        %v2028 = vmul.f32 %v1062, %v2024
        %v2029 = vmul.f32 %v1063, %v2024
        %v2030 = vmul.f32 %v1064, %v2024
        %v2031 = vmul.f32 %v1065, %v2024
        %v2032 = vmul.f32 %v1066, %v2024
        %v2033 = vmul.f32 %v1067, %v2024
        %v2034 = vmul.f32 %v1068, %v2024
        %v2035 = vmul.f32 %v1069, %v2024
        %v2036 = vmul.f32 %v1070, %v2024
        %v2037 = vmul.f32 %v1071, %v2024
        %v2038 = vmul.f32 %v1072, %v2024
        %v2039 = vmul.f32 %v1073, %v2024
        %v2040 = vmul.f32 %v1074, %v2024
        %v2041 = vmul.f32 %v1075, %v2024
        %v2042 = vmul.f32 %v1076, %v2024
        %v2043 = vmul.f32 %v1077, %v2024
        %v2044 = vmul.f32 %v1078, %v2024
        %v2045 = vmul.f32 %v1079, %v2024
        %v2046 = vmul.f32 %v1080, %v2024
        %v2047 = vmul.f32 %v1081, %v2024
        %v2048 = vmul.f32 %v1082, %v2024
        %v2049 = vmul.f32 %v1083, %v2024
        %v2050 = vmul.f32 %v1084, %v2024
        %v2051 = vmul.f32 %v1085, %v2024
        %v2052 = vmul.f32 %v1086, %v2024
        %v2053 = vmul.f32 %v1087, %v2024
        %v2054 = vmul.f32 %v1088, %v2024
        %v2055 = vmul.f32 %v1089, %v2024
        %v2056 = vmul.f32 %v1090, %v2024
        %v2057 = vmul.f32 %v1091, %v2024
        %v2058 = vmul.f32 %v1092, %v2024
        %v2059 = vmul.f32 %v1093, %v2024
        %v2060 = vmul.f32 %v1094, %v2024
        %v2061 = vmul.f32 %v1095, %v2024
        %v2062 = vmul.f32 %v1096, %v2024
        %v2063 = vmul.f32 %v1097, %v2024
        %v2064 = vmul.f32 %v1098, %v2024
        %v2065 = vmul.f32 %v1099, %v2024
        %v2066 = vmul.f32 %v1100, %v2024
        %v2067 = vmul.f32 %v1101, %v2024
        %v2068 = vmul.f32 %v1102, %v2024
        %v2069 = vmul.f32 %v1103, %v2024
        %v2070 = vmul.f32 %v1104, %v2024
        %v2071 = vmul.f32 %v1105, %v2024
        %v2072 = vmul.f32 %v1106, %v2024
        %vm2121 = vcmask 1045504
        %v2122 = vrot.slane %v2025, 2
        %v2123 = vrot.slane %v2026, 2
        %v2124 = vsel %vm2121, %v2122, %v2123
        %v2125 = vrot.slane %v2027, 2
        %v2126 = vsel %vm2121, %v2123, %v2125
        %v2127 = vrot.slane %v2028, 2
        %v2128 = vrot.slane %v2029, 2
        %v2129 = vsel %vm2121, %v2127, %v2128
        %v2130 = vrot.slane %v2030, 2
        %v2131 = vsel %vm2121, %v2128, %v2130
        %v2132 = vrot.slane %v2031, 2
        %v2133 = vrot.slane %v2032, 2
        %v2134 = vsel %vm2121, %v2132, %v2133
        %v2135 = vrot.slane %v2033, 2
        %v2136 = vsel %vm2121, %v2133, %v2135
        %v2137 = vrot.slane %v2034, 2
        %v2138 = vrot.slane %v2035, 2
        %v2139 = vsel %vm2121, %v2137, %v2138
        %v2140 = vrot.slane %v2036, 2
        %v2141 = vsel %vm2121, %v2138, %v2140
        %v2142 = vrot.slane %v2037, 2
        %v2143 = vrot.slane %v2038, 2
        %v2144 = vsel %vm2121, %v2142, %v2143
        %v2145 = vrot.slane %v2039, 2
        %v2146 = vsel %vm2121, %v2143, %v2145
        %v2147 = vrot.slane %v2040, 2
        %v2148 = vrot.slane %v2041, 2
        %v2149 = vsel %vm2121, %v2147, %v2148
        %v2150 = vrot.slane %v2042, 2
        %v2151 = vsel %vm2121, %v2148, %v2150
        %v2152 = vrot.slane %v2043, 2
        %v2153 = vrot.slane %v2044, 2
        %v2154 = vsel %vm2121, %v2152, %v2153
        %v2155 = vrot.slane %v2045, 2
        %v2156 = vsel %vm2121, %v2153, %v2155
        %v2157 = vrot.slane %v2046, 2
        %v2158 = vrot.slane %v2047, 2
        %v2159 = vsel %vm2121, %v2157, %v2158
        %v2160 = vrot.slane %v2048, 2
        %v2161 = vsel %vm2121, %v2158, %v2160
        %v2162 = vrot.slane %v2049, 2
        %v2163 = vrot.slane %v2050, 2
        %v2164 = vsel %vm2121, %v2162, %v2163
        %v2165 = vrot.slane %v2051, 2
        %v2166 = vsel %vm2121, %v2163, %v2165
        %v2167 = vrot.slane %v2052, 2
        %v2168 = vrot.slane %v2053, 2
        %v2169 = vsel %vm2121, %v2167, %v2168
        %v2170 = vrot.slane %v2054, 2
        %v2171 = vsel %vm2121, %v2168, %v2170
        %v2172 = vrot.slane %v2055, 2
        %v2173 = vrot.slane %v2056, 2
        %v2174 = vsel %vm2121, %v2172, %v2173
        %v2175 = vrot.slane %v2057, 2
        %v2176 = vsel %vm2121, %v2173, %v2175
        %v2177 = vrot.slane %v2058, 2
        %v2178 = vrot.slane %v2059, 2
        %v2179 = vsel %vm2121, %v2177, %v2178
        %v2180 = vrot.slane %v2060, 2
        %v2181 = vsel %vm2121, %v2178, %v2180
        %v2182 = vrot.slane %v2061, 2
        %v2183 = vrot.slane %v2062, 2
        %v2184 = vsel %vm2121, %v2182, %v2183
        %v2185 = vrot.slane %v2063, 2
        %v2186 = vsel %vm2121, %v2183, %v2185
        %v2187 = vrot.slane %v2064, 2
        %v2188 = vrot.slane %v2065, 2
        %v2189 = vsel %vm2121, %v2187, %v2188
        %v2190 = vrot.slane %v2066, 2
        %v2191 = vsel %vm2121, %v2188, %v2190
        %v2192 = vrot.slane %v2067, 2
        %v2193 = vrot.slane %v2068, 2
        %v2194 = vsel %vm2121, %v2192, %v2193
        %v2195 = vrot.slane %v2069, 2
        %v2196 = vsel %vm2121, %v2193, %v2195
        %v2197 = vrot.slane %v2070, 2
        %v2198 = vrot.slane %v2071, 2
        %v2199 = vsel %vm2121, %v2197, %v2198
        %v2200 = vrot.slane %v2072, 2
        %v2201 = vsel %vm2121, %v2198, %v2200
        %v2234 = vadd.f32 %v1989, %v2124
        %v2235 = vadd.f32 %v1990, %v2126
        %v2236 = vadd.f32 %v1991, %v2129
        %v2237 = vadd.f32 %v1992, %v2131
        %v2238 = vadd.f32 %v1993, %v2134
        %v2239 = vadd.f32 %v1994, %v2136
        %v2240 = vadd.f32 %v1995, %v2139
        %v2241 = vadd.f32 %v1996, %v2141
        %v2242 = vadd.f32 %v1997, %v2144
        %v2243 = vadd.f32 %v1998, %v2146
        %v2244 = vadd.f32 %v1999, %v2149
        %v2245 = vadd.f32 %v2000, %v2151
        %v2246 = vadd.f32 %v2001, %v2154
        %v2247 = vadd.f32 %v2002, %v2156
        %v2248 = vadd.f32 %v2003, %v2159
        %v2249 = vadd.f32 %v2004, %v2161
        %v2250 = vadd.f32 %v2005, %v2164
        %v2251 = vadd.f32 %v2006, %v2166
        %v2252 = vadd.f32 %v2007, %v2169
        %v2253 = vadd.f32 %v2008, %v2171
        %v2254 = vadd.f32 %v2009, %v2174
        %v2255 = vadd.f32 %v2010, %v2176
        %v2256 = vadd.f32 %v2011, %v2179
        %v2257 = vadd.f32 %v2012, %v2181
        %v2258 = vadd.f32 %v2013, %v2184
        %v2259 = vadd.f32 %v2014, %v2186
        %v2260 = vadd.f32 %v2015, %v2189
        %v2261 = vadd.f32 %v2016, %v2191
        %v2262 = vadd.f32 %v2017, %v2194
        %v2263 = vadd.f32 %v2018, %v2196
        %v2264 = vadd.f32 %v2019, %v2199
        %v2265 = vadd.f32 %v2020, %v2201
        %v2266 = vlaneseq
        %v2267 = vshrl.u32 %v2266, 7
        %v2268 = vsub.s32 5, %v2267
        %v2269 = vrot.slane %v1113, %v2268
        %v2270 = vmul.f32 %v1062, %v2269
        %v2271 = vmul.f32 %v1063, %v2269
        %v2272 = vmul.f32 %v1064, %v2269
        %v2273 = vmul.f32 %v1065, %v2269
        %v2274 = vmul.f32 %v1066, %v2269
        %v2275 = vmul.f32 %v1067, %v2269
        %v2276 = vmul.f32 %v1068, %v2269
        %v2277 = vmul.f32 %v1069, %v2269
        %v2278 = vmul.f32 %v1070, %v2269
        %v2279 = vmul.f32 %v1071, %v2269
        %v2280 = vmul.f32 %v1072, %v2269
        %v2281 = vmul.f32 %v1073, %v2269
        %v2282 = vmul.f32 %v1074, %v2269
        %v2283 = vmul.f32 %v1075, %v2269
        %v2284 = vmul.f32 %v1076, %v2269
        %v2285 = vmul.f32 %v1077, %v2269
        %v2286 = vmul.f32 %v1078, %v2269
        %v2287 = vmul.f32 %v1079, %v2269
        %v2288 = vmul.f32 %v1080, %v2269
        %v2289 = vmul.f32 %v1081, %v2269
        %v2290 = vmul.f32 %v1082, %v2269
        %v2291 = vmul.f32 %v1083, %v2269
        %v2292 = vmul.f32 %v1084, %v2269
        %v2293 = vmul.f32 %v1085, %v2269
        %v2294 = vmul.f32 %v1086, %v2269
        %v2295 = vmul.f32 %v1087, %v2269
        %v2296 = vmul.f32 %v1088, %v2269
        %v2297 = vmul.f32 %v1089, %v2269
        %v2298 = vmul.f32 %v1090, %v2269
        %v2299 = vmul.f32 %v1091, %v2269
        %v2300 = vmul.f32 %v1092, %v2269
        %v2301 = vmul.f32 %v1093, %v2269
        %v2302 = vmul.f32 %v1094, %v2269
        %v2303 = vmul.f32 %v1095, %v2269
        %v2304 = vmul.f32 %v1096, %v2269
        %v2305 = vmul.f32 %v1097, %v2269
        %v2306 = vmul.f32 %v1098, %v2269
        %v2307 = vmul.f32 %v1099, %v2269
        %v2308 = vmul.f32 %v1100, %v2269
        %v2309 = vmul.f32 %v1101, %v2269
        %v2310 = vmul.f32 %v1102, %v2269
        %v2311 = vmul.f32 %v1103, %v2269
        %v2312 = vmul.f32 %v1104, %v2269
        %v2313 = vmul.f32 %v1105, %v2269
        %v2314 = vmul.f32 %v1106, %v2269
        %v2315 = vmul.f32 %v1107, %v2269
        %v2316 = vmul.f32 %v1108, %v2269
        %v2317 = vmul.f32 %v1109, %v2269
        %v2366 = vrot.slane %v2270, 2
        %v2367 = vrot.slane %v2271, 2
        %v2368 = vsel %vm2121, %v2366, %v2367
        %v2369 = vrot.slane %v2272, 2
        %v2370 = vsel %vm2121, %v2367, %v2369
        %v2371 = vrot.slane %v2273, 2
        %v2372 = vrot.slane %v2274, 2
        %v2373 = vsel %vm2121, %v2371, %v2372
        %v2374 = vrot.slane %v2275, 2
        %v2375 = vsel %vm2121, %v2372, %v2374
        %v2376 = vrot.slane %v2276, 2
        %v2377 = vrot.slane %v2277, 2
        %v2378 = vsel %vm2121, %v2376, %v2377
        %v2379 = vrot.slane %v2278, 2
        %v2380 = vsel %vm2121, %v2377, %v2379
        %v2381 = vrot.slane %v2279, 2
        %v2382 = vrot.slane %v2280, 2
        %v2383 = vsel %vm2121, %v2381, %v2382
        %v2384 = vrot.slane %v2281, 2
        %v2385 = vsel %vm2121, %v2382, %v2384
        %v2386 = vrot.slane %v2282, 2
        %v2387 = vrot.slane %v2283, 2
        %v2388 = vsel %vm2121, %v2386, %v2387
        %v2389 = vrot.slane %v2284, 2
        %v2390 = vsel %vm2121, %v2387, %v2389
        %v2391 = vrot.slane %v2285, 2
        %v2392 = vrot.slane %v2286, 2
        %v2393 = vsel %vm2121, %v2391, %v2392
        %v2394 = vrot.slane %v2287, 2
        %v2395 = vsel %vm2121, %v2392, %v2394
        %v2396 = vrot.slane %v2288, 2
        %v2397 = vrot.slane %v2289, 2
        %v2398 = vsel %vm2121, %v2396, %v2397
        %v2399 = vrot.slane %v2290, 2
        %v2400 = vsel %vm2121, %v2397, %v2399
        %v2401 = vrot.slane %v2291, 2
        %v2402 = vrot.slane %v2292, 2
        %v2403 = vsel %vm2121, %v2401, %v2402
        %v2404 = vrot.slane %v2293, 2
        %v2405 = vsel %vm2121, %v2402, %v2404
        %v2406 = vrot.slane %v2294, 2
        %v2407 = vrot.slane %v2295, 2
        %v2408 = vsel %vm2121, %v2406, %v2407
        %v2409 = vrot.slane %v2296, 2
        %v2410 = vsel %vm2121, %v2407, %v2409
        %v2411 = vrot.slane %v2297, 2
        %v2412 = vrot.slane %v2298, 2
        %v2413 = vsel %vm2121, %v2411, %v2412
        %v2414 = vrot.slane %v2299, 2
        %v2415 = vsel %vm2121, %v2412, %v2414
        %v2416 = vrot.slane %v2300, 2
        %v2417 = vrot.slane %v2301, 2
        %v2418 = vsel %vm2121, %v2416, %v2417
        %v2419 = vrot.slane %v2302, 2
        %v2420 = vsel %vm2121, %v2417, %v2419
        %v2421 = vrot.slane %v2303, 2
        %v2422 = vrot.slane %v2304, 2
        %v2423 = vsel %vm2121, %v2421, %v2422
        %v2424 = vrot.slane %v2305, 2
        %v2425 = vsel %vm2121, %v2422, %v2424
        %v2426 = vrot.slane %v2306, 2
        %v2427 = vrot.slane %v2307, 2
        %v2428 = vsel %vm2121, %v2426, %v2427
        %v2429 = vrot.slane %v2308, 2
        %v2430 = vsel %vm2121, %v2427, %v2429
        %v2431 = vrot.slane %v2309, 2
        %v2432 = vrot.slane %v2310, 2
        %v2433 = vsel %vm2121, %v2431, %v2432
        %v2434 = vrot.slane %v2311, 2
        %v2435 = vsel %vm2121, %v2432, %v2434
        %v2436 = vrot.slane %v2312, 2
        %v2437 = vrot.slane %v2313, 2
        %v2438 = vsel %vm2121, %v2436, %v2437
        %v2439 = vrot.slane %v2314, 2
        %v2440 = vsel %vm2121, %v2437, %v2439
        %v2441 = vrot.slane %v2315, 2
        %v2442 = vrot.slane %v2316, 2
        %v2443 = vsel %vm2121, %v2441, %v2442
        %v2444 = vrot.slane %v2317, 2
        %v2445 = vsel %vm2121, %v2442, %v2444
        %v2478 = vadd.f32 %v2234, %v2368
        %v2479 = vadd.f32 %v2235, %v2370
        %v2480 = vadd.f32 %v2236, %v2373
        %v2481 = vadd.f32 %v2237, %v2375
        %v2482 = vadd.f32 %v2238, %v2378
        %v2483 = vadd.f32 %v2239, %v2380
        %v2484 = vadd.f32 %v2240, %v2383
        %v2485 = vadd.f32 %v2241, %v2385
        %v2486 = vadd.f32 %v2242, %v2388
        %v2487 = vadd.f32 %v2243, %v2390
        %v2488 = vadd.f32 %v2244, %v2393
        %v2489 = vadd.f32 %v2245, %v2395
        %v2490 = vadd.f32 %v2246, %v2398
        %v2491 = vadd.f32 %v2247, %v2400
        %v2492 = vadd.f32 %v2248, %v2403
        %v2493 = vadd.f32 %v2249, %v2405
        %v2494 = vadd.f32 %v2250, %v2408
        %v2495 = vadd.f32 %v2251, %v2410
        %v2496 = vadd.f32 %v2252, %v2413
        %v2497 = vadd.f32 %v2253, %v2415
        %v2498 = vadd.f32 %v2254, %v2418
        %v2499 = vadd.f32 %v2255, %v2420
        %v2500 = vadd.f32 %v2256, %v2423
        %v2501 = vadd.f32 %v2257, %v2425
        %v2502 = vadd.f32 %v2258, %v2428
        %v2503 = vadd.f32 %v2259, %v2430
        %v2504 = vadd.f32 %v2260, %v2433
        %v2505 = vadd.f32 %v2261, %v2435
        %v2506 = vadd.f32 %v2262, %v2438
        %v2507 = vadd.f32 %v2263, %v2440
        %v2508 = vadd.f32 %v2264, %v2443
        %v2509 = vadd.f32 %v2265, %v2445
        %v2510 = vlaneseq
        %v2511 = vshrl.u32 %v2510, 7
        %v2512 = vsub.s32 0, %v2511
        %v2513 = vrot.slane %v1114, %v2512
        %v2514 = vmul.f32 %v1065, %v2513
        %v2515 = vmul.f32 %v1066, %v2513
        %v2516 = vmul.f32 %v1067, %v2513
        %v2517 = vmul.f32 %v1068, %v2513
        %v2518 = vmul.f32 %v1069, %v2513
        %v2519 = vmul.f32 %v1070, %v2513
        %v2520 = vmul.f32 %v1071, %v2513
        %v2521 = vmul.f32 %v1072, %v2513
        %v2522 = vmul.f32 %v1073, %v2513
        %v2523 = vmul.f32 %v1074, %v2513
        %v2524 = vmul.f32 %v1075, %v2513
        %v2525 = vmul.f32 %v1076, %v2513
        %v2526 = vmul.f32 %v1077, %v2513
        %v2527 = vmul.f32 %v1078, %v2513
        %v2528 = vmul.f32 %v1079, %v2513
        %v2529 = vmul.f32 %v1080, %v2513
        %v2530 = vmul.f32 %v1081, %v2513
        %v2531 = vmul.f32 %v1082, %v2513
        %v2532 = vmul.f32 %v1083, %v2513
        %v2533 = vmul.f32 %v1084, %v2513
        %v2534 = vmul.f32 %v1085, %v2513
        %v2535 = vmul.f32 %v1086, %v2513
        %v2536 = vmul.f32 %v1087, %v2513
        %v2537 = vmul.f32 %v1088, %v2513
        %v2538 = vmul.f32 %v1089, %v2513
        %v2539 = vmul.f32 %v1090, %v2513
        %v2540 = vmul.f32 %v1091, %v2513
        %v2541 = vmul.f32 %v1092, %v2513
        %v2542 = vmul.f32 %v1093, %v2513
        %v2543 = vmul.f32 %v1094, %v2513
        %v2544 = vmul.f32 %v1095, %v2513
        %v2545 = vmul.f32 %v1096, %v2513
        %v2546 = vmul.f32 %v1097, %v2513
        %v2547 = vmul.f32 %v1098, %v2513
        %v2548 = vmul.f32 %v1099, %v2513
        %v2549 = vmul.f32 %v1100, %v2513
        %v2550 = vmul.f32 %v1101, %v2513
        %v2551 = vmul.f32 %v1102, %v2513
        %v2552 = vmul.f32 %v1103, %v2513
        %v2553 = vmul.f32 %v1104, %v2513
        %v2554 = vmul.f32 %v1105, %v2513
        %v2555 = vmul.f32 %v1106, %v2513
        %v2556 = vmul.f32 %v1107, %v2513
        %v2557 = vmul.f32 %v1108, %v2513
        %v2558 = vmul.f32 %v1109, %v2513
        %v2559 = vmul.f32 %v1110, %v2513
        %v2560 = vmul.f32 %v1111, %v2513
        %v2561 = vmul.f32 %v1112, %v2513
        %v2610 = vrot.slane %v2514, 2
        %v2611 = vrot.slane %v2515, 2
        %v2612 = vsel %vm2121, %v2610, %v2611
        %v2613 = vrot.slane %v2516, 2
        %v2614 = vsel %vm2121, %v2611, %v2613
        %v2615 = vrot.slane %v2517, 2
        %v2616 = vrot.slane %v2518, 2
        %v2617 = vsel %vm2121, %v2615, %v2616
        %v2618 = vrot.slane %v2519, 2
        %v2619 = vsel %vm2121, %v2616, %v2618
        %v2620 = vrot.slane %v2520, 2
        %v2621 = vrot.slane %v2521, 2
        %v2622 = vsel %vm2121, %v2620, %v2621
        %v2623 = vrot.slane %v2522, 2
        %v2624 = vsel %vm2121, %v2621, %v2623
        %v2625 = vrot.slane %v2523, 2
        %v2626 = vrot.slane %v2524, 2
        %v2627 = vsel %vm2121, %v2625, %v2626
        %v2628 = vrot.slane %v2525, 2
        %v2629 = vsel %vm2121, %v2626, %v2628
        %v2630 = vrot.slane %v2526, 2
        %v2631 = vrot.slane %v2527, 2
        %v2632 = vsel %vm2121, %v2630, %v2631
        %v2633 = vrot.slane %v2528, 2
        %v2634 = vsel %vm2121, %v2631, %v2633
        %v2635 = vrot.slane %v2529, 2
        %v2636 = vrot.slane %v2530, 2
        %v2637 = vsel %vm2121, %v2635, %v2636
        %v2638 = vrot.slane %v2531, 2
        %v2639 = vsel %vm2121, %v2636, %v2638
        %v2640 = vrot.slane %v2532, 2
        %v2641 = vrot.slane %v2533, 2
        %v2642 = vsel %vm2121, %v2640, %v2641
        %v2643 = vrot.slane %v2534, 2
        %v2644 = vsel %vm2121, %v2641, %v2643
        %v2645 = vrot.slane %v2535, 2
        %v2646 = vrot.slane %v2536, 2
        %v2647 = vsel %vm2121, %v2645, %v2646
        %v2648 = vrot.slane %v2537, 2
        %v2649 = vsel %vm2121, %v2646, %v2648
        %v2650 = vrot.slane %v2538, 2
        %v2651 = vrot.slane %v2539, 2
        %v2652 = vsel %vm2121, %v2650, %v2651
        %v2653 = vrot.slane %v2540, 2
        %v2654 = vsel %vm2121, %v2651, %v2653
        %v2655 = vrot.slane %v2541, 2
        %v2656 = vrot.slane %v2542, 2
        %v2657 = vsel %vm2121, %v2655, %v2656
        %v2658 = vrot.slane %v2543, 2
        %v2659 = vsel %vm2121, %v2656, %v2658
        %v2660 = vrot.slane %v2544, 2
        %v2661 = vrot.slane %v2545, 2
        %v2662 = vsel %vm2121, %v2660, %v2661
        %v2663 = vrot.slane %v2546, 2
        %v2664 = vsel %vm2121, %v2661, %v2663
        %v2665 = vrot.slane %v2547, 2
        %v2666 = vrot.slane %v2548, 2
        %v2667 = vsel %vm2121, %v2665, %v2666
        %v2668 = vrot.slane %v2549, 2
        %v2669 = vsel %vm2121, %v2666, %v2668
        %v2670 = vrot.slane %v2550, 2
        %v2671 = vrot.slane %v2551, 2
        %v2672 = vsel %vm2121, %v2670, %v2671
        %v2673 = vrot.slane %v2552, 2
        %v2674 = vsel %vm2121, %v2671, %v2673
        %v2675 = vrot.slane %v2553, 2
        %v2676 = vrot.slane %v2554, 2
        %v2677 = vsel %vm2121, %v2675, %v2676
        %v2678 = vrot.slane %v2555, 2
        %v2679 = vsel %vm2121, %v2676, %v2678
        %v2680 = vrot.slane %v2556, 2
        %v2681 = vrot.slane %v2557, 2
        %v2682 = vsel %vm2121, %v2680, %v2681
        %v2683 = vrot.slane %v2558, 2
        %v2684 = vsel %vm2121, %v2681, %v2683
        %v2685 = vrot.slane %v2559, 2
        %v2686 = vrot.slane %v2560, 2
        %v2687 = vsel %vm2121, %v2685, %v2686
        %v2688 = vrot.slane %v2561, 2
        %v2689 = vsel %vm2121, %v2686, %v2688
        %v2722 = vadd.f32 %v2478, %v2612
        %v2723 = vadd.f32 %v2479, %v2614
        %v2724 = vadd.f32 %v2480, %v2617
        %v2725 = vadd.f32 %v2481, %v2619
        %v2726 = vadd.f32 %v2482, %v2622
        %v2727 = vadd.f32 %v2483, %v2624
        %v2728 = vadd.f32 %v2484, %v2627
        %v2729 = vadd.f32 %v2485, %v2629
        %v2730 = vadd.f32 %v2486, %v2632
        %v2731 = vadd.f32 %v2487, %v2634
        %v2732 = vadd.f32 %v2488, %v2637
        %v2733 = vadd.f32 %v2489, %v2639
        %v2734 = vadd.f32 %v2490, %v2642
        %v2735 = vadd.f32 %v2491, %v2644
        %v2736 = vadd.f32 %v2492, %v2647
        %v2737 = vadd.f32 %v2493, %v2649
        %v2738 = vadd.f32 %v2494, %v2652
        %v2739 = vadd.f32 %v2495, %v2654
        %v2740 = vadd.f32 %v2496, %v2657
        %v2741 = vadd.f32 %v2497, %v2659
        %v2742 = vadd.f32 %v2498, %v2662
        %v2743 = vadd.f32 %v2499, %v2664
        %v2744 = vadd.f32 %v2500, %v2667
        %v2745 = vadd.f32 %v2501, %v2669
        %v2746 = vadd.f32 %v2502, %v2672
        %v2747 = vadd.f32 %v2503, %v2674
        %v2748 = vadd.f32 %v2504, %v2677
        %v2749 = vadd.f32 %v2505, %v2679
        %v2750 = vadd.f32 %v2506, %v2682
        %v2751 = vadd.f32 %v2507, %v2684
        %v2752 = vadd.f32 %v2508, %v2687
        %v2753 = vadd.f32 %v2509, %v2689
        %v2755 = vlaneseq
        %v2756 = vshrl.u32 %v2755, 7
        %v2757 = vsub.s32 0, %v2756
        %v2758 = vrot.slane %v1115, %v2757
        %v2760 = vadd.f32 %v2722, %v2758
        %v2761 = vadd.f32 %v2723, %v2758
        %v2762 = vadd.f32 %v2724, %v2758
        %v2763 = vadd.f32 %v2725, %v2758
        %v2764 = vadd.f32 %v2726, %v2758
        %v2765 = vadd.f32 %v2727, %v2758
        %v2766 = vadd.f32 %v2728, %v2758
        %v2767 = vadd.f32 %v2729, %v2758
        %v2768 = vadd.f32 %v2730, %v2758
        %v2769 = vadd.f32 %v2731, %v2758
        %v2770 = vadd.f32 %v2732, %v2758
        %v2771 = vadd.f32 %v2733, %v2758
        %v2772 = vadd.f32 %v2734, %v2758
        %v2773 = vadd.f32 %v2735, %v2758
        %v2774 = vadd.f32 %v2736, %v2758
        %v2775 = vadd.f32 %v2737, %v2758
        %v2776 = vadd.f32 %v2738, %v2758
        %v2777 = vadd.f32 %v2739, %v2758
        %v2778 = vadd.f32 %v2740, %v2758
        %v2779 = vadd.f32 %v2741, %v2758
        %v2780 = vadd.f32 %v2742, %v2758
        %v2781 = vadd.f32 %v2743, %v2758
        %v2782 = vadd.f32 %v2744, %v2758
        %v2783 = vadd.f32 %v2745, %v2758
        %v2784 = vadd.f32 %v2746, %v2758
        %v2785 = vadd.f32 %v2747, %v2758
        %v2786 = vadd.f32 %v2748, %v2758
        %v2787 = vadd.f32 %v2749, %v2758
        %v2788 = vadd.f32 %v2750, %v2758
        %v2789 = vadd.f32 %v2751, %v2758
        %v2790 = vadd.f32 %v2752, %v2758
        %v2791 = vadd.f32 %v2753, %v2758
        %v2792 = vxor.u32 %v2760, 2147483648
        %v2793 = vxor.u32 %v2761, 2147483648
        %v2794 = vxor.u32 %v2762, 2147483648
        %v2795 = vxor.u32 %v2763, 2147483648
        %v2796 = vxor.u32 %v2764, 2147483648
        %v2797 = vxor.u32 %v2765, 2147483648
        %v2798 = vxor.u32 %v2766, 2147483648
        %v2799 = vxor.u32 %v2767, 2147483648
        %v2800 = vxor.u32 %v2768, 2147483648
        %v2801 = vxor.u32 %v2769, 2147483648
        %v2802 = vxor.u32 %v2770, 2147483648
        %v2803 = vxor.u32 %v2771, 2147483648
        %v2804 = vxor.u32 %v2772, 2147483648
        %v2805 = vxor.u32 %v2773, 2147483648
        %v2806 = vxor.u32 %v2774, 2147483648
        %v2807 = vxor.u32 %v2775, 2147483648
        %v2808 = vxor.u32 %v2776, 2147483648
        %v2809 = vxor.u32 %v2777, 2147483648
        %v2810 = vxor.u32 %v2778, 2147483648
        %v2811 = vxor.u32 %v2779, 2147483648
        %v2812 = vxor.u32 %v2780, 2147483648
        %v2813 = vxor.u32 %v2781, 2147483648
        %v2814 = vxor.u32 %v2782, 2147483648
        %v2815 = vxor.u32 %v2783, 2147483648
        %v2816 = vxor.u32 %v2784, 2147483648
        %v2817 = vxor.u32 %v2785, 2147483648
        %v2818 = vxor.u32 %v2786, 2147483648
        %v2819 = vxor.u32 %v2787, 2147483648
        %v2820 = vxor.u32 %v2788, 2147483648
        %v2821 = vxor.u32 %v2789, 2147483648
        %v2822 = vxor.u32 %v2790, 2147483648
        %v2823 = vxor.u32 %v2791, 2147483648
        %v2824 = vmul.f32 %v2792, 1.442695
        %v2825 = vpow.pop %v2824
        %v2826 = vmul.f32 %v2793, 1.442695
        %v2827 = vpow.pop %v2826
        %v2828 = vmul.f32 %v2794, 1.442695
        %v2829 = vpow.pop %v2828
        %v2830 = vmul.f32 %v2795, 1.442695
        %v2831 = vpow.pop %v2830
        %v2832 = vmul.f32 %v2796, 1.442695
        %v2833 = vpow.pop %v2832
        %v2834 = vmul.f32 %v2797, 1.442695
        %v2835 = vpow.pop %v2834
        %v2836 = vmul.f32 %v2798, 1.442695
        %v2837 = vpow.pop %v2836
        %v2838 = vmul.f32 %v2799, 1.442695
        %v2839 = vpow.pop %v2838
        %v2840 = vmul.f32 %v2800, 1.442695
        %v2841 = vpow.pop %v2840
        %v2842 = vmul.f32 %v2801, 1.442695
        %v2843 = vpow.pop %v2842
        %v2844 = vmul.f32 %v2802, 1.442695
        %v2845 = vpow.pop %v2844
        %v2846 = vmul.f32 %v2803, 1.442695
        %v2847 = vpow.pop %v2846
        %v2848 = vmul.f32 %v2804, 1.442695
        %v2849 = vpow.pop %v2848
        %v2850 = vmul.f32 %v2805, 1.442695
        %v2851 = vpow.pop %v2850
        %v2852 = vmul.f32 %v2806, 1.442695
        %v2853 = vpow.pop %v2852
        %v2854 = vmul.f32 %v2807, 1.442695
        %v2855 = vpow.pop %v2854
        %v2856 = vmul.f32 %v2808, 1.442695
        %v2857 = vpow.pop %v2856
        %v2858 = vmul.f32 %v2809, 1.442695
        %v2859 = vpow.pop %v2858
        %v2860 = vmul.f32 %v2810, 1.442695
        %v2861 = vpow.pop %v2860
        %v2862 = vmul.f32 %v2811, 1.442695
        %v2863 = vpow.pop %v2862
        %v2864 = vmul.f32 %v2812, 1.442695
        %v2865 = vpow.pop %v2864
        %v2866 = vmul.f32 %v2813, 1.442695
        %v2867 = vpow.pop %v2866
        %v2868 = vmul.f32 %v2814, 1.442695
        %v2869 = vpow.pop %v2868
        %v2870 = vmul.f32 %v2815, 1.442695
        %v2871 = vpow.pop %v2870
        %v2872 = vmul.f32 %v2816, 1.442695
        %v2873 = vpow.pop %v2872
        %v2874 = vmul.f32 %v2817, 1.442695
        %v2875 = vpow.pop %v2874
        %v2876 = vmul.f32 %v2818, 1.442695
        %v2877 = vpow.pop %v2876
        %v2878 = vmul.f32 %v2819, 1.442695
        %v2879 = vpow.pop %v2878
        %v2880 = vmul.f32 %v2820, 1.442695
        %v2881 = vpow.pop %v2880
        %v2882 = vmul.f32 %v2821, 1.442695
        %v2883 = vpow.pop %v2882
        %v2884 = vmul.f32 %v2822, 1.442695
        %v2885 = vpow.pop %v2884
        %v2886 = vmul.f32 %v2823, 1.442695
        %v2887 = vpow.pop %v2886
        %v2888 = vadd.f32 %v2825, 1.0
        %v2889 = vadd.f32 %v2827, 1.0
        %v2890 = vadd.f32 %v2829, 1.0
        %v2891 = vadd.f32 %v2831, 1.0
        %v2892 = vadd.f32 %v2833, 1.0
        %v2893 = vadd.f32 %v2835, 1.0
        %v2894 = vadd.f32 %v2837, 1.0
        %v2895 = vadd.f32 %v2839, 1.0
        %v2896 = vadd.f32 %v2841, 1.0
        %v2897 = vadd.f32 %v2843, 1.0
        %v2898 = vadd.f32 %v2845, 1.0
        %v2899 = vadd.f32 %v2847, 1.0
        %v2900 = vadd.f32 %v2849, 1.0
        %v2901 = vadd.f32 %v2851, 1.0
        %v2902 = vadd.f32 %v2853, 1.0
        %v2903 = vadd.f32 %v2855, 1.0
        %v2904 = vadd.f32 %v2857, 1.0
        %v2905 = vadd.f32 %v2859, 1.0
        %v2906 = vadd.f32 %v2861, 1.0
        %v2907 = vadd.f32 %v2863, 1.0
        %v2908 = vadd.f32 %v2865, 1.0
        %v2909 = vadd.f32 %v2867, 1.0
        %v2910 = vadd.f32 %v2869, 1.0
        %v2911 = vadd.f32 %v2871, 1.0
        %v2912 = vadd.f32 %v2873, 1.0
        %v2913 = vadd.f32 %v2875, 1.0
        %v2914 = vadd.f32 %v2877, 1.0
        %v2915 = vadd.f32 %v2879, 1.0
        %v2916 = vadd.f32 %v2881, 1.0
        %v2917 = vadd.f32 %v2883, 1.0
        %v2918 = vadd.f32 %v2885, 1.0
        %v2919 = vadd.f32 %v2887, 1.0
        %v2920 = vrcp.pop %v2888
        %v2921 = vmul.f32 1.0, %v2920
        %v2922 = vrcp.pop %v2889
        %v2923 = vmul.f32 1.0, %v2922
        %v2924 = vrcp.pop %v2890
        %v2925 = vmul.f32 1.0, %v2924
        %v2926 = vrcp.pop %v2891
        %v2927 = vmul.f32 1.0, %v2926
        %v2928 = vrcp.pop %v2892
        %v2929 = vmul.f32 1.0, %v2928
        %v2930 = vrcp.pop %v2893
        %v2931 = vmul.f32 1.0, %v2930
        %v2932 = vrcp.pop %v2894
        %v2933 = vmul.f32 1.0, %v2932
        %v2934 = vrcp.pop %v2895
        %v2935 = vmul.f32 1.0, %v2934
        %v2936 = vrcp.pop %v2896
        %v2937 = vmul.f32 1.0, %v2936
        %v2938 = vrcp.pop %v2897
        %v2939 = vmul.f32 1.0, %v2938
        %v2940 = vrcp.pop %v2898
        %v2941 = vmul.f32 1.0, %v2940
        %v2942 = vrcp.pop %v2899
        %v2943 = vmul.f32 1.0, %v2942
        %v2944 = vrcp.pop %v2900
        %v2945 = vmul.f32 1.0, %v2944
        %v2946 = vrcp.pop %v2901
        %v2947 = vmul.f32 1.0, %v2946
        %v2948 = vrcp.pop %v2902
        %v2949 = vmul.f32 1.0, %v2948
        %v2950 = vrcp.pop %v2903
        %v2951 = vmul.f32 1.0, %v2950
        %v2952 = vrcp.pop %v2904
        %v2953 = vmul.f32 1.0, %v2952
        %v2954 = vrcp.pop %v2905
        %v2955 = vmul.f32 1.0, %v2954
        %v2956 = vrcp.pop %v2906
        %v2957 = vmul.f32 1.0, %v2956
        %v2958 = vrcp.pop %v2907
        %v2959 = vmul.f32 1.0, %v2958
        %v2960 = vrcp.pop %v2908
        %v2961 = vmul.f32 1.0, %v2960
        %v2962 = vrcp.pop %v2909
        %v2963 = vmul.f32 1.0, %v2962
        %v2964 = vrcp.pop %v2910
        %v2965 = vmul.f32 1.0, %v2964
        %v2966 = vrcp.pop %v2911
        %v2967 = vmul.f32 1.0, %v2966
        %v2968 = vrcp.pop %v2912
        %v2969 = vmul.f32 1.0, %v2968
        %v2970 = vrcp.pop %v2913
        %v2971 = vmul.f32 1.0, %v2970
        %v2972 = vrcp.pop %v2914
        %v2973 = vmul.f32 1.0, %v2972
        %v2974 = vrcp.pop %v2915
        %v2975 = vmul.f32 1.0, %v2974
        %v2976 = vrcp.pop %v2916
        %v2977 = vmul.f32 1.0, %v2976
        %v2978 = vrcp.pop %v2917
        %v2979 = vmul.f32 1.0, %v2978
        %v2980 = vrcp.pop %v2918
        %v2981 = vmul.f32 1.0, %v2980
        %v2982 = vrcp.pop %v2919
        %v2983 = vmul.f32 1.0, %v2982
        %v2984 = vmul.f32 %v2760, %v2921
        %v2985 = vmul.f32 %v2761, %v2923
        %v2986 = vmul.f32 %v2762, %v2925
        %v2987 = vmul.f32 %v2763, %v2927
        %v2988 = vmul.f32 %v2764, %v2929
        %v2989 = vmul.f32 %v2765, %v2931
        %v2990 = vmul.f32 %v2766, %v2933
        %v2991 = vmul.f32 %v2767, %v2935
        %v2992 = vmul.f32 %v2768, %v2937
        %v2993 = vmul.f32 %v2769, %v2939
        %v2994 = vmul.f32 %v2770, %v2941
        %v2995 = vmul.f32 %v2771, %v2943
        %v2996 = vmul.f32 %v2772, %v2945
        %v2997 = vmul.f32 %v2773, %v2947
        %v2998 = vmul.f32 %v2774, %v2949
        %v2999 = vmul.f32 %v2775, %v2951
        %v3000 = vmul.f32 %v2776, %v2953
        %v3001 = vmul.f32 %v2777, %v2955
        %v3002 = vmul.f32 %v2778, %v2957
        %v3003 = vmul.f32 %v2779, %v2959
        %v3004 = vmul.f32 %v2780, %v2961
        %v3005 = vmul.f32 %v2781, %v2963
        %v3006 = vmul.f32 %v2782, %v2965
        %v3007 = vmul.f32 %v2783, %v2967
        %v3008 = vmul.f32 %v2784, %v2969
        %v3009 = vmul.f32 %v2785, %v2971
        %v3010 = vmul.f32 %v2786, %v2973
        %v3011 = vmul.f32 %v2787, %v2975
        %v3012 = vmul.f32 %v2788, %v2977
        %v3013 = vmul.f32 %v2789, %v2979
        %v3014 = vmul.f32 %v2790, %v2981
        %v3015 = vmul.f32 %v2791, %v2983
        %v3016 = vadd.f32 %v2984, %v2985
        %v3017 = vadd.f32 %v3016, %v2986
        %v3018 = vadd.f32 %v3017, %v2987
        %v3019 = vadd.f32 %v3018, %v2988
        %v3020 = vadd.f32 %v3019, %v2989
        %v3021 = vadd.f32 %v3020, %v2990
        %v3022 = vadd.f32 %v3021, %v2991
        %v3023 = vadd.f32 %v3022, %v2992
        %v3024 = vadd.f32 %v3023, %v2993
        %v3025 = vadd.f32 %v3024, %v2994
        %v3026 = vadd.f32 %v3025, %v2995
        %v3027 = vadd.f32 %v3026, %v2996
        %v3028 = vadd.f32 %v3027, %v2997
        %v3029 = vadd.f32 %v3028, %v2998
        %v3030 = vadd.f32 %v3029, %v2999
        %v3031 = vadd.f32 %v3030, %v3000
        %v3032 = vadd.f32 %v3031, %v3001
        %v3033 = vadd.f32 %v3032, %v3002
        %v3034 = vadd.f32 %v3033, %v3003
        %v3035 = vadd.f32 %v3034, %v3004
        %v3036 = vadd.f32 %v3035, %v3005
        %v3037 = vadd.f32 %v3036, %v3006
        %v3038 = vadd.f32 %v3037, %v3007
        %v3039 = vadd.f32 %v3038, %v3008
        %v3040 = vadd.f32 %v3039, %v3009
        %v3041 = vadd.f32 %v3040, %v3010
        %v3042 = vadd.f32 %v3041, %v3011
        %v3043 = vadd.f32 %v3042, %v3012
        %v3044 = vadd.f32 %v3043, %v3013
        %v3045 = vadd.f32 %v3044, %v3014
        %v3046 = vadd.f32 %v3045, %v3015
        %v3047 = vrot.slane %v3046, 4
        %v3048 = vadd.f32 %v3046, %v3047
        %v3049 = vrot.slane %v3048, 2
        %v3050 = vadd.f32 %v3048, %v3049
        %v3051 = vrot.slane %v3050, 1
        %v3052 = vadd.f32 %v3050, %v3051
        %v3053 = vrcp.pop 256.0
        %v3054 = vmul.f32 %v3052, %v3053
        %v3055 = vld [vmem:[#allocation9] sm:$0xff]
        %v3056 = vld [vmem:[#allocation9 + $0x8] sm:$0xff]
        %v3057 = vld [vmem:[#allocation9 + $0x10] sm:$0xff]
        %v3058 = vld [vmem:[#allocation9 + $0x18] sm:$0xff]
        %v3059 = vld [vmem:[#allocation9 + $0x20] sm:$0xff]
        %v3060 = vld [vmem:[#allocation9 + $0x28] sm:$0xff]
        %v3061 = vld [vmem:[#allocation9 + $0x30] sm:$0xff]
        %v3062 = vld [vmem:[#allocation9 + $0x38] sm:$0xff]
        %v3063 = vld [vmem:[#allocation9 + $0x40] sm:$0xff]
        %v3064 = vld [vmem:[#allocation9 + $0x48] sm:$0xff]
        %v3065 = vld [vmem:[#allocation9 + $0x50] sm:$0xff]
        %v3066 = vld [vmem:[#allocation9 + $0x58] sm:$0xff]
        %v3067 = vld [vmem:[#allocation9 + $0x60] sm:$0xff]
        %v3068 = vld [vmem:[#allocation9 + $0x68] sm:$0xff]
        %v3069 = vld [vmem:[#allocation9 + $0x70] sm:$0xff]
        %v3070 = vld [vmem:[#allocation9 + $0x78] sm:$0xff]
        %v3071 = vld [vmem:[%s6] sm:$0x1]
        %3072 = vmatprep.subr.mxu0 0.0
        %3073 = vmatpush1.msra.mxu0 %v3055
        %3074 = vmatprep.subr.mxu0 0.0
        %3075 = vmatpush1.msra.mxu0 %v3056
        %3076 = vmatprep.subr.mxu0 0.0
        %3077 = vmatpush1.msra.mxu0 %v3057
        %3078 = vmatprep.subr.mxu0 0.0
        %3079 = vmatpush1.msra.mxu0 %v3058
        %3080 = vmatprep.subr.mxu0 0.0
        %3081 = vmatpush1.msra.mxu0 %v3059
        %3082 = vmatprep.subr.mxu0 0.0
        %3083 = vmatpush1.msra.mxu0 %v3060
        %3084 = vmatprep.subr.mxu0 0.0
        %3085 = vmatpush1.msra.mxu0 %v3061
        %3086 = vmatprep.subr.mxu0 0.0
        %3087 = vmatpush1.msra.mxu0 %v3062
        %3088 = vmatprep.subr.mxu0 0.0
        %3089 = vmatpush1.msra.mxu0 %v3063
        %3090 = vmatprep.subr.mxu0 0.0
        %3091 = vmatpush1.msra.mxu0 %v3064
        %3092 = vmatprep.subr.mxu0 0.0
        %3093 = vmatpush1.msra.mxu0 %v3065
        %3094 = vmatprep.subr.mxu0 0.0
        %3095 = vmatpush1.msra.mxu0 %v3066
        %3096 = vmatprep.subr.mxu0 0.0
        %3097 = vmatpush1.msra.mxu0 %v3067
        %3098 = vmatprep.subr.mxu0 0.0
        %3099 = vmatpush1.msra.mxu0 %v3068
        %3100 = vmatprep.subr.mxu0 0.0
        %3101 = vmatpush1.msra.mxu0 %v3069
        %3102 = vmatprep.subr.mxu0 0.0
        %3103 = vmatpush1.msra.mxu0 %v3070
        %3104 = vmatprep.subr.mxu0 0.0
        %3105 = vmatpush1.msra.mxu0 0.0
        %3106 = vmatprep.subr.mxu0 0.0
        %3107 = vmatpush1.msra.mxu0 0.0
        %3108 = vmatprep.subr.mxu0 0.0
        %3109 = vmatpush1.msra.mxu0 0.0
        %3110 = vmatprep.subr.mxu0 0.0
        %3111 = vmatpush1.msra.mxu0 0.0
        %3112 = vmatprep.subr.mxu0 0.0
        %3113 = vmatpush1.msra.mxu0 0.0
        %3114 = vmatprep.subr.mxu0 0.0
        %3115 = vmatpush1.msra.mxu0 0.0
        %3116 = vmatprep.subr.mxu0 0.0
        %3117 = vmatpush1.msra.mxu0 0.0
        %3118 = vmatprep.subr.mxu0 0.0
        %3119 = vmatpush1.msra.mxu0 0.0
        %3120 = vmatprep.subr.mxu0 0.0
        %3121 = vmatpush1.msra.mxu0 0.0
        %3122 = vmatprep.subr.mxu0 0.0
        %3123 = vmatpush1.msra.mxu0 0.0
        %3124 = vmatprep.subr.mxu0 0.0
        %3125 = vmatpush1.msra.mxu0 0.0
        %3126 = vmatprep.subr.mxu0 0.0
        %3127 = vmatpush1.msra.mxu0 0.0
        %3128 = vmatprep.subr.mxu0 0.0
        %3129 = vmatpush1.msra.mxu0 0.0
        %3130 = vmatprep.subr.mxu0 0.0
        %3131 = vmatpush1.msra.mxu0 0.0
        %3132 = vmatprep.subr.mxu0 0.0
        %3133 = vmatpush1.msra.mxu0 0.0
        %3134 = vmatprep.subr.mxu0 0.0
        %3135 = vmatpush1.msra.mxu0 0.0
        %3136 = vmatprep.mubr.f32.mxu0 0.0
        %3137 = vmatmul.mubr.f32.gmra.mrb[0].mxu0 %v3054
        %v3138 = vpop.f32.mrb[0].mxu0
        %v3139 = vadd.f32 %v3071, %v3138
        %v3140 = vpop.f32.mrb[0].mxu0
        %3141 = vdwg.mxu0
        %v3142 = vxor.u32 %v3139, 2147483648
        %v3143 = vmul.f32 %v3142, 1.442695
        %v3144 = vpow.pop %v3143
        %v3145 = vadd.f32 %v3144, 1.0
        %v3146 = vrcp.pop %v3145
        %v3147 = vmul.f32 1.0, %v3146
        %v3148 = vmul.f32 %v3139, %v3147
        %v3149 = vld [vmem:[#allocation11] sm:$0xff]
        %v3150 = vld [vmem:[#allocation11 + $0x8] sm:$0xff]
        %v3151 = vld [vmem:[#allocation11 + $0x10] sm:$0xff]
        %v3152 = vld [vmem:[#allocation11 + $0x18] sm:$0xff]
        %v3153 = vld [vmem:[#allocation11 + $0x20] sm:$0xff]
        %v3154 = vld [vmem:[#allocation11 + $0x28] sm:$0xff]
        %v3155 = vld [vmem:[#allocation11 + $0x30] sm:$0xff]
        %v3156 = vld [vmem:[#allocation11 + $0x38] sm:$0xff]
        %v3157 = vld [vmem:[#allocation11 + $0x40] sm:$0xff]
        %v3158 = vld [vmem:[#allocation11 + $0x48] sm:$0xff]
        %v3159 = vld [vmem:[#allocation11 + $0x50] sm:$0xff]
        %v3160 = vld [vmem:[#allocation11 + $0x58] sm:$0xff]
        %v3161 = vld [vmem:[#allocation11 + $0x60] sm:$0xff]
        %v3162 = vld [vmem:[#allocation11 + $0x68] sm:$0xff]
        %v3163 = vld [vmem:[#allocation11 + $0x70] sm:$0xff]
        %v3164 = vld [vmem:[#allocation11 + $0x78] sm:$0xff]
        %v3165 = vld [vmem:[%s8] sm:$0x1]
        %3166 = vmatprep.subr.mxu0 0.0
        %3167 = vmatpush1.msra.mxu0 %v3149
        %3168 = vmatprep.subr.mxu0 0.0
        %3169 = vmatpush1.msra.mxu0 %v3150
        %3170 = vmatprep.subr.mxu0 0.0
        %3171 = vmatpush1.msra.mxu0 %v3151
        %3172 = vmatprep.subr.mxu0 0.0
        %3173 = vmatpush1.msra.mxu0 %v3152
        %3174 = vmatprep.subr.mxu0 0.0
        %3175 = vmatpush1.msra.mxu0 %v3153
        %3176 = vmatprep.subr.mxu0 0.0
        %3177 = vmatpush1.msra.mxu0 %v3154
        %3178 = vmatprep.subr.mxu0 0.0
        %3179 = vmatpush1.msra.mxu0 %v3155
        %3180 = vmatprep.subr.mxu0 0.0
        %3181 = vmatpush1.msra.mxu0 %v3156
        %3182 = vmatprep.subr.mxu0 0.0
        %3183 = vmatpush1.msra.mxu0 %v3157
        %3184 = vmatprep.subr.mxu0 0.0
        %3185 = vmatpush1.msra.mxu0 %v3158
        %3186 = vmatprep.subr.mxu0 0.0
        %3187 = vmatpush1.msra.mxu0 %v3159
        %3188 = vmatprep.subr.mxu0 0.0
        %3189 = vmatpush1.msra.mxu0 %v3160
        %3190 = vmatprep.subr.mxu0 0.0
        %3191 = vmatpush1.msra.mxu0 %v3161
        %3192 = vmatprep.subr.mxu0 0.0
        %3193 = vmatpush1.msra.mxu0 %v3162
        %3194 = vmatprep.subr.mxu0 0.0
        %3195 = vmatpush1.msra.mxu0 %v3163
        %3196 = vmatprep.subr.mxu0 0.0
        %3197 = vmatpush1.msra.mxu0 %v3164
        %3198 = vmatprep.subr.mxu0 0.0
        %3199 = vmatpush1.msra.mxu0 0.0
        %3200 = vmatprep.subr.mxu0 0.0
        %3201 = vmatpush1.msra.mxu0 0.0
        %3202 = vmatprep.subr.mxu0 0.0
        %3203 = vmatpush1.msra.mxu0 0.0
        %3204 = vmatprep.subr.mxu0 0.0
        %3205 = vmatpush1.msra.mxu0 0.0
        %3206 = vmatprep.subr.mxu0 0.0
        %3207 = vmatpush1.msra.mxu0 0.0
        %3208 = vmatprep.subr.mxu0 0.0
        %3209 = vmatpush1.msra.mxu0 0.0
        %3210 = vmatprep.subr.mxu0 0.0
        %3211 = vmatpush1.msra.mxu0 0.0
        %3212 = vmatprep.subr.mxu0 0.0
        %3213 = vmatpush1.msra.mxu0 0.0
        %3214 = vmatprep.subr.mxu0 0.0
        %3215 = vmatpush1.msra.mxu0 0.0
        %3216 = vmatprep.subr.mxu0 0.0
        %3217 = vmatpush1.msra.mxu0 0.0
        %3218 = vmatprep.subr.mxu0 0.0
        %3219 = vmatpush1.msra.mxu0 0.0
        %3220 = vmatprep.subr.mxu0 0.0
        %3221 = vmatpush1.msra.mxu0 0.0
        %3222 = vmatprep.subr.mxu0 0.0
        %3223 = vmatpush1.msra.mxu0 0.0
        %3224 = vmatprep.subr.mxu0 0.0
        %3225 = vmatpush1.msra.mxu0 0.0
        %3226 = vmatprep.subr.mxu0 0.0
        %3227 = vmatpush1.msra.mxu0 0.0
        %3228 = vmatprep.subr.mxu0 0.0
        %3229 = vmatpush1.msra.mxu0 0.0
        %3230 = vmatprep.mubr.f32.mxu0 0.0
        %3231 = vmatmul.mubr.f32.gmra.mrb[0].mxu0 %v3148
        %v3232 = vpop.f32.mrb[0].mxu0
        %v3233 = vadd.f32 %v3165, %v3232
        %v3234 = vpop.f32.mrb[0].mxu0
        %3235 = vdwg.mxu0
        %v3236 = vxor.u32 %v3233, 2147483648
        %v3237 = vmul.f32 %v3236, 1.442695
        %v3238 = vpow.pop %v3237
        %v3239 = vadd.f32 %v3238, 1.0
        %v3240 = vrcp.pop %v3239
        %v3241 = vmul.f32 1.0, %v3240
        %v3242 = vlaneseq
        %v3243 = vshrl.u32 %v3242, 7
        %v3244 = vsub.s32 0, %v3243
        %v3245 = vrot.slane %v3241, %v3244
        %v3246 = vmul.f32 %v2984, %v3245
        %v3247 = vmul.f32 %v2985, %v3245
        %v3248 = vmul.f32 %v2986, %v3245
        %v3249 = vmul.f32 %v2987, %v3245
        %v3250 = vmul.f32 %v2988, %v3245
        %v3251 = vmul.f32 %v2989, %v3245
        %v3252 = vmul.f32 %v2990, %v3245
        %v3253 = vmul.f32 %v2991, %v3245
        %v3254 = vmul.f32 %v2992, %v3245
        %v3255 = vmul.f32 %v2993, %v3245
        %v3256 = vmul.f32 %v2994, %v3245
        %v3257 = vmul.f32 %v2995, %v3245
        %v3258 = vmul.f32 %v2996, %v3245
        %v3259 = vmul.f32 %v2997, %v3245
        %v3260 = vmul.f32 %v2998, %v3245
        %v3261 = vmul.f32 %v2999, %v3245
        %v3262 = vmul.f32 %v3000, %v3245
        %v3263 = vmul.f32 %v3001, %v3245
        %v3264 = vmul.f32 %v3002, %v3245
        %v3265 = vmul.f32 %v3003, %v3245
        %v3266 = vmul.f32 %v3004, %v3245
        %v3267 = vmul.f32 %v3005, %v3245
        %v3268 = vmul.f32 %v3006, %v3245
        %v3269 = vmul.f32 %v3007, %v3245
        %v3270 = vmul.f32 %v3008, %v3245
        %v3271 = vmul.f32 %v3009, %v3245
        %v3272 = vmul.f32 %v3010, %v3245
        %v3273 = vmul.f32 %v3011, %v3245
        %v3274 = vmul.f32 %v3012, %v3245
        %v3275 = vmul.f32 %v3013, %v3245
        %v3276 = vmul.f32 %v3014, %v3245
        %v3277 = vmul.f32 %v3015, %v3245
        %v3278 = vpack.c.bf16 %v3247, %v3246
        %v3279 = vpack.c.bf16 %v3249, %v3248
        %v3280 = vpack.c.bf16 %v3251, %v3250
        %v3281 = vpack.c.bf16 %v3253, %v3252
        %v3282 = vpack.c.bf16 %v3255, %v3254
        %v3283 = vpack.c.bf16 %v3257, %v3256
        %v3284 = vpack.c.bf16 %v3259, %v3258
        %v3285 = vpack.c.bf16 %v3261, %v3260
        %v3286 = vpack.c.bf16 %v3263, %v3262
        %v3287 = vpack.c.bf16 %v3265, %v3264
        %v3288 = vpack.c.bf16 %v3267, %v3266
        %v3289 = vpack.c.bf16 %v3269, %v3268
        %v3290 = vpack.c.bf16 %v3271, %v3270
        %v3291 = vpack.c.bf16 %v3273, %v3272
        %v3292 = vpack.c.bf16 %v3275, %v3274
        %v3293 = vpack.c.bf16 %v3277, %v3276
        %v3294 = vld [vmem:[#allocation12] sm:$0xf]
        %v3295 = vld [vmem:[#allocation12 + $0x4] sm:$0xf]
        %v3296 = vld [vmem:[#allocation12 + $0x8] sm:$0xf]
        %v3297 = vld [vmem:[#allocation12 + $0xc] sm:$0xf]
        %v3298 = vld [vmem:[#allocation12 + $0x10] sm:$0xf]
        %v3299 = vld [vmem:[#allocation12 + $0x14] sm:$0xf]
        %v3300 = vld [vmem:[#allocation12 + $0x18] sm:$0xf]
        %v3301 = vld [vmem:[#allocation12 + $0x1c] sm:$0xf]
        %v3302 = vld [vmem:[#allocation12 + $0x20] sm:$0xf]
        %v3303 = vld [vmem:[#allocation12 + $0x24] sm:$0xf]
        %v3304 = vld [vmem:[#allocation12 + $0x28] sm:$0xf]
        %v3305 = vld [vmem:[#allocation12 + $0x2c] sm:$0xf]
        %v3306 = vld [vmem:[#allocation12 + $0x30] sm:$0xf]
        %v3307 = vld [vmem:[#allocation12 + $0x34] sm:$0xf]
        %v3308 = vld [vmem:[#allocation12 + $0x38] sm:$0xf]
        %v3309 = vld [vmem:[#allocation12 + $0x3c] sm:$0xf]
        %v3310 = vld [vmem:[%s10] sm:$0x1]
        %v3312 = vlaneseq
        %v3313 = vshrl.u32 %v3312, 7
        %v3314 = vsub.s32 0, %v3313
        %v3315 = vrot.slane %v3310, %v3314
        %v3333 = vunpack.c.l.b16 %v3294
        %v3334 = vunpack.c.l.b16 %v3295
        %v3335 = vunpack.c.l.b16 %v3296
        %v3336 = vunpack.c.l.b16 %v3297
        %v3337 = vunpack.c.l.b16 %v3298
        %v3338 = vunpack.c.l.b16 %v3299
        %v3339 = vunpack.c.l.b16 %v3300
        %v3340 = vunpack.c.l.b16 %v3301
        %v3341 = vunpack.c.l.b16 %v3302
        %v3342 = vunpack.c.l.b16 %v3303
        %v3343 = vunpack.c.l.b16 %v3304
        %v3344 = vunpack.c.l.b16 %v3305
        %v3345 = vunpack.c.l.b16 %v3306
        %v3346 = vunpack.c.l.b16 %v3307
        %v3347 = vunpack.c.l.b16 %v3308
        %v3348 = vunpack.c.l.b16 %v3309
        %v3349 = vpack.c.b16 %v3334, %v3333
        %v3350 = vpack.c.b16 %v3336, %v3335
        %v3351 = vpack.c.b16 %v3338, %v3337
        %v3352 = vpack.c.b16 %v3340, %v3339
        %v3353 = vpack.c.b16 %v3342, %v3341
        %v3354 = vpack.c.b16 %v3344, %v3343
        %v3355 = vpack.c.b16 %v3346, %v3345
        %v3356 = vpack.c.b16 %v3348, %v3347
        %3365 = vmatprep.subr.bf16.mxu0 0
        %3366 = vmatpush1.bf16.msra.mxu0 %v3349
        %3367 = vmatprep.subr.bf16.mxu0 0
        %3368 = vmatpush1.bf16.msra.mxu0 %v3350
        %3369 = vmatprep.subr.bf16.mxu0 0
        %3370 = vmatpush1.bf16.msra.mxu0 %v3351
        %3371 = vmatprep.subr.bf16.mxu0 0
        %3372 = vmatpush1.bf16.msra.mxu0 %v3352
        %3373 = vmatprep.subr.bf16.mxu0 0
        %3374 = vmatpush1.bf16.msra.mxu0 %v3353
        %3375 = vmatprep.subr.bf16.mxu0 0
        %3376 = vmatpush1.bf16.msra.mxu0 %v3354
        %3377 = vmatprep.subr.bf16.mxu0 0
        %3378 = vmatpush1.bf16.msra.mxu0 %v3355
        %3379 = vmatprep.subr.bf16.mxu0 0
        %3380 = vmatpush1.bf16.msra.mxu0 %v3356
        %3381 = vmatprep.subr.bf16.mxu0 0
        %3382 = vmatpush1.bf16.msra.mxu0 0
        %3383 = vmatprep.subr.bf16.mxu0 0
        %3384 = vmatpush1.bf16.msra.mxu0 0
        %3385 = vmatprep.subr.bf16.mxu0 0
        %3386 = vmatpush1.bf16.msra.mxu0 0
        %3387 = vmatprep.subr.bf16.mxu0 0
        %3388 = vmatpush1.bf16.msra.mxu0 0
        %3389 = vmatprep.subr.bf16.mxu0 0
        %3390 = vmatpush1.bf16.msra.mxu0 0
        %3391 = vmatprep.subr.bf16.mxu0 0
        %3392 = vmatpush1.bf16.msra.mxu0 0
        %3393 = vmatprep.subr.bf16.mxu0 0
        %3394 = vmatpush1.bf16.msra.mxu0 0
        %3395 = vmatprep.subr.bf16.mxu0 0
        %3396 = vmatpush1.bf16.msra.mxu0 0
        %3397 = vmatprep.mubr.bf16.mxu0 0
        %3398 = vmatmul.mubr.bf16.gmra.mrb[0].mxu0 %v3278
        %v3399 = vpop.f32.mrb[0].mxu0
        %v3400 = vadd.f32 %v3315, %v3399
        %v3401 = vpop.f32.mrb[0].mxu0
        %v3402 = vpop.f32.mrb[0].mxu0
        %v3403 = vadd.f32 %v3315, %v3402
        %v3404 = vpop.f32.mrb[0].mxu0
        %3405 = vmatprep.mubr.bf16.mxu0 0
        %3406 = vmatmul.mubr.bf16.gmra.mrb[0].mxu0 %v3279
        %v3407 = vpop.f32.mrb[0].mxu0
        %v3408 = vadd.f32 %v3315, %v3407
        %v3409 = vpop.f32.mrb[0].mxu0
        %v3410 = vpop.f32.mrb[0].mxu0
        %v3411 = vadd.f32 %v3315, %v3410
        %v3412 = vpop.f32.mrb[0].mxu0
        %3413 = vmatprep.mubr.bf16.mxu0 0
        %3414 = vmatmul.mubr.bf16.gmra.mrb[0].mxu0 %v3280
        %v3415 = vpop.f32.mrb[0].mxu0
        %v3416 = vadd.f32 %v3315, %v3415
        %v3417 = vpop.f32.mrb[0].mxu0
        %v3418 = vpop.f32.mrb[0].mxu0
        %v3419 = vadd.f32 %v3315, %v3418
        %v3420 = vpop.f32.mrb[0].mxu0
        %3421 = vmatprep.mubr.bf16.mxu0 0
        %3422 = vmatmul.mubr.bf16.gmra.mrb[0].mxu0 %v3281
        %v3423 = vpop.f32.mrb[0].mxu0
        %v3424 = vadd.f32 %v3315, %v3423
        %v3425 = vpop.f32.mrb[0].mxu0
        %v3426 = vpop.f32.mrb[0].mxu0
        %v3427 = vadd.f32 %v3315, %v3426
        %v3428 = vpop.f32.mrb[0].mxu0
        %3429 = vmatprep.mubr.bf16.mxu0 0
        %3430 = vmatmul.mubr.bf16.gmra.mrb[0].mxu0 %v3282
        %v3431 = vpop.f32.mrb[0].mxu0
        %v3432 = vadd.f32 %v3315, %v3431
        %v3433 = vpop.f32.mrb[0].mxu0
        %v3434 = vpop.f32.mrb[0].mxu0
        %v3435 = vadd.f32 %v3315, %v3434
        %v3436 = vpop.f32.mrb[0].mxu0
        %3437 = vmatprep.mubr.bf16.mxu0 0
        %3438 = vmatmul.mubr.bf16.gmra.mrb[0].mxu0 %v3283
        %v3439 = vpop.f32.mrb[0].mxu0
        %v3440 = vadd.f32 %v3315, %v3439
        %v3441 = vpop.f32.mrb[0].mxu0
        %v3442 = vpop.f32.mrb[0].mxu0
        %v3443 = vadd.f32 %v3315, %v3442
        %v3444 = vpop.f32.mrb[0].mxu0
        %3445 = vmatprep.mubr.bf16.mxu0 0
        %3446 = vmatmul.mubr.bf16.gmra.mrb[0].mxu0 %v3284
        %v3447 = vpop.f32.mrb[0].mxu0
        %v3448 = vadd.f32 %v3315, %v3447
        %v3449 = vpop.f32.mrb[0].mxu0
        %v3450 = vpop.f32.mrb[0].mxu0
        %v3451 = vadd.f32 %v3315, %v3450
        %v3452 = vpop.f32.mrb[0].mxu0
        %3453 = vmatprep.mubr.bf16.mxu0 0
        %3454 = vmatmul.mubr.bf16.gmra.mrb[0].mxu0 %v3285
        %v3455 = vpop.f32.mrb[0].mxu0
        %v3456 = vadd.f32 %v3315, %v3455
        %v3457 = vpop.f32.mrb[0].mxu0
        %v3458 = vpop.f32.mrb[0].mxu0
        %v3459 = vadd.f32 %v3315, %v3458
        %v3460 = vpop.f32.mrb[0].mxu0
        %3461 = vmatprep.mubr.bf16.mxu0 0
        %3462 = vmatmul.mubr.bf16.gmra.mrb[0].mxu0 %v3286
        %v3463 = vpop.f32.mrb[0].mxu0
        %v3464 = vadd.f32 %v3315, %v3463
        %v3465 = vpop.f32.mrb[0].mxu0
        %v3466 = vpop.f32.mrb[0].mxu0
        %v3467 = vadd.f32 %v3315, %v3466
        %v3468 = vpop.f32.mrb[0].mxu0
        %3469 = vmatprep.mubr.bf16.mxu0 0
        %3470 = vmatmul.mubr.bf16.gmra.mrb[0].mxu0 %v3287
        %v3471 = vpop.f32.mrb[0].mxu0
        %v3472 = vadd.f32 %v3315, %v3471
        %v3473 = vpop.f32.mrb[0].mxu0
        %v3474 = vpop.f32.mrb[0].mxu0
        %v3475 = vadd.f32 %v3315, %v3474
        %v3476 = vpop.f32.mrb[0].mxu0
        %3477 = vmatprep.mubr.bf16.mxu0 0
        %3478 = vmatmul.mubr.bf16.gmra.mrb[0].mxu0 %v3288
        %v3479 = vpop.f32.mrb[0].mxu0
        %v3480 = vadd.f32 %v3315, %v3479
        %v3481 = vpop.f32.mrb[0].mxu0
        %v3482 = vpop.f32.mrb[0].mxu0
        %v3483 = vadd.f32 %v3315, %v3482
        %v3484 = vpop.f32.mrb[0].mxu0
        %3485 = vmatprep.mubr.bf16.mxu0 0
        %3486 = vmatmul.mubr.bf16.gmra.mrb[0].mxu0 %v3289
        %v3487 = vpop.f32.mrb[0].mxu0
        %v3488 = vadd.f32 %v3315, %v3487
        %v3489 = vpop.f32.mrb[0].mxu0
        %v3490 = vpop.f32.mrb[0].mxu0
        %v3491 = vadd.f32 %v3315, %v3490
        %v3492 = vpop.f32.mrb[0].mxu0
        %3493 = vmatprep.mubr.bf16.mxu0 0
        %3494 = vmatmul.mubr.bf16.gmra.mrb[0].mxu0 %v3290
        %v3495 = vpop.f32.mrb[0].mxu0
        %v3496 = vadd.f32 %v3315, %v3495
        %v3497 = vpop.f32.mrb[0].mxu0
        %v3498 = vpop.f32.mrb[0].mxu0
        %v3499 = vadd.f32 %v3315, %v3498
        %v3500 = vpop.f32.mrb[0].mxu0
        %3501 = vmatprep.mubr.bf16.mxu0 0
        %3502 = vmatmul.mubr.bf16.gmra.mrb[0].mxu0 %v3291
        %v3503 = vpop.f32.mrb[0].mxu0
        %v3504 = vadd.f32 %v3315, %v3503
        %v3505 = vpop.f32.mrb[0].mxu0
        %v3506 = vpop.f32.mrb[0].mxu0
        %v3507 = vadd.f32 %v3315, %v3506
        %v3508 = vpop.f32.mrb[0].mxu0
        %3509 = vmatprep.mubr.bf16.mxu0 0
        %3510 = vmatmul.mubr.bf16.gmra.mrb[0].mxu0 %v3292
        %v3511 = vpop.f32.mrb[0].mxu0
        %v3512 = vadd.f32 %v3315, %v3511
        %v3513 = vpop.f32.mrb[0].mxu0
        %v3514 = vpop.f32.mrb[0].mxu0
        %v3515 = vadd.f32 %v3315, %v3514
        %v3516 = vpop.f32.mrb[0].mxu0
        %3517 = vmatprep.mubr.bf16.mxu0 0
        %3518 = vmatmul.mubr.bf16.gmra.mrb[0].mxu0 %v3293
        %v3519 = vpop.f32.mrb[0].mxu0
        %v3520 = vadd.f32 %v3315, %v3519
        %v3521 = vpop.f32.mrb[0].mxu0
        %v3522 = vpop.f32.mrb[0].mxu0
        %v3523 = vadd.f32 %v3315, %v3522
        %v3524 = vpop.f32.mrb[0].mxu0
        %3525 = vdwg.mxu0
        %v3526 = vadd.f32 %v3400, %v479
        %v3527 = vadd.f32 %v3403, %v480
        %v3528 = vadd.f32 %v3408, %v481
        %v3529 = vadd.f32 %v3411, %v482
        %v3530 = vadd.f32 %v3416, %v483
        %v3531 = vadd.f32 %v3419, %v484
        %v3532 = vadd.f32 %v3424, %v485
        %v3533 = vadd.f32 %v3427, %v486
        %v3534 = vadd.f32 %v3432, %v487
        %v3535 = vadd.f32 %v3435, %v488
        %v3536 = vadd.f32 %v3440, %v489
        %v3537 = vadd.f32 %v3443, %v490
        %v3538 = vadd.f32 %v3448, %v491
        %v3539 = vadd.f32 %v3451, %v492
        %v3540 = vadd.f32 %v3456, %v493
        %v3541 = vadd.f32 %v3459, %v494
        %v3542 = vadd.f32 %v3464, %v495
        %v3543 = vadd.f32 %v3467, %v496
        %v3544 = vadd.f32 %v3472, %v497
        %v3545 = vadd.f32 %v3475, %v498
        %v3546 = vadd.f32 %v3480, %v499
        %v3547 = vadd.f32 %v3483, %v500
        %v3548 = vadd.f32 %v3488, %v501
        %v3549 = vadd.f32 %v3491, %v502
        %v3550 = vadd.f32 %v3496, %v503
        %v3551 = vadd.f32 %v3499, %v504
        %v3552 = vadd.f32 %v3504, %v505
        %v3553 = vadd.f32 %v3507, %v506
        %v3554 = vadd.f32 %v3512, %v507
        %v3555 = vadd.f32 %v3515, %v508
        %v3556 = vadd.f32 %v3520, %v509
        %v3557 = vadd.f32 %v3523, %v510
        %3558 = vst [vmem:[%s477] sm:$0xff] %v3526
        %3559 = vst [vmem:[%s477 + $0x8] sm:$0xff] %v3527
        %3560 = vst [vmem:[%s477 + $0x10] sm:$0xff] %v3528
        %3561 = vst [vmem:[%s477 + $0x18] sm:$0xff] %v3529
        %3562 = vst [vmem:[%s477 + $0x20] sm:$0xff] %v3530
        %3563 = vst [vmem:[%s477 + $0x28] sm:$0xff] %v3531
        %3564 = vst [vmem:[%s477 + $0x30] sm:$0xff] %v3532
        %3565 = vst [vmem:[%s477 + $0x38] sm:$0xff] %v3533
        %3566 = vst [vmem:[%s477 + $0x40] sm:$0xff] %v3534
        %3567 = vst [vmem:[%s477 + $0x48] sm:$0xff] %v3535
        %3568 = vst [vmem:[%s477 + $0x50] sm:$0xff] %v3536
        %3569 = vst [vmem:[%s477 + $0x58] sm:$0xff] %v3537
        %3570 = vst [vmem:[%s477 + $0x60] sm:$0xff] %v3538
        %3571 = vst [vmem:[%s477 + $0x68] sm:$0xff] %v3539
        %3572 = vst [vmem:[%s477 + $0x70] sm:$0xff] %v3540
        %3573 = vst [vmem:[%s477 + $0x78] sm:$0xff] %v3541
        %3574 = vst [vmem:[%s477 + $0x80] sm:$0xff] %v3542
        %3575 = vst [vmem:[%s477 + $0x88] sm:$0xff] %v3543
        %3576 = vst [vmem:[%s477 + $0x90] sm:$0xff] %v3544
        %3577 = vst [vmem:[%s477 + $0x98] sm:$0xff] %v3545
        %3578 = vst [vmem:[%s477 + $0xa0] sm:$0xff] %v3546
        %3579 = vst [vmem:[%s477 + $0xa8] sm:$0xff] %v3547
        %3580 = vst [vmem:[%s477 + $0xb0] sm:$0xff] %v3548
        %3581 = vst [vmem:[%s477 + $0xb8] sm:$0xff] %v3549
        %3582 = vst [vmem:[%s477 + $0xc0] sm:$0xff] %v3550
        %3583 = vst [vmem:[%s477 + $0xc8] sm:$0xff] %v3551
        %3584 = vst [vmem:[%s477 + $0xd0] sm:$0xff] %v3552
        %3585 = vst [vmem:[%s477 + $0xd8] sm:$0xff] %v3553
        %3586 = vst [vmem:[%s477 + $0xe0] sm:$0xff] %v3554
        %3587 = vst [vmem:[%s477 + $0xe8] sm:$0xff] %v3555
        %3588 = vst [vmem:[%s477 + $0xf0] sm:$0xff] %v3556
        %3589 = vst [vmem:[%s477 + $0xf8] sm:$0xff] %v3557
        %s3590 = sand.u32 %s275, 1
        %s3591 = scalar_lea.sflag [#allocation5], %s3590
        %s3592 = sand.u32 %s275, 1
        %s3593 = smul.addr %s3592, 256
        %s3594 = scalar_lea.vmem [#allocation14], %s3593
        // Predicated region
        $region89: #{tpu_custom_call.1} parent=63 // pred_check
          %p3595 = pneg %p285
        $region90: #{tpu_custom_call.1} parent=63 // pred_check_branch
          %3597 = sbr.rel (%p3595) target = $region92
        $region91: #{tpu_custom_call.1} parent=63 // pred_region
          %s3599 = ssub.s32 4096, 4096
          %3600 = vsyncadd %s3591, %s3599
          %s3601 = smul.addr %s31, 32
          %s3602 = smul.addr %s3601, 128
          %s3603 = scalar_lea.hbm %s11, %s3602
          %s3604 = sshll.u32 %s3594, 4
          %s3605 = int_to_ptr.vmem [resolvable:$true] %s3604
          %3610 = dma.vmem_to_hbm [thread:$0]  %s3605, 4096, %s3603, %s3591, 128, 128, 8
        $region92: #{tpu_custom_call.1} parent=63 // pred_fallthru
          _
      $region64: #{tpu_custom_call.1} parent=5 // pred_fallthru
        _
      %p3611 = scmp.le.s32.totalorder 2, %s26
      // Predicated region
      $region93: #{tpu_custom_call.1} parent=5 // pred_check
        %p3612 = pneg %p3611
      $region94: #{tpu_custom_call.1} parent=5 // pred_check_branch
        %3614 = sbr.rel (%p3612) target = $region96
      $region95: #{tpu_custom_call.1} parent=5 // pred_region
        %s3615 = ssub.s32 %s26, 2
        // Predicated region
        $region97: #{tpu_custom_call.1} parent=95 // pred_check
          %p3616 = pneg %p291
        $region98: #{tpu_custom_call.1} parent=95 // pred_check_branch
          %3618 = sbr.rel (%p3616) target = $region100
        $region99: #{tpu_custom_call.1} parent=95 // pred_region
          %s3619 = sand.u32 %s276, 1
          %s3620 = scalar_lea.sflag [#allocation5], %s3619
          %s3621 = sand.u32 %s276, 1
          %s3622 = smul.addr %s3621, 256
          %s3623 = scalar_lea.vmem [#allocation14], %s3622
          %3624 = dma.done %s3620, 4096
        $region100: #{tpu_custom_call.1} parent=95 // pred_fallthru
          _
      $region96: #{tpu_custom_call.1} parent=5 // pred_fallthru
        _
    $region6: #{tpu_custom_call.1} parent=1 // loop_footer
      %s30 = sadd.s32 1, %s26
    $region7: #{tpu_custom_call.1} parent=1 // loop_footer_branch
      %25 = sbr.rel target = $region3
    $region8: #{tpu_custom_call.1} parent=1 // loop_exit
      _
    %3625 = vsyncpa [#allocation4], 1
    %s3626 = scalar_lea.sflag [#allocation4], 1
    %3627 = vsyncpa %s3626, 1
    %3628 = vsyncpa [#allocation7], 1
    %3629 = vsyncpa [#allocation10], 1
    %3630 = vsyncpa [#allocation13], 1
    %3631 = vsyncpa [#allocation5], 1
    %s3632 = scalar_lea.sflag [#allocation5], 1
    %3633 = vsyncpa %s3632, 1

</llo_original>
